<compile_context>
chip_gen: v6e
topology: v6e:2x2x1
jax: 0.10.0
libtpu: 0.0.40
codegen_flags: <defaults>
</compile_context>

<pallas_src>
import functools
import math

import jax
import jax.numpy as jnp
from jax.experimental import pallas as pl
from jax.experimental.pallas import tpu as pltpu


BITS = (2, 4, 8)   # searched bit-widths
LANES = 128


def get_normalized(alpha, margin=0.0):
    a = jax.nn.softmax(alpha, axis=-1)
    return a / (a.sum() + margin)


def fake_quant(x, bit):
    """Symmetric per-tensor fake quantization to `bit` bits."""
    qmax = 2.0 ** (bit - 1) - 1.0
    scale = jnp.max(jnp.abs(x)) / qmax
    scale = jnp.where(scale > 0, scale, 1.0)
    return jnp.clip(jnp.round(x / scale), -qmax, qmax) * scale


def _round_up(x, m):
    return (x + m - 1) // m * m


def _cdiv(a, b):
    return (a + b - 1) // b


def _searchconv_kernel(qs_ref, xm_ref, halo_ref, w_ref, b_ref, o_ref, patch_ref, *,
                       k, stride, th, w_out, cin, bits, rows_in, main_rows,
                       matmul_dtype):
    """grid = (batch, row-tile, cout-tile); cout-tile is the innermost axis.

    qs_ref   : SMEM (num_bits, 2) -> [inv_scale_b, alpha_b * scale_b]  (prefetch)
    xm_ref   : VMEM (1, th*stride, Wp, Cin)  non-overlapping padded-input chunk
    halo_ref : VMEM (1, hk, Wp, Cin)         bottom halo rows for this row tile
    w_ref    : VMEM (k*k*Cin, TC)            alpha-mixed quantized weights, folded
    b_ref    : VMEM (1, TC)                  bias (zero-padded)
    o_ref    : VMEM (1, TH*Wout, TC)         flat output tile (lane-dense)
    patch_ref: VMEM (TH*Wout, k*k*Cin)       im2col scratch (persists across c)
    """
    c = pl.program_id(2)

    # ---- hoisted out of the cout axis: quant-mix + im2col only at c == 0 ----
    @pl.when(c == 0)
    def _build_patch():
        xm = xm_ref[0]                                  # (main_rows, Wp, Cin)
        if rows_in <= main_rows:
            x = xm[:rows_in]
        else:
            x = jnp.concatenate([xm, halo_ref[0][:rows_in - main_rows]], axis=0)

        # Fused activation fake-quant mixing (f32 VPU path: scalar-broadcast
        # multiplies only, alpha*scale pre-folded, no divides).
        mixed = jnp.zeros(x.shape, jnp.float32)
        for i, bit in enumerate(bits):
            inv_s = qs_ref[i, 0]
            a_s = qs_ref[i, 1]                          # alpha_b * scale_b
            qmax = float(2 ** (bit - 1) - 1)
            mixed = mixed + a_s * jnp.clip(jnp.round(x * inv_s), -qmax, qmax)

        # Cast BEFORE the k*k slicing: 9x less cast work / half the temp bytes.
        mixed = mixed.astype(matmul_dtype)

        # im2col: direct stores into the persistent patch scratch (no concat).
        for kh in range(k):
            for kw in range(k):
                j = kh * k + kw
                if stride == 1:
                    piece = mixed[kh:kh + th, kw:kw + w_out, :]
                else:
                    piece = mixed[kh:kh + (th - 1) * stride + 1:stride,
                                  kw:kw + (w_out - 1) * stride + 1:stride, :]
                patch_ref[:, j * cin:(j + 1) * cin] = piece.reshape(th * w_out, cin)

    # ---- one fat-K MXU matmul per (row-tile, cout-tile) ----
    acc = jnp.dot(patch_ref[...], w_ref[...], preferred_element_type=jnp.float32)
    o_ref[0] = (acc + b_ref[...]).astype(o_ref.dtype)


class SearchConv2dPallas:
    """JAX/Pallas port of SearchConv2d (SharedQAConv2d branch)."""

    def __init__(self, in_channels, out_channels, kernel_size=3, stride=1,
                 padding=1, bias=True, bits=BITS, matmul_dtype=jnp.bfloat16,
                 key=None):
        assert key is not None
        self.cin, self.cout = in_channels, out_channels
        self.k, self.stride, self.pad = kernel_size, stride, padding
        self.bits = tuple(bits)
        self.matmul_dtype = matmul_dtype

        kw_, kb_ = jax.random.split(key)
        fan_in = in_channels * kernel_size * kernel_size
        bound = 1.0 / math.sqrt(fan_in)
        # PyTorch Conv2d weight layout: (Cout, Cin, kh, kw)
        self.weight = jax.random.uniform(
            kw_, (out_channels, in_channels, kernel_size, kernel_size),
            jnp.float32, -bound, bound)
        self.bias = (jax.random.uniform(kb_, (out_channels,), jnp.float32,
                                        -bound, bound)
                     if bias else jnp.zeros((out_channels,), jnp.float32))
        # BaseConv: alphas = ones(len(bits)) / len(bits)
        self.alphas = jnp.ones((len(self.bits),), jnp.float32) / len(self.bits)

    def __call__(self, x_nchw):
        n, cin, h, w = x_nchw.shape
        assert cin == self.cin
        k, s, p = self.k, self.stride, self.pad
        h_out = (h + 2 * p - k) // s + 1
        w_out = (w + 2 * p - k) // s + 1
        kk_cin = k * k * cin
        wbytes = 2 if self.matmul_dtype == jnp.bfloat16 else 4

        alphas = get_normalized(self.alphas)            # (num_bits,)

        # ---- weight mixing + im2col folding + Cout lane padding (glue) ----
        w_mixed = jnp.zeros_like(self.weight)
        for i, bit in enumerate(self.bits):
            w_mixed = w_mixed + alphas[i] * fake_quant(self.weight, bit)

        cout_pad = _round_up(self.cout, LANES)
        # Widened cout tile: full Cout if the folded weights are small, else 256/128.
        if kk_cin * cout_pad * wbytes <= (4 << 20):
            tc = cout_pad
        elif cout_pad % 256 == 0:
            tc = 256
        else:
            tc = LANES
        n_cout = cout_pad // tc

        # (Cout, Cin, kh, kw) -> (kh, kw, Cin, Cout) -> (k*k*Cin, Cout_pad)
        w_fold = jnp.transpose(w_mixed, (2, 3, 1, 0)).reshape(kk_cin, self.cout)
        w_fold = jnp.pad(w_fold, ((0, 0), (0, cout_pad - self.cout)))
        w_fold = w_fold.astype(self.matmul_dtype)
        b2d = jnp.pad(self.bias, (0, cout_pad - self.cout)).reshape(1, cout_pad)

        # ---- per-bit act-quant scalars (global reductions; glue) ----
        abs_max = jnp.max(jnp.abs(x_nchw))
        inv_scales, alpha_scales = [], []
        for i, bit in enumerate(self.bits):
            qmax = 2.0 ** (bit - 1) - 1.0
            sc = abs_max / qmax
            sc = jnp.where(sc > 0, sc, 1.0)
            inv_scales.append(1.0 / sc)
            alpha_scales.append(alphas[i] * sc)
        qs = jnp.stack([jnp.stack(inv_scales), jnp.stack(alpha_scales)],
                       axis=-1)                          # (num_bits, 2)

        # ---- tiling: target ~512 flat output rows (matmul M) per grid step ----
        wp = w + 2 * p
        hk = max(k - s, 1)                               # halo rows per tile
        th = min(h_out, max(1, 512 // max(1, w_out)))
        need = 8 // math.gcd(w_out, 8)                   # keep m_tile % 8 == 0 when tiling
        if th < h_out:
            th = max(need, (th // need) * need)
        th = min(th, h_out)

        # VMEM budget: query the chip, clamp to 75% (v7x-safe: <= 48 MiB of 64 MiB).
        cap = 64 << 20
        try:
            cap = int(getattr(pltpu.get_tpu_info(), "vmem_capacity_bytes", cap))
        except Exception:
            pass
        budget = cap * 3 // 4

        def est(th_):
            rows_in_ = (th_ - 1) * s + k
            m_ = th_ * w_out
            e = 2 * th_ * s * wp * cin * 4               # main-chunk double buffer
            e += 2 * hk * wp * cin * 4                   # halo double buffer
            e += 2 * kk_cin * tc * wbytes                # weight-tile double buffer
            e += 2 * tc * 4                              # bias
            e += 2 * m_ * tc * 4                         # output-tile double buffer
            e += m_ * kk_cin * wbytes                    # patch scratch
            e += rows_in_ * wp * cin * (12 + wbytes)     # mix temps (x, mixed, cast)
            e += 2 * m_ * tc * 4                         # matmul acc / bias-add temps
            e += m_ * kk_cin * wbytes                    # im2col piece temps
            return e

        while est(th) > budget and th > need:
            th = max(need, ((th // 2) // need) * need)
        vmem_limit = int(min(budget, max(2 * est(th), 16 << 20)))

        n_tiles = _cdiv(h_out, th)
        h_out_pad = n_tiles * th
        rows_in = (th - 1) * s + k
        main_rows = th * s
        m_tile = th * w_out
        h_main = n_tiles * main_rows

        # ---- NHWC main chunks (no halo duplication) + tiny halo gather ----
        x_nhwc = jnp.transpose(x_nchw, (0, 2, 3, 1))
        bottom = h_main - p - h
        if bottom >= 0:
            x_main = jnp.pad(x_nhwc, ((0, 0), (p, bottom), (p, p), (0, 0)))
        else:
            x_main = jnp.pad(x_nhwc[:, :h + bottom],
                             ((0, 0), (p, 0), (p, p), (0, 0)))

        # halo rows for tile t = padded rows [(t+1)*main_rows, +hk); gathered
        # from the original input with out-of-range rows masked to zero.
        row_ids = ((jnp.arange(n_tiles)[:, None] + 1) * main_rows - p
                   + jnp.arange(hk)[None, :]).reshape(-1)
        valid = (row_ids >= 0) & (row_ids < h)
        halo = jnp.take(x_nhwc, jnp.clip(row_ids, 0, h - 1), axis=1)
        halo = halo * valid.astype(halo.dtype)[None, :, None, None]
        halo = jnp.pad(halo, ((0, 0), (0, 0), (p, p), (0, 0)))   # (n, n_tiles*hk, wp, cin)

        kernel = functools.partial(
            _searchconv_kernel, k=k, stride=s, th=th, w_out=w_out, cin=cin,
            bits=self.bits, rows_in=rows_in, main_rows=main_rows,
            matmul_dtype=self.matmul_dtype)

        out_flat = pl.pallas_call(
            kernel,
            out_shape=jax.ShapeDtypeStruct((n, n_tiles * m_tile, cout_pad),
                                           jnp.float32),
            grid_spec=pltpu.PrefetchScalarGridSpec(
                num_scalar_prefetch=1,
                grid=(n, n_tiles, n_cout),
                in_specs=[
                    pl.BlockSpec((1, main_rows, wp, cin),
                                 lambda b, t, c, qs_ref: (b, t, 0, 0)),
                    pl.BlockSpec((1, hk, wp, cin),
                                 lambda b, t, c, qs_ref: (b, t, 0, 0)),
                    pl.BlockSpec((kk_cin, tc),
                                 lambda b, t, c, qs_ref: (0, c)),
                    pl.BlockSpec((1, tc),
                                 lambda b, t, c, qs_ref: (0, c)),
                ],
                out_specs=pl.BlockSpec((1, m_tile, tc),
                                       lambda b, t, c, qs_ref: (b, t, c)),
                scratch_shapes=[pltpu.VMEM((m_tile, kk_cin), self.matmul_dtype)],
            ),
            compiler_params=pltpu.CompilerParams(
                dimension_semantics=("parallel", "parallel", "arbitrary"),
                vmem_limit_bytes=vmem_limit),
        )(qs, x_main, halo, w_fold, b2d)

        # (N, h_out_pad*Wout, Cout_pad) -> NCHW, drop row / channel padding.
        out = out_flat.reshape(n, h_out_pad, w_out, cout_pad)
        out = out[:, :h_out, :, :self.cout]
        return jnp.transpose(out, (0, 3, 1, 2))

    def reference(self, x_nchw):
        """Pure-JAX reference of the same forward (for verification)."""
        alphas = get_normalized(self.alphas)
        w_mixed = sum(alphas[i] * fake_quant(self.weight, b)
                      for i, b in enumerate(self.bits))
        a_mixed = sum(alphas[i] * fake_quant(x_nchw, b)
                      for i, b in enumerate(self.bits))
        out = jax.lax.conv_general_dilated(
            a_mixed, w_mixed, window_strides=(self.stride, self.stride),
            padding=[(self.pad, self.pad)] * 2,
            dimension_numbers=("NCHW", "OIHW", "NCHW"))
        return out + self.bias.reshape(1, -1, 1, 1)


if __name__ == "__main__":
    key = jax.random.PRNGKey(0)
    k_param, k_x = jax.random.split(key)

    N, CIN, COUT, H, W = 2, 4, 8, 16, 16
    x = jax.random.normal(k_x, (N, CIN, H, W), jnp.float32)

    # f32 matmul operands: strict check against the pure-JAX reference.
    mod_f32 = SearchConv2dPallas(CIN, COUT, kernel_size=3, stride=1, padding=1,
                                 bias=True, matmul_dtype=jnp.float32, key=k_param)
    out = jax.block_until_ready(mod_f32(x))
    ref = jax.block_until_ready(mod_f32.reference(x))
    assert out.shape == (N, COUT, H, W)
    assert jnp.allclose(out, ref, atol=1e-4, rtol=1e-4), \
        float(jnp.max(jnp.abs(out - ref)))

    # Second (odd) shape exercising multiple row tiles + the halo path.
    x2 = jax.random.normal(jax.random.PRNGKey(1), (1, CIN, 40, 40), jnp.float32)
    out2 = jax.block_until_ready(mod_f32(x2))
    ref2 = jax.block_until_ready(mod_f32.reference(x2))
    assert out2.shape == ref2.shape
    assert jnp.allclose(out2, ref2, atol=1e-4, rtol=1e-4), \
        float(jnp.max(jnp.abs(out2 - ref2)))

    # Default bf16 MXU fast path (f32 quant-mix, f32 accumulation).
    mod_bf16 = SearchConv2dPallas(CIN, COUT, kernel_size=3, stride=1, padding=1,
                                  bias=True, key=k_param)
    out_bf16 = jax.block_until_ready(mod_bf16(x))
    assert out_bf16.shape == (N, COUT, H, W)
    assert jnp.allclose(out_bf16, ref, atol=5e-2, rtol=5e-2), \
        float(jnp.max(jnp.abs(out_bf16 - ref)))

    print("KERNEL_OK")
</pallas_src>

<mosaic_0001>
module attributes {stable_mosaic.version = 11 : i64} {
  func.func @_searchconv_kernel(%arg0: i32, %arg1: i32, %arg2: i32, %arg3: memref<3x2xf32, #tpu.memory_space<smem>>, %arg4: memref<1x16x18x4xf32, #tpu.memory_space<vmem>>, %arg5: memref<1x2x18x4xf32, #tpu.memory_space<vmem>>, %arg6: memref<36x128xf32, #tpu.memory_space<vmem>>, %arg7: memref<1x128xf32, #tpu.memory_space<vmem>>, %arg8: memref<1x256x128xf32, #tpu.memory_space<vmem>>, %arg9: memref<256x36xf32, #tpu.memory_space<vmem>>) attributes {dimension_semantics = [#tpu.dimension_semantics<parallel>, #tpu.dimension_semantics<parallel>, #tpu.dimension_semantics<arbitrary>], iteration_bounds = array<i64: 2, 1, 1>, scalar_prefetch = 1 : i64, scratch_operands = 1 : i64, tpu.core_type = #tpu.core_type<tc>, window_params = [{transform_indices = @transform_0, window_bounds = array<i64: 1, 16, 18, 4>}, {transform_indices = @transform_1, window_bounds = array<i64: 1, 2, 18, 4>}, {transform_indices = @transform_2, window_bounds = array<i64: 36, 128>}, {transform_indices = @transform_3, window_bounds = array<i64: 1, 128>}, {transform_indices = @transform_4, window_bounds = array<i64: 1, 256, 128>}]} {
    %c0_i32 = arith.constant 0 : i32
    %0 = arith.cmpi eq, %arg2, %c0_i32 : i32
    %1 = arith.extui %0 : i1 to i32
    %c0_i32_0 = arith.constant 0 : i32
    %2 = arith.cmpi ne, %1, %c0_i32_0 : i32
    scf.if %2 {
      %c0_9 = arith.constant 0 : index
      %c0_10 = arith.constant 0 : index
      %c0_11 = arith.constant 0 : index
      %c0_12 = arith.constant 0 : index
      %12 = vector.load %arg4[%c0_9, %c0_10, %c0_11, %c0_12] : memref<1x16x18x4xf32, #tpu.memory_space<vmem>>, vector<1x16x18x4xf32>
      %13 = vector.shape_cast %12 : vector<1x16x18x4xf32> to vector<16x18x4xf32>
      %c0_13 = arith.constant 0 : index
      %c0_14 = arith.constant 0 : index
      %c0_15 = arith.constant 0 : index
      %c0_16 = arith.constant 0 : index
      %14 = vector.load %arg5[%c0_13, %c0_14, %c0_15, %c0_16] : memref<1x2x18x4xf32, #tpu.memory_space<vmem>>, vector<1x2x18x4xf32>
      %15 = vector.shape_cast %14 : vector<1x2x18x4xf32> to vector<2x18x4xf32>
      %16 = tpu.concatenate %13, %15 in 0 : vector<16x18x4xf32>, vector<2x18x4xf32> -> vector<18x18x4xf32>
      %cst_17 = arith.constant 0.000000e+00 : f32
      %17 = vector.broadcast %cst_17 : f32 to vector<18x18x4xf32>
      %c0_18 = arith.constant 0 : index
      %c0_19 = arith.constant 0 : index
      %18 = memref.load %arg3[%c0_18, %c0_19] : memref<3x2xf32, #tpu.memory_space<smem>>
      %c0_20 = arith.constant 0 : index
      %c1 = arith.constant 1 : index
      %19 = memref.load %arg3[%c0_20, %c1] : memref<3x2xf32, #tpu.memory_space<smem>>
      %20 = vector.broadcast %18 : f32 to vector<18x18x4xf32>
      %21 = arith.mulf %16, %20 : vector<18x18x4xf32>
      %22 = math.roundeven %21 : vector<18x18x4xf32>
      %cst_21 = arith.constant -1.000000e+00 : f32
      %cst_22 = arith.constant 1.000000e+00 : f32
      %23 = vector.broadcast %cst_21 : f32 to vector<18x18x4xf32>
      %24 = arith.maximumf %23, %22 : vector<18x18x4xf32>
      %25 = vector.broadcast %cst_22 : f32 to vector<18x18x4xf32>
      %26 = arith.minimumf %25, %24 : vector<18x18x4xf32>
      %27 = vector.broadcast %19 : f32 to vector<18x18x4xf32>
      %28 = arith.mulf %27, %26 : vector<18x18x4xf32>
      %29 = arith.addf %17, %28 : vector<18x18x4xf32>
      %c1_23 = arith.constant 1 : index
      %c0_24 = arith.constant 0 : index
      %30 = memref.load %arg3[%c1_23, %c0_24] : memref<3x2xf32, #tpu.memory_space<smem>>
      %c1_25 = arith.constant 1 : index
      %c1_26 = arith.constant 1 : index
      %31 = memref.load %arg3[%c1_25, %c1_26] : memref<3x2xf32, #tpu.memory_space<smem>>
      %32 = vector.broadcast %30 : f32 to vector<18x18x4xf32>
      %33 = arith.mulf %16, %32 : vector<18x18x4xf32>
      %34 = math.roundeven %33 : vector<18x18x4xf32>
      %cst_27 = arith.constant -7.000000e+00 : f32
      %cst_28 = arith.constant 7.000000e+00 : f32
      %35 = vector.broadcast %cst_27 : f32 to vector<18x18x4xf32>
      %36 = arith.maximumf %35, %34 : vector<18x18x4xf32>
      %37 = vector.broadcast %cst_28 : f32 to vector<18x18x4xf32>
      %38 = arith.minimumf %37, %36 : vector<18x18x4xf32>
      %39 = vector.broadcast %31 : f32 to vector<18x18x4xf32>
      %40 = arith.mulf %39, %38 : vector<18x18x4xf32>
      %41 = arith.addf %29, %40 : vector<18x18x4xf32>
      %c2 = arith.constant 2 : index
      %c0_29 = arith.constant 0 : index
      %42 = memref.load %arg3[%c2, %c0_29] : memref<3x2xf32, #tpu.memory_space<smem>>
      %c2_30 = arith.constant 2 : index
      %c1_31 = arith.constant 1 : index
      %43 = memref.load %arg3[%c2_30, %c1_31] : memref<3x2xf32, #tpu.memory_space<smem>>
      %44 = vector.broadcast %42 : f32 to vector<18x18x4xf32>
      %45 = arith.mulf %16, %44 : vector<18x18x4xf32>
      %46 = math.roundeven %45 : vector<18x18x4xf32>
      %cst_32 = arith.constant -1.270000e+02 : f32
      %cst_33 = arith.constant 1.270000e+02 : f32
      %47 = vector.broadcast %cst_32 : f32 to vector<18x18x4xf32>
      %48 = arith.maximumf %47, %46 : vector<18x18x4xf32>
      %49 = vector.broadcast %cst_33 : f32 to vector<18x18x4xf32>
      %50 = arith.minimumf %49, %48 : vector<18x18x4xf32>
      %51 = vector.broadcast %43 : f32 to vector<18x18x4xf32>
      %52 = arith.mulf %51, %50 : vector<18x18x4xf32>
      %53 = arith.addf %41, %52 : vector<18x18x4xf32>
      %54 = vector.extract_strided_slice %53 {offsets = [0, 0, 0], sizes = [16, 16, 4], strides = [1, 1, 1]} : vector<18x18x4xf32> to vector<16x16x4xf32>
      %55 = vector.shape_cast %54 : vector<16x16x4xf32> to vector<256x4xf32>
      %c0_34 = arith.constant 0 : index
      %c0_35 = arith.constant 0 : index
      %56 = vector.load %arg9[%c0_34, %c0_35] : memref<256x36xf32, #tpu.memory_space<vmem>>, vector<256x4xf32>
      tpu.vector_store %arg9[%c0_34, %c0_35], %55 {strides = array<i32>} : memref<256x36xf32, #tpu.memory_space<vmem>>, vector<256x4xf32>,
      %57 = vector.extract_strided_slice %53 {offsets = [0, 1, 0], sizes = [16, 16, 4], strides = [1, 1, 1]} : vector<18x18x4xf32> to vector<16x16x4xf32>
      %58 = vector.shape_cast %57 : vector<16x16x4xf32> to vector<256x4xf32>
      %c0_36 = arith.constant 0 : index
      %c4 = arith.constant 4 : index
      %59 = vector.load %arg9[%c0_36, %c4] : memref<256x36xf32, #tpu.memory_space<vmem>>, vector<256x4xf32>
      tpu.vector_store %arg9[%c0_36, %c4], %58 {strides = array<i32>} : memref<256x36xf32, #tpu.memory_space<vmem>>, vector<256x4xf32>,
      %60 = vector.extract_strided_slice %53 {offsets = [0, 2, 0], sizes = [16, 16, 4], strides = [1, 1, 1]} : vector<18x18x4xf32> to vector<16x16x4xf32>
      %61 = vector.shape_cast %60 : vector<16x16x4xf32> to vector<256x4xf32>
      %c0_37 = arith.constant 0 : index
      %c8 = arith.constant 8 : index
      %62 = vector.load %arg9[%c0_37, %c8] : memref<256x36xf32, #tpu.memory_space<vmem>>, vector<256x4xf32>
      tpu.vector_store %arg9[%c0_37, %c8], %61 {strides = array<i32>} : memref<256x36xf32, #tpu.memory_space<vmem>>, vector<256x4xf32>,
      %63 = vector.extract_strided_slice %53 {offsets = [1, 0, 0], sizes = [16, 16, 4], strides = [1, 1, 1]} : vector<18x18x4xf32> to vector<16x16x4xf32>
      %64 = vector.shape_cast %63 : vector<16x16x4xf32> to vector<256x4xf32>
      %c0_38 = arith.constant 0 : index
      %c12 = arith.constant 12 : index
      %65 = vector.load %arg9[%c0_38, %c12] : memref<256x36xf32, #tpu.memory_space<vmem>>, vector<256x4xf32>
      tpu.vector_store %arg9[%c0_38, %c12], %64 {strides = array<i32>} : memref<256x36xf32, #tpu.memory_space<vmem>>, vector<256x4xf32>,
      %66 = vector.extract_strided_slice %53 {offsets = [1, 1, 0], sizes = [16, 16, 4], strides = [1, 1, 1]} : vector<18x18x4xf32> to vector<16x16x4xf32>
      %67 = vector.shape_cast %66 : vector<16x16x4xf32> to vector<256x4xf32>
      %c0_39 = arith.constant 0 : index
      %c16 = arith.constant 16 : index
      %68 = vector.load %arg9[%c0_39, %c16] : memref<256x36xf32, #tpu.memory_space<vmem>>, vector<256x4xf32>
      tpu.vector_store %arg9[%c0_39, %c16], %67 {strides = array<i32>} : memref<256x36xf32, #tpu.memory_space<vmem>>, vector<256x4xf32>,
      %69 = vector.extract_strided_slice %53 {offsets = [1, 2, 0], sizes = [16, 16, 4], strides = [1, 1, 1]} : vector<18x18x4xf32> to vector<16x16x4xf32>
      %70 = vector.shape_cast %69 : vector<16x16x4xf32> to vector<256x4xf32>
      %c0_40 = arith.constant 0 : index
      %c20 = arith.constant 20 : index
      %71 = vector.load %arg9[%c0_40, %c20] : memref<256x36xf32, #tpu.memory_space<vmem>>, vector<256x4xf32>
      tpu.vector_store %arg9[%c0_40, %c20], %70 {strides = array<i32>} : memref<256x36xf32, #tpu.memory_space<vmem>>, vector<256x4xf32>,
      %72 = vector.extract_strided_slice %53 {offsets = [2, 0, 0], sizes = [16, 16, 4], strides = [1, 1, 1]} : vector<18x18x4xf32> to vector<16x16x4xf32>
      %73 = vector.shape_cast %72 : vector<16x16x4xf32> to vector<256x4xf32>
      %c0_41 = arith.constant 0 : index
      %c24 = arith.constant 24 : index
      %74 = vector.load %arg9[%c0_41, %c24] : memref<256x36xf32, #tpu.memory_space<vmem>>, vector<256x4xf32>
      tpu.vector_store %arg9[%c0_41, %c24], %73 {strides = array<i32>} : memref<256x36xf32, #tpu.memory_space<vmem>>, vector<256x4xf32>,
      %75 = vector.extract_strided_slice %53 {offsets = [2, 1, 0], sizes = [16, 16, 4], strides = [1, 1, 1]} : vector<18x18x4xf32> to vector<16x16x4xf32>
      %76 = vector.shape_cast %75 : vector<16x16x4xf32> to vector<256x4xf32>
      %c0_42 = arith.constant 0 : index
      %c28 = arith.constant 28 : index
      %77 = vector.load %arg9[%c0_42, %c28] : memref<256x36xf32, #tpu.memory_space<vmem>>, vector<256x4xf32>
      tpu.vector_store %arg9[%c0_42, %c28], %76 {strides = array<i32>} : memref<256x36xf32, #tpu.memory_space<vmem>>, vector<256x4xf32>,
      %78 = vector.extract_strided_slice %53 {offsets = [2, 2, 0], sizes = [16, 16, 4], strides = [1, 1, 1]} : vector<18x18x4xf32> to vector<16x16x4xf32>
      %79 = vector.shape_cast %78 : vector<16x16x4xf32> to vector<256x4xf32>
      %c0_43 = arith.constant 0 : index
      %c32 = arith.constant 32 : index
      %80 = vector.load %arg9[%c0_43, %c32] : memref<256x36xf32, #tpu.memory_space<vmem>>, vector<256x4xf32>
      tpu.vector_store %arg9[%c0_43, %c32], %79 {strides = array<i32>} : memref<256x36xf32, #tpu.memory_space<vmem>>, vector<256x4xf32>,
    } else {
    }
    %c0 = arith.constant 0 : index
    %c0_1 = arith.constant 0 : index
    %3 = vector.load %arg9[%c0, %c0_1] : memref<256x36xf32, #tpu.memory_space<vmem>>, vector<256x36xf32>
    %c0_2 = arith.constant 0 : index
    %c0_3 = arith.constant 0 : index
    %4 = vector.load %arg6[%c0_2, %c0_3] : memref<36x128xf32, #tpu.memory_space<vmem>>, vector<36x128xf32>
    %cst = arith.constant dense<0.000000e+00> : vector<256x128xf32>
    %5 = tpu.matmul %3, %4, %cst {dimension_numbers = #tpu.dot_dimension_numbers<[1], [0], [0], [1], [0, 0, 1, 1], [], []>} : vector<256x36xf32>, vector<36x128xf32>, vector<256x128xf32> -> vector<256x128xf32>
    %c0_4 = arith.constant 0 : index
    %c0_5 = arith.constant 0 : index
    %6 = vector.load %arg7[%c0_4, %c0_5] : memref<1x128xf32, #tpu.memory_space<vmem>>, vector<1x128xf32>
    %7 = vector.broadcast %6 : vector<1x128xf32> to vector<256x128xf32>
    %8 = arith.addf %5, %7 : vector<256x128xf32>
    %c0_6 = arith.constant 0 : index
    %c0_7 = arith.constant 0 : index
    %c0_8 = arith.constant 0 : index
    %9 = vector.load %arg8[%c0_6, %c0_7, %c0_8] : memref<1x256x128xf32, #tpu.memory_space<vmem>>, vector<1x256x128xf32>
    %10 = vector.shape_cast %9 : vector<1x256x128xf32> to vector<256x128xf32>
    %11 = vector.shape_cast %8 : vector<256x128xf32> to vector<1x256x128xf32>
    tpu.vector_store %arg8[%c0_6, %c0_7, %c0_8], %11 {strides = array<i32>} : memref<1x256x128xf32, #tpu.memory_space<vmem>>, vector<1x256x128xf32>,
    return
  }
  func.func @transform_0(%arg0: i32, %arg1: i32, %arg2: i32, %arg3: memref<3x2xf32, #tpu.memory_space<smem>>) -> (i32, i32, i32, i32) {
    %c0_i32 = arith.constant 0 : i32
    %c0_i32_0 = arith.constant 0 : i32
    %c0_i32_1 = arith.constant 0 : i32
    return %arg0, %arg1, %c0_i32, %c0_i32_0 : i32, i32, i32, i32
  }
  func.func @transform_1(%arg0: i32, %arg1: i32, %arg2: i32, %arg3: memref<3x2xf32, #tpu.memory_space<smem>>) -> (i32, i32, i32, i32) {
    %c0_i32 = arith.constant 0 : i32
    %c0_i32_0 = arith.constant 0 : i32
    %c0_i32_1 = arith.constant 0 : i32
    return %arg0, %arg1, %c0_i32, %c0_i32_0 : i32, i32, i32, i32
  }
  func.func @transform_2(%arg0: i32, %arg1: i32, %arg2: i32, %arg3: memref<3x2xf32, #tpu.memory_space<smem>>) -> (i32, i32) {
    %c0_i32 = arith.constant 0 : i32
    %c0_i32_0 = arith.constant 0 : i32
    return %c0_i32, %arg2 : i32, i32
  }
  func.func @transform_3(%arg0: i32, %arg1: i32, %arg2: i32, %arg3: memref<3x2xf32, #tpu.memory_space<smem>>) -> (i32, i32) {
    %c0_i32 = arith.constant 0 : i32
    %c0_i32_0 = arith.constant 0 : i32
    return %c0_i32, %arg2 : i32, i32
  }
  func.func @transform_4(%arg0: i32, %arg1: i32, %arg2: i32, %arg3: memref<3x2xf32, #tpu.memory_space<smem>>) -> (i32, i32, i32) {
    %c0_i32 = arith.constant 0 : i32
    return %arg0, %arg1, %arg2 : i32, i32, i32
  }
}

</mosaic_0001>

<llo_original>
// kernel: tpu_custom_call.1
$region0: #{tpu_custom_call.1}
  #allocation0 [shape = 'u32[]', space=smem, size = 0x4, offset = 0x4, fixed_abs, tag = 'smem constant byte address 0x4 - core index']
  #allocation1 [shape = 'u32[144,128]{1,0:T(1,128)}', space=vmem, size = 0x12000, scoped, tag = 'internal scratch']
  #allocation2 [shape = 'f32[256,36]{1,0:T(8,128)}', space=vmem, size = 0x20000, scoped, tag = 'scratch operand']
  #allocation3 [shape = 's32[1]{0}', space=sflag, size = 0x4, scoped, tag = 'scoped memory for tpu_custom_call.1']
  #allocation4 [shape = 'u8[2048]{0}', space=smem, size = 0x800, scoped, tag = 'prefetched SMEM operand 0']
  %s0 = inlined_call_operand.vmem [shape: f32[3,2], index: 0, kind: input, shape index: {}]
  %s1 = inlined_call_operand.vmem [shape: f32[2,16,18,4], index: 1, kind: input, shape index: {}]
  %s2 = inlined_call_operand.vmem [shape: f32[2,2,18,4], index: 2, kind: input, shape index: {}]
  %s3 = inlined_call_operand.vmem [shape: f32[36,128], index: 3, kind: input, shape index: {}]
  %s4 = inlined_call_operand.vmem [shape: f32[1,128], index: 4, kind: input, shape index: {}]
  %s5 = inlined_call_operand.hbm [shape: f32[2,256,128], index: 5, kind: output, shape index: {}]
  %s6 = sld [smem:[#allocation0]]
  $region53: #{tpu_custom_call.1} parent=0
    _
  %s8 = ssub.s32 1, %s6
  %s9 = scalar_select 0, %s8, %s6
  %s10 = sshll.u32 %s0, 4
  %s11 = int_to_ptr.vmem [resolvable:$true] %s10
  %13 = dma.vmem_to_smem %s11, 64, [#allocation4], [#allocation3]
  %14 = dma.done [#allocation3], 64
  %15 = sfence
  $region1: #{tpu_custom_call.1} parent=0
    #allocation5 [shape = 'u8[262144]{0}', space=vmem, size = 0x40000, scoped, tag = 'output window, operand 0']
    #allocation6 [shape = 's32[2]{0}', space=sflag, size = 0x8, scoped, tag = 'scoped memory for tpu_custom_call.1']
    %16 = vsyncpa [#allocation6], 0
    %s17 = scalar_lea.sflag [#allocation6], 1
    %18 = vsyncpa %s17, 0
    loop: start=0, step=1, limit=4
    $region2: #{tpu_custom_call.1} parent=1 // loop_pre_header
      _
    $region3: #{tpu_custom_call.1} parent=1 // loop_header
      %s20 = sphi 0, %s24
      %p21 = scmp.ge.s32.totalorder %s20, 4
      %s27 = sphi 0, %s46
      %s28 = sphi 0, %s42
      %s29 = sphi 0, %s38
      %s30 = sphi 0, %s27
      %s31 = sphi 0, %s28
      %s32 = sphi 0, %s29
      %s33 = sphi 0, %s30
      %s34 = sphi 0, %s31
      %s35 = sphi 0, %s32
      %s51 = sphi 0, %s53
      %s54 = sphi 0, %s51
      %s55 = sphi 0, %s54
      %s71 = sphi 0, %s55
      %s79 = sphi 0, %s81
      %s82 = sphi 0, %s79
      %s83 = sphi 0, %s82
      %s99 = sphi 0, %s83
      %s105 = sphi 0, %s107
      %s108 = sphi 0, %s105
      %s109 = sphi 0, %s108
      %s125 = sphi 0, %s109
      %s131 = sphi 0, %s133
      %s134 = sphi 0, %s131
      %s135 = sphi 0, %s134
      %s151 = sphi 0, %s135
      %s161 = sphi 0, %s163
      %s164 = sphi 0, %s161
      %s165 = sphi 0, %s164
      %s181 = sphi 0, %s165
    $region4: #{tpu_custom_call.1} parent=1 // loop_header_branch
      %23 = sbr.rel (%p21) target = $region8
    $region5: #{tpu_custom_call.1} parent=1 // loop_body
      %s25 = ssub.s32 %s20, 1
      %s26 = ssub.s32 %s20, 2
      %s36 = sadd.s32 1, %s29
      %p37 = scmp.ge.s32.totalorder %s36, 1
      %s38 = scalar_select %p37, 0, %s36
      %s39 = sadd.s32 1, %s28
      %s40 = scalar_select %p37, %s39, %s28
      %p41 = scmp.ge.s32.totalorder %s40, 1
      %s42 = scalar_select %p41, 0, %s40
      %s43 = sadd.s32 1, %s27
      %s44 = scalar_select %p41, %s43, %s27
      %p45 = scmp.ge.s32.totalorder %s44, 2
      %s46 = scalar_select %p45, 0, %s44
      %s47 = ssub.s32 %s27, %s46
      %s48 = ssub.s32 %s28, %s42
      %s49 = sor.u32 %s47, %s48
      %p50 = scmp.eq.s32.totalorder %s49, 0
      %s52 = sadd.s32 %s51, 1
      %s53 = scalar_select %p50, %s51, %s52
      %p56 = pneg %p50
      %p57 = scmp.eq.s32.totalorder %s20, 1
      %p58 = por %p56, %p57
      %p59 = scmp.ne.s32.totalorder %s51, %s54
      %p60 = scmp.eq.s32.totalorder %s20, 0
      %p61 = por %p59, %p60
      %p62 = scmp.ne.s32.totalorder %s51, %s54
      %p63 = scmp.eq.s32.totalorder %s25, 1
      %p64 = por %p62, %p63
      %p65 = scmp.ne.s32.totalorder %s54, %s55
      %p66 = scmp.eq.s32.totalorder %s25, 0
      %p67 = por %p65, %p66
      %p68 = scmp.ne.s32.totalorder %s54, %s55
      %p69 = scmp.eq.s32.totalorder %s26, 1
      %p70 = por %p68, %p69
      %p72 = scmp.ne.s32.totalorder %s55, %s71
      %p73 = scmp.eq.s32.totalorder %s26, 0
      %p74 = por %p72, %p73
      %s75 = ssub.s32 %s27, %s46
      %s76 = ssub.s32 %s28, %s42
      %s77 = sor.u32 %s75, %s76
      %p78 = scmp.eq.s32.totalorder %s77, 0
      %s80 = sadd.s32 %s79, 1
      %s81 = scalar_select %p78, %s79, %s80
      %p84 = pneg %p78
      %p85 = scmp.eq.s32.totalorder %s20, 1
      %p86 = por %p84, %p85
      %p87 = scmp.ne.s32.totalorder %s79, %s82
      %p88 = scmp.eq.s32.totalorder %s20, 0
      %p89 = por %p87, %p88
      %p90 = scmp.ne.s32.totalorder %s79, %s82
      %p91 = scmp.eq.s32.totalorder %s25, 1
      %p92 = por %p90, %p91
      %p93 = scmp.ne.s32.totalorder %s82, %s83
      %p94 = scmp.eq.s32.totalorder %s25, 0
      %p95 = por %p93, %p94
      %p96 = scmp.ne.s32.totalorder %s82, %s83
      %p97 = scmp.eq.s32.totalorder %s26, 1
      %p98 = por %p96, %p97
      %p100 = scmp.ne.s32.totalorder %s83, %s99
      %p101 = scmp.eq.s32.totalorder %s26, 0
      %p102 = por %p100, %p101
      %s103 = ssub.s32 %s29, %s38
      %p104 = scmp.eq.s32.totalorder %s103, 0
      %s106 = sadd.s32 %s105, 1
      %s107 = scalar_select %p104, %s105, %s106
      %p110 = pneg %p104
      %p111 = scmp.eq.s32.totalorder %s20, 1
      %p112 = por %p110, %p111
      %p113 = scmp.ne.s32.totalorder %s105, %s108
      %p114 = scmp.eq.s32.totalorder %s20, 0
      %p115 = por %p113, %p114
      %p116 = scmp.ne.s32.totalorder %s105, %s108
      %p117 = scmp.eq.s32.totalorder %s25, 1
      %p118 = por %p116, %p117
      %p119 = scmp.ne.s32.totalorder %s108, %s109
      %p120 = scmp.eq.s32.totalorder %s25, 0
      %p121 = por %p119, %p120
      %p122 = scmp.ne.s32.totalorder %s108, %s109
      %p123 = scmp.eq.s32.totalorder %s26, 1
      %p124 = por %p122, %p123
      %p126 = scmp.ne.s32.totalorder %s109, %s125
      %p127 = scmp.eq.s32.totalorder %s26, 0
      %p128 = por %p126, %p127
      %s129 = ssub.s32 %s29, %s38
      %p130 = scmp.eq.s32.totalorder %s129, 0
      %s132 = sadd.s32 %s131, 1
      %s133 = scalar_select %p130, %s131, %s132
      %p136 = pneg %p130
      %p137 = scmp.eq.s32.totalorder %s20, 1
      %p138 = por %p136, %p137
      %p139 = scmp.ne.s32.totalorder %s131, %s134
      %p140 = scmp.eq.s32.totalorder %s20, 0
      %p141 = por %p139, %p140
      %p142 = scmp.ne.s32.totalorder %s131, %s134
      %p143 = scmp.eq.s32.totalorder %s25, 1
      %p144 = por %p142, %p143
      %p145 = scmp.ne.s32.totalorder %s134, %s135
      %p146 = scmp.eq.s32.totalorder %s25, 0
      %p147 = por %p145, %p146
      %p148 = scmp.ne.s32.totalorder %s134, %s135
      %p149 = scmp.eq.s32.totalorder %s26, 1
      %p150 = por %p148, %p149
      %p152 = scmp.ne.s32.totalorder %s135, %s151
      %p153 = scmp.eq.s32.totalorder %s26, 0
      %p154 = por %p152, %p153
      %s155 = ssub.s32 %s27, %s46
      %s156 = ssub.s32 %s28, %s42
      %s157 = sor.u32 %s155, %s156
      %s158 = ssub.s32 %s29, %s38
      %s159 = sor.u32 %s157, %s158
      %p160 = scmp.eq.s32.totalorder %s159, 0
      %s162 = sadd.s32 %s161, 1
      %s163 = scalar_select %p160, %s161, %s162
      %p166 = pneg %p160
      %p167 = scmp.eq.s32.totalorder %s20, 1
      %p168 = por %p166, %p167
      %p169 = scmp.ne.s32.totalorder %s161, %s164
      %p170 = scmp.eq.s32.totalorder %s20, 0
      %p171 = por %p169, %p170
      %p172 = scmp.ne.s32.totalorder %s161, %s164
      %p173 = scmp.eq.s32.totalorder %s25, 1
      %p174 = por %p172, %p173
      %p175 = scmp.ne.s32.totalorder %s164, %s165
      %p176 = scmp.eq.s32.totalorder %s25, 0
      %p177 = por %p175, %p176
      %p178 = scmp.ne.s32.totalorder %s164, %s165
      %p179 = scmp.eq.s32.totalorder %s26, 1
      %p180 = por %p178, %p179
      %p182 = scmp.ne.s32.totalorder %s165, %s181
      %p183 = scmp.eq.s32.totalorder %s26, 0
      %p184 = por %p182, %p183
      %p185 = scmp.le.s32.totalorder 1, %s20
      %p186 = scmp.lt.s32.totalorder %s20, 3
      %p187 = pnand %p185, %p186
      %p188 = pneg %p187
      // Predicated region
      $region9: #{tpu_custom_call.1} parent=5 // pred_check
        _
      $region10: #{tpu_custom_call.1} parent=5 // pred_check_branch
        %190 = sbr.rel (%p187) target = $region12
      $region11: #{tpu_custom_call.1} parent=5 // pred_region
        %s191 = ssub.s32 %s20, 1
        // Predicated region
        $region13: #{tpu_custom_call.1} parent=11 // pred_check
          %p192 = pneg %p121
        $region14: #{tpu_custom_call.1} parent=11 // pred_check_branch
          %194 = sbr.rel (%p192) target = $region16
        $region15: #{tpu_custom_call.1} parent=11 // pred_region
          %p195 = scmp.lt.s32.totalorder %s32, 0
          %s196 = scalar_select %p195, %s32, 0
          %s197 = smul.addr %s196, 8
          %s198 = scalar_lea.vmem %s3, %s197
        $region16: #{tpu_custom_call.1} parent=11 // pred_fallthru
          _
        // Predicated region
        $region17: #{tpu_custom_call.1} parent=11 // pred_check
          %p199 = pneg %p147
        $region18: #{tpu_custom_call.1} parent=11 // pred_check_branch
          %201 = sbr.rel (%p199) target = $region20
        $region19: #{tpu_custom_call.1} parent=11 // pred_region
          %p202 = scmp.lt.s32.totalorder %s32, 0
          %s203 = scalar_select %p202, %s32, 0
          %s204 = scalar_lea.vmem %s4, %s203
        $region20: #{tpu_custom_call.1} parent=11 // pred_fallthru
          _
      $region12: #{tpu_custom_call.1} parent=5 // pred_fallthru
        _
      %p205 = scmp.lt.s32.totalorder %s20, 2
      // Predicated region
      $region21: #{tpu_custom_call.1} parent=5 // pred_check
        %p206 = pneg %p205
      $region22: #{tpu_custom_call.1} parent=5 // pred_check_branch
        %208 = sbr.rel (%p206) target = $region24
      $region23: #{tpu_custom_call.1} parent=5 // pred_region
        // Predicated region
        $region25: #{tpu_custom_call.1} parent=23 // pred_check
          %p209 = pneg %p61
        $region26: #{tpu_custom_call.1} parent=23 // pred_check_branch
          %211 = sbr.rel (%p209) target = $region28
        $region27: #{tpu_custom_call.1} parent=23 // pred_region
          %s212 = smul.u32 16, %s28
          %p213 = scmp.lt.s32.totalorder %s27, 1
          %s214 = scalar_select %p213, %s27, 1
          %p215 = scmp.lt.s32.totalorder %s212, 15
          %s216 = scalar_select %p215, %s212, 15
          %s217 = smul.addr %s216, 3
          %s218 = smul.addr %s214, 48
          %s219 = sadd.s32 %s217, %s218
          %s220 = smul.addr %s219, 8
          %s221 = scalar_lea.vmem %s1, %s220
          %s222 = smul.u32 16, %s28
        $region28: #{tpu_custom_call.1} parent=23 // pred_fallthru
          _
        // Predicated region
        $region29: #{tpu_custom_call.1} parent=23 // pred_check
          %p223 = pneg %p89
        $region30: #{tpu_custom_call.1} parent=23 // pred_check_branch
          %225 = sbr.rel (%p223) target = $region32
        $region31: #{tpu_custom_call.1} parent=23 // pred_region
          %s226 = smul.u32 2, %s28
          %p227 = scmp.lt.s32.totalorder %s27, 1
          %s228 = scalar_select %p227, %s27, 1
          %p229 = scmp.lt.s32.totalorder %s226, 1
          %s230 = scalar_select %p229, %s226, 1
          %s231 = smul.addr %s230, 3
          %s232 = smul.addr %s228, 6
          %s233 = sadd.s32 %s231, %s232
          %s234 = smul.addr %s233, 8
          %s235 = scalar_lea.vmem %s2, %s234
          %s236 = smul.u32 2, %s28
        $region32: #{tpu_custom_call.1} parent=23 // pred_fallthru
          _
      $region24: #{tpu_custom_call.1} parent=5 // pred_fallthru
        _
      %p237 = scmp.le.s32.totalorder 1, %s20
      %p238 = scmp.lt.s32.totalorder %s20, 3
      %p239 = pnand %p237, %p238
      %p240 = pneg %p239
      // Predicated region
      $region33: #{tpu_custom_call.1} parent=5 // pred_check
        _
      $region34: #{tpu_custom_call.1} parent=5 // pred_check_branch
        %242 = sbr.rel (%p239) target = $region36
      $region35: #{tpu_custom_call.1} parent=5 // pred_region
        %s243 = ssub.s32 %s20, 1
        %s244 = smul.u32 16, %s31
        %p245 = scmp.lt.s32.totalorder %s30, 1
        %s246 = scalar_select %p245, %s30, 1
        %p247 = scmp.lt.s32.totalorder %s244, 15
        %s248 = scalar_select %p247, %s244, 15
        %s249 = smul.addr %s248, 3
        %s250 = smul.addr %s246, 48
        %s251 = sadd.s32 %s249, %s250
        %s252 = smul.addr %s251, 8
        %s253 = scalar_lea.vmem %s1, %s252
        %p254 = pneg %p67
        %p255 = pneg %p64
        %s256 = smul.u32 2, %s31
        %p257 = scmp.lt.s32.totalorder %s30, 1
        %s258 = scalar_select %p257, %s30, 1
        %p259 = scmp.lt.s32.totalorder %s256, 1
        %s260 = scalar_select %p259, %s256, 1
        %s261 = smul.addr %s260, 3
        %s262 = smul.addr %s258, 6
        %s263 = sadd.s32 %s261, %s262
        %s264 = smul.addr %s263, 8
        %s265 = scalar_lea.vmem %s2, %s264
        %p266 = pneg %p95
        %p267 = pneg %p92
        %p268 = scmp.lt.s32.totalorder %s32, 0
        %s269 = scalar_select %p268, %s32, 0
        %s270 = smul.addr %s269, 8
        %s271 = scalar_lea.vmem %s3, %s270
        %p272 = pneg %p121
        %p273 = pneg %p118
        %p274 = scmp.lt.s32.totalorder %s32, 0
        %s275 = scalar_select %p274, %s32, 0
        %s276 = scalar_lea.vmem %s4, %s275
        %p277 = pneg %p147
        %p278 = pneg %p144
        %p279 = pneg %p177
        %p280 = pneg %p174
        %s281 = sand.u32 %s164, 1
        %s282 = scalar_lea.sflag [#allocation6], %s281
        %s283 = sand.u32 %s164, 1
        %s284 = smul.addr %s283, 256
        %s285 = scalar_lea.vmem [#allocation5], %s284
        %s286 = smul.u32 16, %s31
        %p287 = scmp.lt.s32.totalorder %s30, 1
        %s288 = scalar_select %p287, %s30, 1
        %p289 = scmp.lt.s32.totalorder %s286, 15
        %s290 = scalar_select %p289, %s286, 15
        %s291 = smul.addr %s290, 3
        %s292 = smul.addr %s288, 48
        %s293 = sadd.s32 %s291, %s292
        %s294 = smul.addr %s293, 8
        %s295 = scalar_lea.vmem %s1, %s294
        %s296 = smul.u32 16, %s31
        %s297 = smul.u32 2, %s31
        %p298 = scmp.lt.s32.totalorder %s30, 1
        %s299 = scalar_select %p298, %s30, 1
        %p300 = scmp.lt.s32.totalorder %s297, 1
        %s301 = scalar_select %p300, %s297, 1
        %s302 = smul.addr %s301, 3
        %s303 = smul.addr %s299, 6
        %s304 = sadd.s32 %s302, %s303
        %s305 = smul.addr %s304, 8
        %s306 = scalar_lea.vmem %s2, %s305
        %s307 = smul.u32 2, %s31
        %p308 = scmp.lt.s32.totalorder %s32, 0
        %s309 = scalar_select %p308, %s32, 0
        %s310 = smul.addr %s309, 8
        %s311 = scalar_lea.vmem %s3, %s310
        %p312 = scmp.lt.s32.totalorder %s32, 0
        %s313 = scalar_select %p312, %s32, 0
        %s314 = scalar_lea.vmem %s4, %s313
        %s315 = smul.u32 32, %s31
        %p316 = scmp.eq.s32.totalorder %s32, 0
        // Predicated region
        $region37: #{tpu_custom_call.1} parent=35 // pred_check
          %p317 = pneg %p316
        $region38: #{tpu_custom_call.1} parent=35 // pred_check_branch
          %319 = sbr.rel (%p317) target = $region40
        $region39: #{tpu_custom_call.1} parent=35 // pred_region
          %v320 = vld [vmem:[%s295] sm:$0xff]
          %v321 = vld [vmem:[%s295 + $0x8] sm:$0xff]
          %v322 = vld [vmem:[%s295 + $0x10] sm:$0x3]
          %v323 = vld [vmem:[%s295 + $0x18] sm:$0xff]
          %v324 = vld [vmem:[%s295 + $0x20] sm:$0xff]
          %v325 = vld [vmem:[%s295 + $0x28] sm:$0x3]
          %v326 = vld [vmem:[%s295 + $0x30] sm:$0xff]
          %v327 = vld [vmem:[%s295 + $0x38] sm:$0xff]
          %v328 = vld [vmem:[%s295 + $0x40] sm:$0x3]
          %v329 = vld [vmem:[%s295 + $0x48] sm:$0xff]
          %v330 = vld [vmem:[%s295 + $0x50] sm:$0xff]
          %v331 = vld [vmem:[%s295 + $0x58] sm:$0x3]
          %v332 = vld [vmem:[%s295 + $0x60] sm:$0xff]
          %v333 = vld [vmem:[%s295 + $0x68] sm:$0xff]
          %v334 = vld [vmem:[%s295 + $0x70] sm:$0x3]
          %v335 = vld [vmem:[%s295 + $0x78] sm:$0xff]
          %v336 = vld [vmem:[%s295 + $0x80] sm:$0xff]
          %v337 = vld [vmem:[%s295 + $0x88] sm:$0x3]
          %v338 = vld [vmem:[%s295 + $0x90] sm:$0xff]
          %v339 = vld [vmem:[%s295 + $0x98] sm:$0xff]
          %v340 = vld [vmem:[%s295 + $0xa0] sm:$0x3]
          %v341 = vld [vmem:[%s295 + $0xa8] sm:$0xff]
          %v342 = vld [vmem:[%s295 + $0xb0] sm:$0xff]
          %v343 = vld [vmem:[%s295 + $0xb8] sm:$0x3]
          %v344 = vld [vmem:[%s295 + $0xc0] sm:$0xff]
          %v345 = vld [vmem:[%s295 + $0xc8] sm:$0xff]
          %v346 = vld [vmem:[%s295 + $0xd0] sm:$0x3]
          %v347 = vld [vmem:[%s295 + $0xd8] sm:$0xff]
          %v348 = vld [vmem:[%s295 + $0xe0] sm:$0xff]
          %v349 = vld [vmem:[%s295 + $0xe8] sm:$0x3]
          %v350 = vld [vmem:[%s295 + $0xf0] sm:$0xff]
          %v351 = vld [vmem:[%s295 + $0xf8] sm:$0xff]
          %v352 = vld [vmem:[%s295 + $0x100] sm:$0x3]
          %v353 = vld [vmem:[%s295 + $0x108] sm:$0xff]
          %v354 = vld [vmem:[%s295 + $0x110] sm:$0xff]
          %v355 = vld [vmem:[%s295 + $0x118] sm:$0x3]
          %v356 = vld [vmem:[%s295 + $0x120] sm:$0xff]
          %v357 = vld [vmem:[%s295 + $0x128] sm:$0xff]
          %v358 = vld [vmem:[%s295 + $0x130] sm:$0x3]
          %v359 = vld [vmem:[%s295 + $0x138] sm:$0xff]
          %v360 = vld [vmem:[%s295 + $0x140] sm:$0xff]
          %v361 = vld [vmem:[%s295 + $0x148] sm:$0x3]
          %v362 = vld [vmem:[%s295 + $0x150] sm:$0xff]
          %v363 = vld [vmem:[%s295 + $0x158] sm:$0xff]
          %v364 = vld [vmem:[%s295 + $0x160] sm:$0x3]
          %v365 = vld [vmem:[%s295 + $0x168] sm:$0xff]
          %v366 = vld [vmem:[%s295 + $0x170] sm:$0xff]
          %v367 = vld [vmem:[%s295 + $0x178] sm:$0x3]
          %v368 = vld [vmem:[%s306] sm:$0xff]
          %v369 = vld [vmem:[%s306 + $0x8] sm:$0xff]
          %v370 = vld [vmem:[%s306 + $0x10] sm:$0x3]
          %v371 = vld [vmem:[%s306 + $0x18] sm:$0xff]
          %v372 = vld [vmem:[%s306 + $0x20] sm:$0xff]
          %v373 = vld [vmem:[%s306 + $0x28] sm:$0x3]
          %s374 = sld [smem:[#allocation4]]
          %s375 = sld [smem:[#allocation4 + $0x1]]
          %v376 = vstv %s374
          %v377 = vmul.f32 %v320, %v376
          %v378 = vmul.f32 %v321, %v376
          %v379 = vmul.f32 %v322, %v376
          %v380 = vmul.f32 %v323, %v376
          %v381 = vmul.f32 %v324, %v376
          %v382 = vmul.f32 %v325, %v376
          %v383 = vmul.f32 %v326, %v376
          %v384 = vmul.f32 %v327, %v376
          %v385 = vmul.f32 %v328, %v376
          %v386 = vmul.f32 %v329, %v376
          %v387 = vmul.f32 %v330, %v376
          %v388 = vmul.f32 %v331, %v376
          %v389 = vmul.f32 %v332, %v376
          %v390 = vmul.f32 %v333, %v376
          %v391 = vmul.f32 %v334, %v376
          %v392 = vmul.f32 %v335, %v376
          %v393 = vmul.f32 %v336, %v376
          %v394 = vmul.f32 %v337, %v376
          %v395 = vmul.f32 %v338, %v376
          %v396 = vmul.f32 %v339, %v376
          %v397 = vmul.f32 %v340, %v376
          %v398 = vmul.f32 %v341, %v376
          %v399 = vmul.f32 %v342, %v376
          %v400 = vmul.f32 %v343, %v376
          %v401 = vmul.f32 %v344, %v376
          %v402 = vmul.f32 %v345, %v376
          %v403 = vmul.f32 %v346, %v376
          %v404 = vmul.f32 %v347, %v376
          %v405 = vmul.f32 %v348, %v376
          %v406 = vmul.f32 %v349, %v376
          %v407 = vmul.f32 %v350, %v376
          %v408 = vmul.f32 %v351, %v376
          %v409 = vmul.f32 %v352, %v376
          %v410 = vmul.f32 %v353, %v376
          %v411 = vmul.f32 %v354, %v376
          %v412 = vmul.f32 %v355, %v376
          %v413 = vmul.f32 %v356, %v376
          %v414 = vmul.f32 %v357, %v376
          %v415 = vmul.f32 %v358, %v376
          %v416 = vmul.f32 %v359, %v376
          %v417 = vmul.f32 %v360, %v376
          %v418 = vmul.f32 %v361, %v376
          %v419 = vmul.f32 %v362, %v376
          %v420 = vmul.f32 %v363, %v376
          %v421 = vmul.f32 %v364, %v376
          %v422 = vmul.f32 %v365, %v376
          %v423 = vmul.f32 %v366, %v376
          %v424 = vmul.f32 %v367, %v376
          %v425 = vmul.f32 %v368, %v376
          %v426 = vmul.f32 %v369, %v376
          %v427 = vmul.f32 %v370, %v376
          %v428 = vmul.f32 %v371, %v376
          %v429 = vmul.f32 %v372, %v376
          %v430 = vmul.f32 %v373, %v376
          %v431 = vround.ne.pseudo %v377
          %v432 = vround.ne.pseudo %v378
          %v433 = vround.ne.pseudo %v379
          %v434 = vround.ne.pseudo %v380
          %v435 = vround.ne.pseudo %v381
          %v436 = vround.ne.pseudo %v382
          %v437 = vround.ne.pseudo %v383
          %v438 = vround.ne.pseudo %v384
          %v439 = vround.ne.pseudo %v385
          %v440 = vround.ne.pseudo %v386
          %v441 = vround.ne.pseudo %v387
          %v442 = vround.ne.pseudo %v388
          %v443 = vround.ne.pseudo %v389
          %v444 = vround.ne.pseudo %v390
          %v445 = vround.ne.pseudo %v391
          %v446 = vround.ne.pseudo %v392
          %v447 = vround.ne.pseudo %v393
          %v448 = vround.ne.pseudo %v394
          %v449 = vround.ne.pseudo %v395
          %v450 = vround.ne.pseudo %v396
          %v451 = vround.ne.pseudo %v397
          %v452 = vround.ne.pseudo %v398
          %v453 = vround.ne.pseudo %v399
          %v454 = vround.ne.pseudo %v400
          %v455 = vround.ne.pseudo %v401
          %v456 = vround.ne.pseudo %v402
          %v457 = vround.ne.pseudo %v403
          %v458 = vround.ne.pseudo %v404
          %v459 = vround.ne.pseudo %v405
          %v460 = vround.ne.pseudo %v406
          %v461 = vround.ne.pseudo %v407
          %v462 = vround.ne.pseudo %v408
          %v463 = vround.ne.pseudo %v409
          %v464 = vround.ne.pseudo %v410
          %v465 = vround.ne.pseudo %v411
          %v466 = vround.ne.pseudo %v412
          %v467 = vround.ne.pseudo %v413
          %v468 = vround.ne.pseudo %v414
          %v469 = vround.ne.pseudo %v415
          %v470 = vround.ne.pseudo %v416
          %v471 = vround.ne.pseudo %v417
          %v472 = vround.ne.pseudo %v418
          %v473 = vround.ne.pseudo %v419
          %v474 = vround.ne.pseudo %v420
          %v475 = vround.ne.pseudo %v421
          %v476 = vround.ne.pseudo %v422
          %v477 = vround.ne.pseudo %v423
          %v478 = vround.ne.pseudo %v424
          %v479 = vround.ne.pseudo %v425
          %v480 = vround.ne.pseudo %v426
          %v481 = vround.ne.pseudo %v427
          %v482 = vround.ne.pseudo %v428
          %v483 = vround.ne.pseudo %v429
          %v484 = vround.ne.pseudo %v430
          %v485 = vmax.f32 %v431, -1.0
          %v486 = vmax.f32 %v432, -1.0
          %v487 = vmax.f32 %v433, -1.0
          %v488 = vmax.f32 %v434, -1.0
          %v489 = vmax.f32 %v435, -1.0
          %v490 = vmax.f32 %v436, -1.0
          %v491 = vmax.f32 %v437, -1.0
          %v492 = vmax.f32 %v438, -1.0
          %v493 = vmax.f32 %v439, -1.0
          %v494 = vmax.f32 %v440, -1.0
          %v495 = vmax.f32 %v441, -1.0
          %v496 = vmax.f32 %v442, -1.0
          %v497 = vmax.f32 %v443, -1.0
          %v498 = vmax.f32 %v444, -1.0
          %v499 = vmax.f32 %v445, -1.0
          %v500 = vmax.f32 %v446, -1.0
          %v501 = vmax.f32 %v447, -1.0
          %v502 = vmax.f32 %v448, -1.0
          %v503 = vmax.f32 %v449, -1.0
          %v504 = vmax.f32 %v450, -1.0
          %v505 = vmax.f32 %v451, -1.0
          %v506 = vmax.f32 %v452, -1.0
          %v507 = vmax.f32 %v453, -1.0
          %v508 = vmax.f32 %v454, -1.0
          %v509 = vmax.f32 %v455, -1.0
          %v510 = vmax.f32 %v456, -1.0
          %v511 = vmax.f32 %v457, -1.0
          %v512 = vmax.f32 %v458, -1.0
          %v513 = vmax.f32 %v459, -1.0
          %v514 = vmax.f32 %v460, -1.0
          %v515 = vmax.f32 %v461, -1.0
          %v516 = vmax.f32 %v462, -1.0
          %v517 = vmax.f32 %v463, -1.0
          %v518 = vmax.f32 %v464, -1.0
          %v519 = vmax.f32 %v465, -1.0
          %v520 = vmax.f32 %v466, -1.0
          %v521 = vmax.f32 %v467, -1.0
          %v522 = vmax.f32 %v468, -1.0
          %v523 = vmax.f32 %v469, -1.0
          %v524 = vmax.f32 %v470, -1.0
          %v525 = vmax.f32 %v471, -1.0
          %v526 = vmax.f32 %v472, -1.0
          %v527 = vmax.f32 %v473, -1.0
          %v528 = vmax.f32 %v474, -1.0
          %v529 = vmax.f32 %v475, -1.0
          %v530 = vmax.f32 %v476, -1.0
          %v531 = vmax.f32 %v477, -1.0
          %v532 = vmax.f32 %v478, -1.0
          %v533 = vmax.f32 %v479, -1.0
          %v534 = vmax.f32 %v480, -1.0
          %v535 = vmax.f32 %v481, -1.0
          %v536 = vmax.f32 %v482, -1.0
          %v537 = vmax.f32 %v483, -1.0
          %v538 = vmax.f32 %v484, -1.0
          %v539 = vmin.f32 %v485, 1.0
          %v540 = vmin.f32 %v486, 1.0
          %v541 = vmin.f32 %v487, 1.0
          %v542 = vmin.f32 %v488, 1.0
          %v543 = vmin.f32 %v489, 1.0
          %v544 = vmin.f32 %v490, 1.0
          %v545 = vmin.f32 %v491, 1.0
          %v546 = vmin.f32 %v492, 1.0
          %v547 = vmin.f32 %v493, 1.0
          %v548 = vmin.f32 %v494, 1.0
          %v549 = vmin.f32 %v495, 1.0
          %v550 = vmin.f32 %v496, 1.0
          %v551 = vmin.f32 %v497, 1.0
          %v552 = vmin.f32 %v498, 1.0
          %v553 = vmin.f32 %v499, 1.0
          %v554 = vmin.f32 %v500, 1.0
          %v555 = vmin.f32 %v501, 1.0
          %v556 = vmin.f32 %v502, 1.0
          %v557 = vmin.f32 %v503, 1.0
          %v558 = vmin.f32 %v504, 1.0
          %v559 = vmin.f32 %v505, 1.0
          %v560 = vmin.f32 %v506, 1.0
          %v561 = vmin.f32 %v507, 1.0
          %v562 = vmin.f32 %v508, 1.0
          %v563 = vmin.f32 %v509, 1.0
          %v564 = vmin.f32 %v510, 1.0
          %v565 = vmin.f32 %v511, 1.0
          %v566 = vmin.f32 %v512, 1.0
          %v567 = vmin.f32 %v513, 1.0
          %v568 = vmin.f32 %v514, 1.0
          %v569 = vmin.f32 %v515, 1.0
          %v570 = vmin.f32 %v516, 1.0
          %v571 = vmin.f32 %v517, 1.0
          %v572 = vmin.f32 %v518, 1.0
          %v573 = vmin.f32 %v519, 1.0
          %v574 = vmin.f32 %v520, 1.0
          %v575 = vmin.f32 %v521, 1.0
          %v576 = vmin.f32 %v522, 1.0
          %v577 = vmin.f32 %v523, 1.0
          %v578 = vmin.f32 %v524, 1.0
          %v579 = vmin.f32 %v525, 1.0
          %v580 = vmin.f32 %v526, 1.0
          %v581 = vmin.f32 %v527, 1.0
          %v582 = vmin.f32 %v528, 1.0
          %v583 = vmin.f32 %v529, 1.0
          %v584 = vmin.f32 %v530, 1.0
          %v585 = vmin.f32 %v531, 1.0
          %v586 = vmin.f32 %v532, 1.0
          %v587 = vmin.f32 %v533, 1.0
          %v588 = vmin.f32 %v534, 1.0
          %v589 = vmin.f32 %v535, 1.0
          %v590 = vmin.f32 %v536, 1.0
          %v591 = vmin.f32 %v537, 1.0
          %v592 = vmin.f32 %v538, 1.0
          %v593 = vstv %s375
          %v594 = vmul.f32 %v593, %v539
          %v595 = vmul.f32 %v593, %v540
          %v596 = vmul.f32 %v593, %v541
          %v597 = vmul.f32 %v593, %v542
          %v598 = vmul.f32 %v593, %v543
          %v599 = vmul.f32 %v593, %v544
          %v600 = vmul.f32 %v593, %v545
          %v601 = vmul.f32 %v593, %v546
          %v602 = vmul.f32 %v593, %v547
          %v603 = vmul.f32 %v593, %v548
          %v604 = vmul.f32 %v593, %v549
          %v605 = vmul.f32 %v593, %v550
          %v606 = vmul.f32 %v593, %v551
          %v607 = vmul.f32 %v593, %v552
          %v608 = vmul.f32 %v593, %v553
          %v609 = vmul.f32 %v593, %v554
          %v610 = vmul.f32 %v593, %v555
          %v611 = vmul.f32 %v593, %v556
          %v612 = vmul.f32 %v593, %v557
          %v613 = vmul.f32 %v593, %v558
          %v614 = vmul.f32 %v593, %v559
          %v615 = vmul.f32 %v593, %v560
          %v616 = vmul.f32 %v593, %v561
          %v617 = vmul.f32 %v593, %v562
          %v618 = vmul.f32 %v593, %v563
          %v619 = vmul.f32 %v593, %v564
          %v620 = vmul.f32 %v593, %v565
          %v621 = vmul.f32 %v593, %v566
          %v622 = vmul.f32 %v593, %v567
          %v623 = vmul.f32 %v593, %v568
          %v624 = vmul.f32 %v593, %v569
          %v625 = vmul.f32 %v593, %v570
          %v626 = vmul.f32 %v593, %v571
          %v627 = vmul.f32 %v593, %v572
          %v628 = vmul.f32 %v593, %v573
          %v629 = vmul.f32 %v593, %v574
          %v630 = vmul.f32 %v593, %v575
          %v631 = vmul.f32 %v593, %v576
          %v632 = vmul.f32 %v593, %v577
          %v633 = vmul.f32 %v593, %v578
          %v634 = vmul.f32 %v593, %v579
          %v635 = vmul.f32 %v593, %v580
          %v636 = vmul.f32 %v593, %v581
          %v637 = vmul.f32 %v593, %v582
          %v638 = vmul.f32 %v593, %v583
          %v639 = vmul.f32 %v593, %v584
          %v640 = vmul.f32 %v593, %v585
          %v641 = vmul.f32 %v593, %v586
          %v642 = vmul.f32 %v593, %v587
          %v643 = vmul.f32 %v593, %v588
          %v644 = vmul.f32 %v593, %v589
          %v645 = vmul.f32 %v593, %v590
          %v646 = vmul.f32 %v593, %v591
          %v647 = vmul.f32 %v593, %v592
          %v648 = vadd.f32 %v594, 0.0
          %v649 = vadd.f32 %v595, 0.0
          %v650 = vadd.f32 %v596, 0.0
          %v651 = vadd.f32 %v597, 0.0
          %v652 = vadd.f32 %v598, 0.0
          %v653 = vadd.f32 %v599, 0.0
          %v654 = vadd.f32 %v600, 0.0
          %v655 = vadd.f32 %v601, 0.0
          %v656 = vadd.f32 %v602, 0.0
          %v657 = vadd.f32 %v603, 0.0
          %v658 = vadd.f32 %v604, 0.0
          %v659 = vadd.f32 %v605, 0.0
          %v660 = vadd.f32 %v606, 0.0
          %v661 = vadd.f32 %v607, 0.0
          %v662 = vadd.f32 %v608, 0.0
          %v663 = vadd.f32 %v609, 0.0
          %v664 = vadd.f32 %v610, 0.0
          %v665 = vadd.f32 %v611, 0.0
          %v666 = vadd.f32 %v612, 0.0
          %v667 = vadd.f32 %v613, 0.0
          %v668 = vadd.f32 %v614, 0.0
          %v669 = vadd.f32 %v615, 0.0
          %v670 = vadd.f32 %v616, 0.0
          %v671 = vadd.f32 %v617, 0.0
          %v672 = vadd.f32 %v618, 0.0
          %v673 = vadd.f32 %v619, 0.0
          %v674 = vadd.f32 %v620, 0.0
          %v675 = vadd.f32 %v621, 0.0
          %v676 = vadd.f32 %v622, 0.0
          %v677 = vadd.f32 %v623, 0.0
          %v678 = vadd.f32 %v624, 0.0
          %v679 = vadd.f32 %v625, 0.0
          %v680 = vadd.f32 %v626, 0.0
          %v681 = vadd.f32 %v627, 0.0
          %v682 = vadd.f32 %v628, 0.0
          %v683 = vadd.f32 %v629, 0.0
          %v684 = vadd.f32 %v630, 0.0
          %v685 = vadd.f32 %v631, 0.0
          %v686 = vadd.f32 %v632, 0.0
          %v687 = vadd.f32 %v633, 0.0
          %v688 = vadd.f32 %v634, 0.0
          %v689 = vadd.f32 %v635, 0.0
          %v690 = vadd.f32 %v636, 0.0
          %v691 = vadd.f32 %v637, 0.0
          %v692 = vadd.f32 %v638, 0.0
          %v693 = vadd.f32 %v639, 0.0
          %v694 = vadd.f32 %v640, 0.0
          %v695 = vadd.f32 %v641, 0.0
          %v696 = vadd.f32 %v642, 0.0
          %v697 = vadd.f32 %v643, 0.0
          %v698 = vadd.f32 %v644, 0.0
          %v699 = vadd.f32 %v645, 0.0
          %v700 = vadd.f32 %v646, 0.0
          %v701 = vadd.f32 %v647, 0.0
          %s702 = sld [smem:[#allocation4 + $0x80]]
          %s703 = sld [smem:[#allocation4 + $0x81]]
          %v704 = vstv %s702
          %v705 = vmul.f32 %v320, %v704
          %v706 = vmul.f32 %v321, %v704
          %v707 = vmul.f32 %v322, %v704
          %v708 = vmul.f32 %v323, %v704
          %v709 = vmul.f32 %v324, %v704
          %v710 = vmul.f32 %v325, %v704
          %v711 = vmul.f32 %v326, %v704
          %v712 = vmul.f32 %v327, %v704
          %v713 = vmul.f32 %v328, %v704
          %v714 = vmul.f32 %v329, %v704
          %v715 = vmul.f32 %v330, %v704
          %v716 = vmul.f32 %v331, %v704
          %v717 = vmul.f32 %v332, %v704
          %v718 = vmul.f32 %v333, %v704
          %v719 = vmul.f32 %v334, %v704
          %v720 = vmul.f32 %v335, %v704
          %v721 = vmul.f32 %v336, %v704
          %v722 = vmul.f32 %v337, %v704
          %v723 = vmul.f32 %v338, %v704
          %v724 = vmul.f32 %v339, %v704
          %v725 = vmul.f32 %v340, %v704
          %v726 = vmul.f32 %v341, %v704
          %v727 = vmul.f32 %v342, %v704
          %v728 = vmul.f32 %v343, %v704
          %v729 = vmul.f32 %v344, %v704
          %v730 = vmul.f32 %v345, %v704
          %v731 = vmul.f32 %v346, %v704
          %v732 = vmul.f32 %v347, %v704
          %v733 = vmul.f32 %v348, %v704
          %v734 = vmul.f32 %v349, %v704
          %v735 = vmul.f32 %v350, %v704
          %v736 = vmul.f32 %v351, %v704
          %v737 = vmul.f32 %v352, %v704
          %v738 = vmul.f32 %v353, %v704
          %v739 = vmul.f32 %v354, %v704
          %v740 = vmul.f32 %v355, %v704
          %v741 = vmul.f32 %v356, %v704
          %v742 = vmul.f32 %v357, %v704
          %v743 = vmul.f32 %v358, %v704
          %v744 = vmul.f32 %v359, %v704
          %v745 = vmul.f32 %v360, %v704
          %v746 = vmul.f32 %v361, %v704
          %v747 = vmul.f32 %v362, %v704
          %v748 = vmul.f32 %v363, %v704
          %v749 = vmul.f32 %v364, %v704
          %v750 = vmul.f32 %v365, %v704
          %v751 = vmul.f32 %v366, %v704
          %v752 = vmul.f32 %v367, %v704
          %v753 = vmul.f32 %v368, %v704
          %v754 = vmul.f32 %v369, %v704
          %v755 = vmul.f32 %v370, %v704
          %v756 = vmul.f32 %v371, %v704
          %v757 = vmul.f32 %v372, %v704
          %v758 = vmul.f32 %v373, %v704
          %v759 = vround.ne.pseudo %v705
          %v760 = vround.ne.pseudo %v706
          %v761 = vround.ne.pseudo %v707
          %v762 = vround.ne.pseudo %v708
          %v763 = vround.ne.pseudo %v709
          %v764 = vround.ne.pseudo %v710
          %v765 = vround.ne.pseudo %v711
          %v766 = vround.ne.pseudo %v712
          %v767 = vround.ne.pseudo %v713
          %v768 = vround.ne.pseudo %v714
          %v769 = vround.ne.pseudo %v715
          %v770 = vround.ne.pseudo %v716
          %v771 = vround.ne.pseudo %v717
          %v772 = vround.ne.pseudo %v718
          %v773 = vround.ne.pseudo %v719
          %v774 = vround.ne.pseudo %v720
          %v775 = vround.ne.pseudo %v721
          %v776 = vround.ne.pseudo %v722
          %v777 = vround.ne.pseudo %v723
          %v778 = vround.ne.pseudo %v724
          %v779 = vround.ne.pseudo %v725
          %v780 = vround.ne.pseudo %v726
          %v781 = vround.ne.pseudo %v727
          %v782 = vround.ne.pseudo %v728
          %v783 = vround.ne.pseudo %v729
          %v784 = vround.ne.pseudo %v730
          %v785 = vround.ne.pseudo %v731
          %v786 = vround.ne.pseudo %v732
          %v787 = vround.ne.pseudo %v733
          %v788 = vround.ne.pseudo %v734
          %v789 = vround.ne.pseudo %v735
          %v790 = vround.ne.pseudo %v736
          %v791 = vround.ne.pseudo %v737
          %v792 = vround.ne.pseudo %v738
          %v793 = vround.ne.pseudo %v739
          %v794 = vround.ne.pseudo %v740
          %v795 = vround.ne.pseudo %v741
          %v796 = vround.ne.pseudo %v742
          %v797 = vround.ne.pseudo %v743
          %v798 = vround.ne.pseudo %v744
          %v799 = vround.ne.pseudo %v745
          %v800 = vround.ne.pseudo %v746
          %v801 = vround.ne.pseudo %v747
          %v802 = vround.ne.pseudo %v748
          %v803 = vround.ne.pseudo %v749
          %v804 = vround.ne.pseudo %v750
          %v805 = vround.ne.pseudo %v751
          %v806 = vround.ne.pseudo %v752
          %v807 = vround.ne.pseudo %v753
          %v808 = vround.ne.pseudo %v754
          %v809 = vround.ne.pseudo %v755
          %v810 = vround.ne.pseudo %v756
          %v811 = vround.ne.pseudo %v757
          %v812 = vround.ne.pseudo %v758
          %v813 = vmax.f32 %v759, -7.0
          %v814 = vmax.f32 %v760, -7.0
          %v815 = vmax.f32 %v761, -7.0
          %v816 = vmax.f32 %v762, -7.0
          %v817 = vmax.f32 %v763, -7.0
          %v818 = vmax.f32 %v764, -7.0
          %v819 = vmax.f32 %v765, -7.0
          %v820 = vmax.f32 %v766, -7.0
          %v821 = vmax.f32 %v767, -7.0
          %v822 = vmax.f32 %v768, -7.0
          %v823 = vmax.f32 %v769, -7.0
          %v824 = vmax.f32 %v770, -7.0
          %v825 = vmax.f32 %v771, -7.0
          %v826 = vmax.f32 %v772, -7.0
          %v827 = vmax.f32 %v773, -7.0
          %v828 = vmax.f32 %v774, -7.0
          %v829 = vmax.f32 %v775, -7.0
          %v830 = vmax.f32 %v776, -7.0
          %v831 = vmax.f32 %v777, -7.0
          %v832 = vmax.f32 %v778, -7.0
          %v833 = vmax.f32 %v779, -7.0
          %v834 = vmax.f32 %v780, -7.0
          %v835 = vmax.f32 %v781, -7.0
          %v836 = vmax.f32 %v782, -7.0
          %v837 = vmax.f32 %v783, -7.0
          %v838 = vmax.f32 %v784, -7.0
          %v839 = vmax.f32 %v785, -7.0
          %v840 = vmax.f32 %v786, -7.0
          %v841 = vmax.f32 %v787, -7.0
          %v842 = vmax.f32 %v788, -7.0
          %v843 = vmax.f32 %v789, -7.0
          %v844 = vmax.f32 %v790, -7.0
          %v845 = vmax.f32 %v791, -7.0
          %v846 = vmax.f32 %v792, -7.0
          %v847 = vmax.f32 %v793, -7.0
          %v848 = vmax.f32 %v794, -7.0
          %v849 = vmax.f32 %v795, -7.0
          %v850 = vmax.f32 %v796, -7.0
          %v851 = vmax.f32 %v797, -7.0
          %v852 = vmax.f32 %v798, -7.0
          %v853 = vmax.f32 %v799, -7.0
          %v854 = vmax.f32 %v800, -7.0
          %v855 = vmax.f32 %v801, -7.0
          %v856 = vmax.f32 %v802, -7.0
          %v857 = vmax.f32 %v803, -7.0
          %v858 = vmax.f32 %v804, -7.0
          %v859 = vmax.f32 %v805, -7.0
          %v860 = vmax.f32 %v806, -7.0
          %v861 = vmax.f32 %v807, -7.0
          %v862 = vmax.f32 %v808, -7.0
          %v863 = vmax.f32 %v809, -7.0
          %v864 = vmax.f32 %v810, -7.0
          %v865 = vmax.f32 %v811, -7.0
          %v866 = vmax.f32 %v812, -7.0
          %v867 = vmin.f32 %v813, 7.0
          %v868 = vmin.f32 %v814, 7.0
          %v869 = vmin.f32 %v815, 7.0
          %v870 = vmin.f32 %v816, 7.0
          %v871 = vmin.f32 %v817, 7.0
          %v872 = vmin.f32 %v818, 7.0
          %v873 = vmin.f32 %v819, 7.0
          %v874 = vmin.f32 %v820, 7.0
          %v875 = vmin.f32 %v821, 7.0
          %v876 = vmin.f32 %v822, 7.0
          %v877 = vmin.f32 %v823, 7.0
          %v878 = vmin.f32 %v824, 7.0
          %v879 = vmin.f32 %v825, 7.0
          %v880 = vmin.f32 %v826, 7.0
          %v881 = vmin.f32 %v827, 7.0
          %v882 = vmin.f32 %v828, 7.0
          %v883 = vmin.f32 %v829, 7.0
          %v884 = vmin.f32 %v830, 7.0
          %v885 = vmin.f32 %v831, 7.0
          %v886 = vmin.f32 %v832, 7.0
          %v887 = vmin.f32 %v833, 7.0
          %v888 = vmin.f32 %v834, 7.0
          %v889 = vmin.f32 %v835, 7.0
          %v890 = vmin.f32 %v836, 7.0
          %v891 = vmin.f32 %v837, 7.0
          %v892 = vmin.f32 %v838, 7.0
          %v893 = vmin.f32 %v839, 7.0
          %v894 = vmin.f32 %v840, 7.0
          %v895 = vmin.f32 %v841, 7.0
          %v896 = vmin.f32 %v842, 7.0
          %v897 = vmin.f32 %v843, 7.0
          %v898 = vmin.f32 %v844, 7.0
          %v899 = vmin.f32 %v845, 7.0
          %v900 = vmin.f32 %v846, 7.0
          %v901 = vmin.f32 %v847, 7.0
          %v902 = vmin.f32 %v848, 7.0
          %v903 = vmin.f32 %v849, 7.0
          %v904 = vmin.f32 %v850, 7.0
          %v905 = vmin.f32 %v851, 7.0
          %v906 = vmin.f32 %v852, 7.0
          %v907 = vmin.f32 %v853, 7.0
          %v908 = vmin.f32 %v854, 7.0
          %v909 = vmin.f32 %v855, 7.0
          %v910 = vmin.f32 %v856, 7.0
          %v911 = vmin.f32 %v857, 7.0
          %v912 = vmin.f32 %v858, 7.0
          %v913 = vmin.f32 %v859, 7.0
          %v914 = vmin.f32 %v860, 7.0
          %v915 = vmin.f32 %v861, 7.0
          %v916 = vmin.f32 %v862, 7.0
          %v917 = vmin.f32 %v863, 7.0
          %v918 = vmin.f32 %v864, 7.0
          %v919 = vmin.f32 %v865, 7.0
          %v920 = vmin.f32 %v866, 7.0
          %v921 = vstv %s703
          %v922 = vmul.f32 %v921, %v867
          %v923 = vmul.f32 %v921, %v868
          %v924 = vmul.f32 %v921, %v869
          %v925 = vmul.f32 %v921, %v870
          %v926 = vmul.f32 %v921, %v871
          %v927 = vmul.f32 %v921, %v872
          %v928 = vmul.f32 %v921, %v873
          %v929 = vmul.f32 %v921, %v874
          %v930 = vmul.f32 %v921, %v875
          %v931 = vmul.f32 %v921, %v876
          %v932 = vmul.f32 %v921, %v877
          %v933 = vmul.f32 %v921, %v878
          %v934 = vmul.f32 %v921, %v879
          %v935 = vmul.f32 %v921, %v880
          %v936 = vmul.f32 %v921, %v881
          %v937 = vmul.f32 %v921, %v882
          %v938 = vmul.f32 %v921, %v883
          %v939 = vmul.f32 %v921, %v884
          %v940 = vmul.f32 %v921, %v885
          %v941 = vmul.f32 %v921, %v886
          %v942 = vmul.f32 %v921, %v887
          %v943 = vmul.f32 %v921, %v888
          %v944 = vmul.f32 %v921, %v889
          %v945 = vmul.f32 %v921, %v890
          %v946 = vmul.f32 %v921, %v891
          %v947 = vmul.f32 %v921, %v892
          %v948 = vmul.f32 %v921, %v893
          %v949 = vmul.f32 %v921, %v894
          %v950 = vmul.f32 %v921, %v895
          %v951 = vmul.f32 %v921, %v896
          %v952 = vmul.f32 %v921, %v897
          %v953 = vmul.f32 %v921, %v898
          %v954 = vmul.f32 %v921, %v899
          %v955 = vmul.f32 %v921, %v900
          %v956 = vmul.f32 %v921, %v901
          %v957 = vmul.f32 %v921, %v902
          %v958 = vmul.f32 %v921, %v903
          %v959 = vmul.f32 %v921, %v904
          %v960 = vmul.f32 %v921, %v905
          %v961 = vmul.f32 %v921, %v906
          %v962 = vmul.f32 %v921, %v907
          %v963 = vmul.f32 %v921, %v908
          %v964 = vmul.f32 %v921, %v909
          %v965 = vmul.f32 %v921, %v910
          %v966 = vmul.f32 %v921, %v911
          %v967 = vmul.f32 %v921, %v912
          %v968 = vmul.f32 %v921, %v913
          %v969 = vmul.f32 %v921, %v914
          %v970 = vmul.f32 %v921, %v915
          %v971 = vmul.f32 %v921, %v916
          %v972 = vmul.f32 %v921, %v917
          %v973 = vmul.f32 %v921, %v918
          %v974 = vmul.f32 %v921, %v919
          %v975 = vmul.f32 %v921, %v920
          %v976 = vadd.f32 %v648, %v922
          %v977 = vadd.f32 %v649, %v923
          %v978 = vadd.f32 %v650, %v924
          %v979 = vadd.f32 %v651, %v925
          %v980 = vadd.f32 %v652, %v926
          %v981 = vadd.f32 %v653, %v927
          %v982 = vadd.f32 %v654, %v928
          %v983 = vadd.f32 %v655, %v929
          %v984 = vadd.f32 %v656, %v930
          %v985 = vadd.f32 %v657, %v931
          %v986 = vadd.f32 %v658, %v932
          %v987 = vadd.f32 %v659, %v933
          %v988 = vadd.f32 %v660, %v934
          %v989 = vadd.f32 %v661, %v935
          %v990 = vadd.f32 %v662, %v936
          %v991 = vadd.f32 %v663, %v937
          %v992 = vadd.f32 %v664, %v938
          %v993 = vadd.f32 %v665, %v939
          %v994 = vadd.f32 %v666, %v940
          %v995 = vadd.f32 %v667, %v941
          %v996 = vadd.f32 %v668, %v942
          %v997 = vadd.f32 %v669, %v943
          %v998 = vadd.f32 %v670, %v944
          %v999 = vadd.f32 %v671, %v945
          %v1000 = vadd.f32 %v672, %v946
          %v1001 = vadd.f32 %v673, %v947
          %v1002 = vadd.f32 %v674, %v948
          %v1003 = vadd.f32 %v675, %v949
          %v1004 = vadd.f32 %v676, %v950
          %v1005 = vadd.f32 %v677, %v951
          %v1006 = vadd.f32 %v678, %v952
          %v1007 = vadd.f32 %v679, %v953
          %v1008 = vadd.f32 %v680, %v954
          %v1009 = vadd.f32 %v681, %v955
          %v1010 = vadd.f32 %v682, %v956
          %v1011 = vadd.f32 %v683, %v957
          %v1012 = vadd.f32 %v684, %v958
          %v1013 = vadd.f32 %v685, %v959
          %v1014 = vadd.f32 %v686, %v960
          %v1015 = vadd.f32 %v687, %v961
          %v1016 = vadd.f32 %v688, %v962
          %v1017 = vadd.f32 %v689, %v963
          %v1018 = vadd.f32 %v690, %v964
          %v1019 = vadd.f32 %v691, %v965
          %v1020 = vadd.f32 %v692, %v966
          %v1021 = vadd.f32 %v693, %v967
          %v1022 = vadd.f32 %v694, %v968
          %v1023 = vadd.f32 %v695, %v969
          %v1024 = vadd.f32 %v696, %v970
          %v1025 = vadd.f32 %v697, %v971
          %v1026 = vadd.f32 %v698, %v972
          %v1027 = vadd.f32 %v699, %v973
          %v1028 = vadd.f32 %v700, %v974
          %v1029 = vadd.f32 %v701, %v975
          %s1030 = sld [smem:[#allocation4 + $0x100]]
          %s1031 = sld [smem:[#allocation4 + $0x101]]
          %v1032 = vstv %s1030
          %v1033 = vmul.f32 %v320, %v1032
          %v1034 = vmul.f32 %v321, %v1032
          %v1035 = vmul.f32 %v322, %v1032
          %v1036 = vmul.f32 %v323, %v1032
          %v1037 = vmul.f32 %v324, %v1032
          %v1038 = vmul.f32 %v325, %v1032
          %v1039 = vmul.f32 %v326, %v1032
          %v1040 = vmul.f32 %v327, %v1032
          %v1041 = vmul.f32 %v328, %v1032
          %v1042 = vmul.f32 %v329, %v1032
          %v1043 = vmul.f32 %v330, %v1032
          %v1044 = vmul.f32 %v331, %v1032
          %v1045 = vmul.f32 %v332, %v1032
          %v1046 = vmul.f32 %v333, %v1032
          %v1047 = vmul.f32 %v334, %v1032
          %v1048 = vmul.f32 %v335, %v1032
          %v1049 = vmul.f32 %v336, %v1032
          %v1050 = vmul.f32 %v337, %v1032
          %v1051 = vmul.f32 %v338, %v1032
          %v1052 = vmul.f32 %v339, %v1032
          %v1053 = vmul.f32 %v340, %v1032
          %v1054 = vmul.f32 %v341, %v1032
          %v1055 = vmul.f32 %v342, %v1032
          %v1056 = vmul.f32 %v343, %v1032
          %v1057 = vmul.f32 %v344, %v1032
          %v1058 = vmul.f32 %v345, %v1032
          %v1059 = vmul.f32 %v346, %v1032
          %v1060 = vmul.f32 %v347, %v1032
          %v1061 = vmul.f32 %v348, %v1032
          %v1062 = vmul.f32 %v349, %v1032
          %v1063 = vmul.f32 %v350, %v1032
          %v1064 = vmul.f32 %v351, %v1032
          %v1065 = vmul.f32 %v352, %v1032
          %v1066 = vmul.f32 %v353, %v1032
          %v1067 = vmul.f32 %v354, %v1032
          %v1068 = vmul.f32 %v355, %v1032
          %v1069 = vmul.f32 %v356, %v1032
          %v1070 = vmul.f32 %v357, %v1032
          %v1071 = vmul.f32 %v358, %v1032
          %v1072 = vmul.f32 %v359, %v1032
          %v1073 = vmul.f32 %v360, %v1032
          %v1074 = vmul.f32 %v361, %v1032
          %v1075 = vmul.f32 %v362, %v1032
          %v1076 = vmul.f32 %v363, %v1032
          %v1077 = vmul.f32 %v364, %v1032
          %v1078 = vmul.f32 %v365, %v1032
          %v1079 = vmul.f32 %v366, %v1032
          %v1080 = vmul.f32 %v367, %v1032
          %v1081 = vmul.f32 %v368, %v1032
          %v1082 = vmul.f32 %v369, %v1032
          %v1083 = vmul.f32 %v370, %v1032
          %v1084 = vmul.f32 %v371, %v1032
          %v1085 = vmul.f32 %v372, %v1032
          %v1086 = vmul.f32 %v373, %v1032
          %v1087 = vround.ne.pseudo %v1033
          %v1088 = vround.ne.pseudo %v1034
          %v1089 = vround.ne.pseudo %v1035
          %v1090 = vround.ne.pseudo %v1036
          %v1091 = vround.ne.pseudo %v1037
          %v1092 = vround.ne.pseudo %v1038
          %v1093 = vround.ne.pseudo %v1039
          %v1094 = vround.ne.pseudo %v1040
          %v1095 = vround.ne.pseudo %v1041
          %v1096 = vround.ne.pseudo %v1042
          %v1097 = vround.ne.pseudo %v1043
          %v1098 = vround.ne.pseudo %v1044
          %v1099 = vround.ne.pseudo %v1045
          %v1100 = vround.ne.pseudo %v1046
          %v1101 = vround.ne.pseudo %v1047
          %v1102 = vround.ne.pseudo %v1048
          %v1103 = vround.ne.pseudo %v1049
          %v1104 = vround.ne.pseudo %v1050
          %v1105 = vround.ne.pseudo %v1051
          %v1106 = vround.ne.pseudo %v1052
          %v1107 = vround.ne.pseudo %v1053
          %v1108 = vround.ne.pseudo %v1054
          %v1109 = vround.ne.pseudo %v1055
          %v1110 = vround.ne.pseudo %v1056
          %v1111 = vround.ne.pseudo %v1057
          %v1112 = vround.ne.pseudo %v1058
          %v1113 = vround.ne.pseudo %v1059
          %v1114 = vround.ne.pseudo %v1060
          %v1115 = vround.ne.pseudo %v1061
          %v1116 = vround.ne.pseudo %v1062
          %v1117 = vround.ne.pseudo %v1063
          %v1118 = vround.ne.pseudo %v1064
          %v1119 = vround.ne.pseudo %v1065
          %v1120 = vround.ne.pseudo %v1066
          %v1121 = vround.ne.pseudo %v1067
          %v1122 = vround.ne.pseudo %v1068
          %v1123 = vround.ne.pseudo %v1069
          %v1124 = vround.ne.pseudo %v1070
          %v1125 = vround.ne.pseudo %v1071
          %v1126 = vround.ne.pseudo %v1072
          %v1127 = vround.ne.pseudo %v1073
          %v1128 = vround.ne.pseudo %v1074
          %v1129 = vround.ne.pseudo %v1075
          %v1130 = vround.ne.pseudo %v1076
          %v1131 = vround.ne.pseudo %v1077
          %v1132 = vround.ne.pseudo %v1078
          %v1133 = vround.ne.pseudo %v1079
          %v1134 = vround.ne.pseudo %v1080
          %v1135 = vround.ne.pseudo %v1081
          %v1136 = vround.ne.pseudo %v1082
          %v1137 = vround.ne.pseudo %v1083
          %v1138 = vround.ne.pseudo %v1084
          %v1139 = vround.ne.pseudo %v1085
          %v1140 = vround.ne.pseudo %v1086
          %v1141 = vmax.f32 %v1087, -127.0
          %v1142 = vmax.f32 %v1088, -127.0
          %v1143 = vmax.f32 %v1089, -127.0
          %v1144 = vmax.f32 %v1090, -127.0
          %v1145 = vmax.f32 %v1091, -127.0
          %v1146 = vmax.f32 %v1092, -127.0
          %v1147 = vmax.f32 %v1093, -127.0
          %v1148 = vmax.f32 %v1094, -127.0
          %v1149 = vmax.f32 %v1095, -127.0
          %v1150 = vmax.f32 %v1096, -127.0
          %v1151 = vmax.f32 %v1097, -127.0
          %v1152 = vmax.f32 %v1098, -127.0
          %v1153 = vmax.f32 %v1099, -127.0
          %v1154 = vmax.f32 %v1100, -127.0
          %v1155 = vmax.f32 %v1101, -127.0
          %v1156 = vmax.f32 %v1102, -127.0
          %v1157 = vmax.f32 %v1103, -127.0
          %v1158 = vmax.f32 %v1104, -127.0
          %v1159 = vmax.f32 %v1105, -127.0
          %v1160 = vmax.f32 %v1106, -127.0
          %v1161 = vmax.f32 %v1107, -127.0
          %v1162 = vmax.f32 %v1108, -127.0
          %v1163 = vmax.f32 %v1109, -127.0
          %v1164 = vmax.f32 %v1110, -127.0
          %v1165 = vmax.f32 %v1111, -127.0
          %v1166 = vmax.f32 %v1112, -127.0
          %v1167 = vmax.f32 %v1113, -127.0
          %v1168 = vmax.f32 %v1114, -127.0
          %v1169 = vmax.f32 %v1115, -127.0
          %v1170 = vmax.f32 %v1116, -127.0
          %v1171 = vmax.f32 %v1117, -127.0
          %v1172 = vmax.f32 %v1118, -127.0
          %v1173 = vmax.f32 %v1119, -127.0
          %v1174 = vmax.f32 %v1120, -127.0
          %v1175 = vmax.f32 %v1121, -127.0
          %v1176 = vmax.f32 %v1122, -127.0
          %v1177 = vmax.f32 %v1123, -127.0
          %v1178 = vmax.f32 %v1124, -127.0
          %v1179 = vmax.f32 %v1125, -127.0
          %v1180 = vmax.f32 %v1126, -127.0
          %v1181 = vmax.f32 %v1127, -127.0
          %v1182 = vmax.f32 %v1128, -127.0
          %v1183 = vmax.f32 %v1129, -127.0
          %v1184 = vmax.f32 %v1130, -127.0
          %v1185 = vmax.f32 %v1131, -127.0
          %v1186 = vmax.f32 %v1132, -127.0
          %v1187 = vmax.f32 %v1133, -127.0
          %v1188 = vmax.f32 %v1134, -127.0
          %v1189 = vmax.f32 %v1135, -127.0
          %v1190 = vmax.f32 %v1136, -127.0
          %v1191 = vmax.f32 %v1137, -127.0
          %v1192 = vmax.f32 %v1138, -127.0
          %v1193 = vmax.f32 %v1139, -127.0
          %v1194 = vmax.f32 %v1140, -127.0
          %v1195 = vmin.f32 %v1141, 127.0
          %v1196 = vmin.f32 %v1142, 127.0
          %v1197 = vmin.f32 %v1143, 127.0
          %v1198 = vmin.f32 %v1144, 127.0
          %v1199 = vmin.f32 %v1145, 127.0
          %v1200 = vmin.f32 %v1146, 127.0
          %v1201 = vmin.f32 %v1147, 127.0
          %v1202 = vmin.f32 %v1148, 127.0
          %v1203 = vmin.f32 %v1149, 127.0
          %v1204 = vmin.f32 %v1150, 127.0
          %v1205 = vmin.f32 %v1151, 127.0
          %v1206 = vmin.f32 %v1152, 127.0
          %v1207 = vmin.f32 %v1153, 127.0
          %v1208 = vmin.f32 %v1154, 127.0
          %v1209 = vmin.f32 %v1155, 127.0
          %v1210 = vmin.f32 %v1156, 127.0
          %v1211 = vmin.f32 %v1157, 127.0
          %v1212 = vmin.f32 %v1158, 127.0
          %v1213 = vmin.f32 %v1159, 127.0
          %v1214 = vmin.f32 %v1160, 127.0
          %v1215 = vmin.f32 %v1161, 127.0
          %v1216 = vmin.f32 %v1162, 127.0
          %v1217 = vmin.f32 %v1163, 127.0
          %v1218 = vmin.f32 %v1164, 127.0
          %v1219 = vmin.f32 %v1165, 127.0
          %v1220 = vmin.f32 %v1166, 127.0
          %v1221 = vmin.f32 %v1167, 127.0
          %v1222 = vmin.f32 %v1168, 127.0
          %v1223 = vmin.f32 %v1169, 127.0
          %v1224 = vmin.f32 %v1170, 127.0
          %v1225 = vmin.f32 %v1171, 127.0
          %v1226 = vmin.f32 %v1172, 127.0
          %v1227 = vmin.f32 %v1173, 127.0
          %v1228 = vmin.f32 %v1174, 127.0
          %v1229 = vmin.f32 %v1175, 127.0
          %v1230 = vmin.f32 %v1176, 127.0
          %v1231 = vmin.f32 %v1177, 127.0
          %v1232 = vmin.f32 %v1178, 127.0
          %v1233 = vmin.f32 %v1179, 127.0
          %v1234 = vmin.f32 %v1180, 127.0
          %v1235 = vmin.f32 %v1181, 127.0
          %v1236 = vmin.f32 %v1182, 127.0
          %v1237 = vmin.f32 %v1183, 127.0
          %v1238 = vmin.f32 %v1184, 127.0
          %v1239 = vmin.f32 %v1185, 127.0
          %v1240 = vmin.f32 %v1186, 127.0
          %v1241 = vmin.f32 %v1187, 127.0
          %v1242 = vmin.f32 %v1188, 127.0
          %v1243 = vmin.f32 %v1189, 127.0
          %v1244 = vmin.f32 %v1190, 127.0
          %v1245 = vmin.f32 %v1191, 127.0
          %v1246 = vmin.f32 %v1192, 127.0
          %v1247 = vmin.f32 %v1193, 127.0
          %v1248 = vmin.f32 %v1194, 127.0
          %v1249 = vstv %s1031
          %v1250 = vmul.f32 %v1249, %v1195
          %v1251 = vmul.f32 %v1249, %v1196
          %v1252 = vmul.f32 %v1249, %v1197
          %v1253 = vmul.f32 %v1249, %v1198
          %v1254 = vmul.f32 %v1249, %v1199
          %v1255 = vmul.f32 %v1249, %v1200
          %v1256 = vmul.f32 %v1249, %v1201
          %v1257 = vmul.f32 %v1249, %v1202
          %v1258 = vmul.f32 %v1249, %v1203
          %v1259 = vmul.f32 %v1249, %v1204
          %v1260 = vmul.f32 %v1249, %v1205
          %v1261 = vmul.f32 %v1249, %v1206
          %v1262 = vmul.f32 %v1249, %v1207
          %v1263 = vmul.f32 %v1249, %v1208
          %v1264 = vmul.f32 %v1249, %v1209
          %v1265 = vmul.f32 %v1249, %v1210
          %v1266 = vmul.f32 %v1249, %v1211
          %v1267 = vmul.f32 %v1249, %v1212
          %v1268 = vmul.f32 %v1249, %v1213
          %v1269 = vmul.f32 %v1249, %v1214
          %v1270 = vmul.f32 %v1249, %v1215
          %v1271 = vmul.f32 %v1249, %v1216
          %v1272 = vmul.f32 %v1249, %v1217
          %v1273 = vmul.f32 %v1249, %v1218
          %v1274 = vmul.f32 %v1249, %v1219
          %v1275 = vmul.f32 %v1249, %v1220
          %v1276 = vmul.f32 %v1249, %v1221
          %v1277 = vmul.f32 %v1249, %v1222
          %v1278 = vmul.f32 %v1249, %v1223
          %v1279 = vmul.f32 %v1249, %v1224
          %v1280 = vmul.f32 %v1249, %v1225
          %v1281 = vmul.f32 %v1249, %v1226
          %v1282 = vmul.f32 %v1249, %v1227
          %v1283 = vmul.f32 %v1249, %v1228
          %v1284 = vmul.f32 %v1249, %v1229
          %v1285 = vmul.f32 %v1249, %v1230
          %v1286 = vmul.f32 %v1249, %v1231
          %v1287 = vmul.f32 %v1249, %v1232
          %v1288 = vmul.f32 %v1249, %v1233
          %v1289 = vmul.f32 %v1249, %v1234
          %v1290 = vmul.f32 %v1249, %v1235
          %v1291 = vmul.f32 %v1249, %v1236
          %v1292 = vmul.f32 %v1249, %v1237
          %v1293 = vmul.f32 %v1249, %v1238
          %v1294 = vmul.f32 %v1249, %v1239
          %v1295 = vmul.f32 %v1249, %v1240
          %v1296 = vmul.f32 %v1249, %v1241
          %v1297 = vmul.f32 %v1249, %v1242
          %v1298 = vmul.f32 %v1249, %v1243
          %v1299 = vmul.f32 %v1249, %v1244
          %v1300 = vmul.f32 %v1249, %v1245
          %v1301 = vmul.f32 %v1249, %v1246
          %v1302 = vmul.f32 %v1249, %v1247
          %v1303 = vmul.f32 %v1249, %v1248
          %v1304 = vadd.f32 %v976, %v1250
          %v1305 = vadd.f32 %v977, %v1251
          %v1306 = vadd.f32 %v978, %v1252
          %v1307 = vadd.f32 %v979, %v1253
          %v1308 = vadd.f32 %v980, %v1254
          %v1309 = vadd.f32 %v981, %v1255
          %v1310 = vadd.f32 %v982, %v1256
          %v1311 = vadd.f32 %v983, %v1257
          %v1312 = vadd.f32 %v984, %v1258
          %v1313 = vadd.f32 %v985, %v1259
          %v1314 = vadd.f32 %v986, %v1260
          %v1315 = vadd.f32 %v987, %v1261
          %v1316 = vadd.f32 %v988, %v1262
          %v1317 = vadd.f32 %v989, %v1263
          %v1318 = vadd.f32 %v990, %v1264
          %v1319 = vadd.f32 %v991, %v1265
          %v1320 = vadd.f32 %v992, %v1266
          %v1321 = vadd.f32 %v993, %v1267
          %v1322 = vadd.f32 %v994, %v1268
          %v1323 = vadd.f32 %v995, %v1269
          %v1324 = vadd.f32 %v996, %v1270
          %v1325 = vadd.f32 %v997, %v1271
          %v1326 = vadd.f32 %v998, %v1272
          %v1327 = vadd.f32 %v999, %v1273
          %v1328 = vadd.f32 %v1000, %v1274
          %v1329 = vadd.f32 %v1001, %v1275
          %v1330 = vadd.f32 %v1002, %v1276
          %v1331 = vadd.f32 %v1003, %v1277
          %v1332 = vadd.f32 %v1004, %v1278
          %v1333 = vadd.f32 %v1005, %v1279
          %v1334 = vadd.f32 %v1006, %v1280
          %v1335 = vadd.f32 %v1007, %v1281
          %v1336 = vadd.f32 %v1008, %v1282
          %v1337 = vadd.f32 %v1009, %v1283
          %v1338 = vadd.f32 %v1010, %v1284
          %v1339 = vadd.f32 %v1011, %v1285
          %v1340 = vadd.f32 %v1012, %v1286
          %v1341 = vadd.f32 %v1013, %v1287
          %v1342 = vadd.f32 %v1014, %v1288
          %v1343 = vadd.f32 %v1015, %v1289
          %v1344 = vadd.f32 %v1016, %v1290
          %v1345 = vadd.f32 %v1017, %v1291
          %v1346 = vadd.f32 %v1018, %v1292
          %v1347 = vadd.f32 %v1019, %v1293
          %v1348 = vadd.f32 %v1020, %v1294
          %v1349 = vadd.f32 %v1021, %v1295
          %v1350 = vadd.f32 %v1022, %v1296
          %v1351 = vadd.f32 %v1023, %v1297
          %v1352 = vadd.f32 %v1024, %v1298
          %v1353 = vadd.f32 %v1025, %v1299
          %v1354 = vadd.f32 %v1026, %v1300
          %v1355 = vadd.f32 %v1027, %v1301
          %v1356 = vadd.f32 %v1028, %v1302
          %v1357 = vadd.f32 %v1029, %v1303
          %vm1358 = vcmask 31744
          %1359 = vst.msk [vmem:[#allocation2] sm:$0xff] %vm1358, %v1304
          %1360 = vst.msk [vmem:[#allocation2 + $0x8] sm:$0xff] %vm1358, %v1305
          %1361 = vst.msk [vmem:[#allocation2 + $0x10] sm:$0xff] %vm1358, %v1307
          %1362 = vst.msk [vmem:[#allocation2 + $0x18] sm:$0xff] %vm1358, %v1308
          %1363 = vst.msk [vmem:[#allocation2 + $0x20] sm:$0xff] %vm1358, %v1310
          %1364 = vst.msk [vmem:[#allocation2 + $0x28] sm:$0xff] %vm1358, %v1311
          %1365 = vst.msk [vmem:[#allocation2 + $0x30] sm:$0xff] %vm1358, %v1313
          %1366 = vst.msk [vmem:[#allocation2 + $0x38] sm:$0xff] %vm1358, %v1314
          %1367 = vst.msk [vmem:[#allocation2 + $0x40] sm:$0xff] %vm1358, %v1316
          %1368 = vst.msk [vmem:[#allocation2 + $0x48] sm:$0xff] %vm1358, %v1317
          %1369 = vst.msk [vmem:[#allocation2 + $0x50] sm:$0xff] %vm1358, %v1319
          %1370 = vst.msk [vmem:[#allocation2 + $0x58] sm:$0xff] %vm1358, %v1320
          %1371 = vst.msk [vmem:[#allocation2 + $0x60] sm:$0xff] %vm1358, %v1322
          %1372 = vst.msk [vmem:[#allocation2 + $0x68] sm:$0xff] %vm1358, %v1323
          %1373 = vst.msk [vmem:[#allocation2 + $0x70] sm:$0xff] %vm1358, %v1325
          %1374 = vst.msk [vmem:[#allocation2 + $0x78] sm:$0xff] %vm1358, %v1326
          %1375 = vst.msk [vmem:[#allocation2 + $0x80] sm:$0xff] %vm1358, %v1328
          %1376 = vst.msk [vmem:[#allocation2 + $0x88] sm:$0xff] %vm1358, %v1329
          %1377 = vst.msk [vmem:[#allocation2 + $0x90] sm:$0xff] %vm1358, %v1331
          %1378 = vst.msk [vmem:[#allocation2 + $0x98] sm:$0xff] %vm1358, %v1332
          %1379 = vst.msk [vmem:[#allocation2 + $0xa0] sm:$0xff] %vm1358, %v1334
          %1380 = vst.msk [vmem:[#allocation2 + $0xa8] sm:$0xff] %vm1358, %v1335
          %1381 = vst.msk [vmem:[#allocation2 + $0xb0] sm:$0xff] %vm1358, %v1337
          %1382 = vst.msk [vmem:[#allocation2 + $0xb8] sm:$0xff] %vm1358, %v1338
          %1383 = vst.msk [vmem:[#allocation2 + $0xc0] sm:$0xff] %vm1358, %v1340
          %1384 = vst.msk [vmem:[#allocation2 + $0xc8] sm:$0xff] %vm1358, %v1341
          %1385 = vst.msk [vmem:[#allocation2 + $0xd0] sm:$0xff] %vm1358, %v1343
          %1386 = vst.msk [vmem:[#allocation2 + $0xd8] sm:$0xff] %vm1358, %v1344
          %1387 = vst.msk [vmem:[#allocation2 + $0xe0] sm:$0xff] %vm1358, %v1346
          %1388 = vst.msk [vmem:[#allocation2 + $0xe8] sm:$0xff] %vm1358, %v1347
          %1389 = vst.msk [vmem:[#allocation2 + $0xf0] sm:$0xff] %vm1358, %v1349
          %1390 = vst.msk [vmem:[#allocation2 + $0xf8] sm:$0xff] %vm1358, %v1350
          %vm1439 = vcmask 1046528
          %v1440 = vrot.slane %v1304, 1
          %v1441 = vrot.slane %v1305, 1
          %v1442 = vsel %vm1439, %v1440, %v1441
          %v1443 = vrot.slane %v1306, 1
          %v1444 = vsel %vm1439, %v1441, %v1443
          %v1445 = vrot.slane %v1307, 1
          %v1446 = vrot.slane %v1308, 1
          %v1447 = vsel %vm1439, %v1445, %v1446
          %v1448 = vrot.slane %v1309, 1
          %v1449 = vsel %vm1439, %v1446, %v1448
          %v1450 = vrot.slane %v1310, 1
          %v1451 = vrot.slane %v1311, 1
          %v1452 = vsel %vm1439, %v1450, %v1451
          %v1453 = vrot.slane %v1312, 1
          %v1454 = vsel %vm1439, %v1451, %v1453
          %v1455 = vrot.slane %v1313, 1
          %v1456 = vrot.slane %v1314, 1
          %v1457 = vsel %vm1439, %v1455, %v1456
          %v1458 = vrot.slane %v1315, 1
          %v1459 = vsel %vm1439, %v1456, %v1458
          %v1460 = vrot.slane %v1316, 1
          %v1461 = vrot.slane %v1317, 1
          %v1462 = vsel %vm1439, %v1460, %v1461
          %v1463 = vrot.slane %v1318, 1
          %v1464 = vsel %vm1439, %v1461, %v1463
          %v1465 = vrot.slane %v1319, 1
          %v1466 = vrot.slane %v1320, 1
          %v1467 = vsel %vm1439, %v1465, %v1466
          %v1468 = vrot.slane %v1321, 1
          %v1469 = vsel %vm1439, %v1466, %v1468
          %v1470 = vrot.slane %v1322, 1
          %v1471 = vrot.slane %v1323, 1
          %v1472 = vsel %vm1439, %v1470, %v1471
          %v1473 = vrot.slane %v1324, 1
          %v1474 = vsel %vm1439, %v1471, %v1473
          %v1475 = vrot.slane %v1325, 1
          %v1476 = vrot.slane %v1326, 1
          %v1477 = vsel %vm1439, %v1475, %v1476
          %v1478 = vrot.slane %v1327, 1
          %v1479 = vsel %vm1439, %v1476, %v1478
          %v1480 = vrot.slane %v1328, 1
          %v1481 = vrot.slane %v1329, 1
          %v1482 = vsel %vm1439, %v1480, %v1481
          %v1483 = vrot.slane %v1330, 1
          %v1484 = vsel %vm1439, %v1481, %v1483
          %v1485 = vrot.slane %v1331, 1
          %v1486 = vrot.slane %v1332, 1
          %v1487 = vsel %vm1439, %v1485, %v1486
          %v1488 = vrot.slane %v1333, 1
          %v1489 = vsel %vm1439, %v1486, %v1488
          %v1490 = vrot.slane %v1334, 1
          %v1491 = vrot.slane %v1335, 1
          %v1492 = vsel %vm1439, %v1490, %v1491
          %v1493 = vrot.slane %v1336, 1
          %v1494 = vsel %vm1439, %v1491, %v1493
          %v1495 = vrot.slane %v1337, 1
          %v1496 = vrot.slane %v1338, 1
          %v1497 = vsel %vm1439, %v1495, %v1496
          %v1498 = vrot.slane %v1339, 1
          %v1499 = vsel %vm1439, %v1496, %v1498
          %v1500 = vrot.slane %v1340, 1
          %v1501 = vrot.slane %v1341, 1
          %v1502 = vsel %vm1439, %v1500, %v1501
          %v1503 = vrot.slane %v1342, 1
          %v1504 = vsel %vm1439, %v1501, %v1503
          %v1505 = vrot.slane %v1343, 1
          %v1506 = vrot.slane %v1344, 1
          %v1507 = vsel %vm1439, %v1505, %v1506
          %v1508 = vrot.slane %v1345, 1
          %v1509 = vsel %vm1439, %v1506, %v1508
          %v1510 = vrot.slane %v1346, 1
          %v1511 = vrot.slane %v1347, 1
          %v1512 = vsel %vm1439, %v1510, %v1511
          %v1513 = vrot.slane %v1348, 1
          %v1514 = vsel %vm1439, %v1511, %v1513
          %v1515 = vrot.slane %v1349, 1
          %v1516 = vrot.slane %v1350, 1
          %v1517 = vsel %vm1439, %v1515, %v1516
          %v1518 = vrot.slane %v1351, 1
          %v1519 = vsel %vm1439, %v1516, %v1518
          %1520 = vrot.lane.b32.xlu0 %v1442, 4
          %v1521 = vpop.permute.xlu0 %1520
          %1522 = vrot.lane.b32.xlu0 %v1444, 4
          %v1523 = vpop.permute.xlu0 %1522
          %1524 = vrot.lane.b32.xlu0 %v1447, 4
          %v1525 = vpop.permute.xlu0 %1524
          %1526 = vrot.lane.b32.xlu0 %v1449, 4
          %v1527 = vpop.permute.xlu0 %1526
          %1528 = vrot.lane.b32.xlu0 %v1452, 4
          %v1529 = vpop.permute.xlu0 %1528
          %1530 = vrot.lane.b32.xlu0 %v1454, 4
          %v1531 = vpop.permute.xlu0 %1530
          %1532 = vrot.lane.b32.xlu0 %v1457, 4
          %v1533 = vpop.permute.xlu0 %1532
          %1534 = vrot.lane.b32.xlu0 %v1459, 4
          %v1535 = vpop.permute.xlu0 %1534
          %1536 = vrot.lane.b32.xlu0 %v1462, 4
          %v1537 = vpop.permute.xlu0 %1536
          %1538 = vrot.lane.b32.xlu0 %v1464, 4
          %v1539 = vpop.permute.xlu0 %1538
          %1540 = vrot.lane.b32.xlu0 %v1467, 4
          %v1541 = vpop.permute.xlu0 %1540
          %1542 = vrot.lane.b32.xlu0 %v1469, 4
          %v1543 = vpop.permute.xlu0 %1542
          %1544 = vrot.lane.b32.xlu0 %v1472, 4
          %v1545 = vpop.permute.xlu0 %1544
          %1546 = vrot.lane.b32.xlu0 %v1474, 4
          %v1547 = vpop.permute.xlu0 %1546
          %1548 = vrot.lane.b32.xlu0 %v1477, 4
          %v1549 = vpop.permute.xlu0 %1548
          %1550 = vrot.lane.b32.xlu0 %v1479, 4
          %v1551 = vpop.permute.xlu0 %1550
          %1552 = vrot.lane.b32.xlu0 %v1482, 4
          %v1553 = vpop.permute.xlu0 %1552
          %1554 = vrot.lane.b32.xlu0 %v1484, 4
          %v1555 = vpop.permute.xlu0 %1554
          %1556 = vrot.lane.b32.xlu0 %v1487, 4
          %v1557 = vpop.permute.xlu0 %1556
          %1558 = vrot.lane.b32.xlu0 %v1489, 4
          %v1559 = vpop.permute.xlu0 %1558
          %1560 = vrot.lane.b32.xlu0 %v1492, 4
          %v1561 = vpop.permute.xlu0 %1560
          %1562 = vrot.lane.b32.xlu0 %v1494, 4
          %v1563 = vpop.permute.xlu0 %1562
          %1564 = vrot.lane.b32.xlu0 %v1497, 4
          %v1565 = vpop.permute.xlu0 %1564
          %1566 = vrot.lane.b32.xlu0 %v1499, 4
          %v1567 = vpop.permute.xlu0 %1566
          %1568 = vrot.lane.b32.xlu0 %v1502, 4
          %v1569 = vpop.permute.xlu0 %1568
          %1570 = vrot.lane.b32.xlu0 %v1504, 4
          %v1571 = vpop.permute.xlu0 %1570
          %1572 = vrot.lane.b32.xlu0 %v1507, 4
          %v1573 = vpop.permute.xlu0 %1572
          %1574 = vrot.lane.b32.xlu0 %v1509, 4
          %v1575 = vpop.permute.xlu0 %1574
          %1576 = vrot.lane.b32.xlu0 %v1512, 4
          %v1577 = vpop.permute.xlu0 %1576
          %1578 = vrot.lane.b32.xlu0 %v1514, 4
          %v1579 = vpop.permute.xlu0 %1578
          %1580 = vrot.lane.b32.xlu0 %v1517, 4
          %v1581 = vpop.permute.xlu0 %1580
          %1582 = vrot.lane.b32.xlu0 %v1519, 4
          %v1583 = vpop.permute.xlu0 %1582
          %vm1616 = vcmask 64544
          %1617 = vst.msk [vmem:[#allocation2] sm:$0xff] %vm1616, %v1521
          %1618 = vst.msk [vmem:[#allocation2 + $0x8] sm:$0xff] %vm1616, %v1523
          %1619 = vst.msk [vmem:[#allocation2 + $0x10] sm:$0xff] %vm1616, %v1525
          %1620 = vst.msk [vmem:[#allocation2 + $0x18] sm:$0xff] %vm1616, %v1527
          %1621 = vst.msk [vmem:[#allocation2 + $0x20] sm:$0xff] %vm1616, %v1529
          %1622 = vst.msk [vmem:[#allocation2 + $0x28] sm:$0xff] %vm1616, %v1531
          %1623 = vst.msk [vmem:[#allocation2 + $0x30] sm:$0xff] %vm1616, %v1533
          %1624 = vst.msk [vmem:[#allocation2 + $0x38] sm:$0xff] %vm1616, %v1535
          %1625 = vst.msk [vmem:[#allocation2 + $0x40] sm:$0xff] %vm1616, %v1537
          %1626 = vst.msk [vmem:[#allocation2 + $0x48] sm:$0xff] %vm1616, %v1539
          %1627 = vst.msk [vmem:[#allocation2 + $0x50] sm:$0xff] %vm1616, %v1541
          %1628 = vst.msk [vmem:[#allocation2 + $0x58] sm:$0xff] %vm1616, %v1543
          %1629 = vst.msk [vmem:[#allocation2 + $0x60] sm:$0xff] %vm1616, %v1545
          %1630 = vst.msk [vmem:[#allocation2 + $0x68] sm:$0xff] %vm1616, %v1547
          %1631 = vst.msk [vmem:[#allocation2 + $0x70] sm:$0xff] %vm1616, %v1549
          %1632 = vst.msk [vmem:[#allocation2 + $0x78] sm:$0xff] %vm1616, %v1551
          %1633 = vst.msk [vmem:[#allocation2 + $0x80] sm:$0xff] %vm1616, %v1553
          %1634 = vst.msk [vmem:[#allocation2 + $0x88] sm:$0xff] %vm1616, %v1555
          %1635 = vst.msk [vmem:[#allocation2 + $0x90] sm:$0xff] %vm1616, %v1557
          %1636 = vst.msk [vmem:[#allocation2 + $0x98] sm:$0xff] %vm1616, %v1559
          %1637 = vst.msk [vmem:[#allocation2 + $0xa0] sm:$0xff] %vm1616, %v1561
          %1638 = vst.msk [vmem:[#allocation2 + $0xa8] sm:$0xff] %vm1616, %v1563
          %1639 = vst.msk [vmem:[#allocation2 + $0xb0] sm:$0xff] %vm1616, %v1565
          %1640 = vst.msk [vmem:[#allocation2 + $0xb8] sm:$0xff] %vm1616, %v1567
          %1641 = vst.msk [vmem:[#allocation2 + $0xc0] sm:$0xff] %vm1616, %v1569
          %1642 = vst.msk [vmem:[#allocation2 + $0xc8] sm:$0xff] %vm1616, %v1571
          %1643 = vst.msk [vmem:[#allocation2 + $0xd0] sm:$0xff] %vm1616, %v1573
          %1644 = vst.msk [vmem:[#allocation2 + $0xd8] sm:$0xff] %vm1616, %v1575
          %1645 = vst.msk [vmem:[#allocation2 + $0xe0] sm:$0xff] %vm1616, %v1577
          %1646 = vst.msk [vmem:[#allocation2 + $0xe8] sm:$0xff] %vm1616, %v1579
          %1647 = vst.msk [vmem:[#allocation2 + $0xf0] sm:$0xff] %vm1616, %v1581
          %1648 = vst.msk [vmem:[#allocation2 + $0xf8] sm:$0xff] %vm1616, %v1583
          %vm1649 = vcmask 1045504
          %v1650 = vrot.slane %v1304, 2
          %v1651 = vrot.slane %v1305, 2
          %v1652 = vsel %vm1649, %v1650, %v1651
          %v1653 = vrot.slane %v1306, 2
          %v1654 = vsel %vm1649, %v1651, %v1653
          %v1655 = vrot.slane %v1307, 2
          %v1656 = vrot.slane %v1308, 2
          %v1657 = vsel %vm1649, %v1655, %v1656
          %v1658 = vrot.slane %v1309, 2
          %v1659 = vsel %vm1649, %v1656, %v1658
          %v1660 = vrot.slane %v1310, 2
          %v1661 = vrot.slane %v1311, 2
          %v1662 = vsel %vm1649, %v1660, %v1661
          %v1663 = vrot.slane %v1312, 2
          %v1664 = vsel %vm1649, %v1661, %v1663
          %v1665 = vrot.slane %v1313, 2
          %v1666 = vrot.slane %v1314, 2
          %v1667 = vsel %vm1649, %v1665, %v1666
          %v1668 = vrot.slane %v1315, 2
          %v1669 = vsel %vm1649, %v1666, %v1668
          %v1670 = vrot.slane %v1316, 2
          %v1671 = vrot.slane %v1317, 2
          %v1672 = vsel %vm1649, %v1670, %v1671
          %v1673 = vrot.slane %v1318, 2
          %v1674 = vsel %vm1649, %v1671, %v1673
          %v1675 = vrot.slane %v1319, 2
          %v1676 = vrot.slane %v1320, 2
          %v1677 = vsel %vm1649, %v1675, %v1676
          %v1678 = vrot.slane %v1321, 2
          %v1679 = vsel %vm1649, %v1676, %v1678
          %v1680 = vrot.slane %v1322, 2
          %v1681 = vrot.slane %v1323, 2
          %v1682 = vsel %vm1649, %v1680, %v1681
          %v1683 = vrot.slane %v1324, 2
          %v1684 = vsel %vm1649, %v1681, %v1683
          %v1685 = vrot.slane %v1325, 2
          %v1686 = vrot.slane %v1326, 2
          %v1687 = vsel %vm1649, %v1685, %v1686
          %v1688 = vrot.slane %v1327, 2
          %v1689 = vsel %vm1649, %v1686, %v1688
          %v1690 = vrot.slane %v1328, 2
          %v1691 = vrot.slane %v1329, 2
          %v1692 = vsel %vm1649, %v1690, %v1691
          %v1693 = vrot.slane %v1330, 2
          %v1694 = vsel %vm1649, %v1691, %v1693
          %v1695 = vrot.slane %v1331, 2
          %v1696 = vrot.slane %v1332, 2
          %v1697 = vsel %vm1649, %v1695, %v1696
          %v1698 = vrot.slane %v1333, 2
          %v1699 = vsel %vm1649, %v1696, %v1698
          %v1700 = vrot.slane %v1334, 2
          %v1701 = vrot.slane %v1335, 2
          %v1702 = vsel %vm1649, %v1700, %v1701
          %v1703 = vrot.slane %v1336, 2
          %v1704 = vsel %vm1649, %v1701, %v1703
          %v1705 = vrot.slane %v1337, 2
          %v1706 = vrot.slane %v1338, 2
          %v1707 = vsel %vm1649, %v1705, %v1706
          %v1708 = vrot.slane %v1339, 2
          %v1709 = vsel %vm1649, %v1706, %v1708
          %v1710 = vrot.slane %v1340, 2
          %v1711 = vrot.slane %v1341, 2
          %v1712 = vsel %vm1649, %v1710, %v1711
          %v1713 = vrot.slane %v1342, 2
          %v1714 = vsel %vm1649, %v1711, %v1713
          %v1715 = vrot.slane %v1343, 2
          %v1716 = vrot.slane %v1344, 2
          %v1717 = vsel %vm1649, %v1715, %v1716
          %v1718 = vrot.slane %v1345, 2
          %v1719 = vsel %vm1649, %v1716, %v1718
          %v1720 = vrot.slane %v1346, 2
          %v1721 = vrot.slane %v1347, 2
          %v1722 = vsel %vm1649, %v1720, %v1721
          %v1723 = vrot.slane %v1348, 2
          %v1724 = vsel %vm1649, %v1721, %v1723
          %v1725 = vrot.slane %v1349, 2
          %v1726 = vrot.slane %v1350, 2
          %v1727 = vsel %vm1649, %v1725, %v1726
          %v1728 = vrot.slane %v1351, 2
          %v1729 = vsel %vm1649, %v1726, %v1728
          %1730 = vrot.lane.b32.xlu0 %v1652, 8
          %v1731 = vpop.permute.xlu0 %1730
          %1732 = vrot.lane.b32.xlu0 %v1654, 8
          %v1733 = vpop.permute.xlu0 %1732
          %1734 = vrot.lane.b32.xlu0 %v1657, 8
          %v1735 = vpop.permute.xlu0 %1734
          %1736 = vrot.lane.b32.xlu0 %v1659, 8
          %v1737 = vpop.permute.xlu0 %1736
          %1738 = vrot.lane.b32.xlu0 %v1662, 8
          %v1739 = vpop.permute.xlu0 %1738
          %1740 = vrot.lane.b32.xlu0 %v1664, 8
          %v1741 = vpop.permute.xlu0 %1740
          %1742 = vrot.lane.b32.xlu0 %v1667, 8
          %v1743 = vpop.permute.xlu0 %1742
          %1744 = vrot.lane.b32.xlu0 %v1669, 8
          %v1745 = vpop.permute.xlu0 %1744
          %1746 = vrot.lane.b32.xlu0 %v1672, 8
          %v1747 = vpop.permute.xlu0 %1746
          %1748 = vrot.lane.b32.xlu0 %v1674, 8
          %v1749 = vpop.permute.xlu0 %1748
          %1750 = vrot.lane.b32.xlu0 %v1677, 8
          %v1751 = vpop.permute.xlu0 %1750
          %1752 = vrot.lane.b32.xlu0 %v1679, 8
          %v1753 = vpop.permute.xlu0 %1752
          %1754 = vrot.lane.b32.xlu0 %v1682, 8
          %v1755 = vpop.permute.xlu0 %1754
          %1756 = vrot.lane.b32.xlu0 %v1684, 8
          %v1757 = vpop.permute.xlu0 %1756
          %1758 = vrot.lane.b32.xlu0 %v1687, 8
          %v1759 = vpop.permute.xlu0 %1758
          %1760 = vrot.lane.b32.xlu0 %v1689, 8
          %v1761 = vpop.permute.xlu0 %1760
          %1762 = vrot.lane.b32.xlu0 %v1692, 8
          %v1763 = vpop.permute.xlu0 %1762
          %1764 = vrot.lane.b32.xlu0 %v1694, 8
          %v1765 = vpop.permute.xlu0 %1764
          %1766 = vrot.lane.b32.xlu0 %v1697, 8
          %v1767 = vpop.permute.xlu0 %1766
          %1768 = vrot.lane.b32.xlu0 %v1699, 8
          %v1769 = vpop.permute.xlu0 %1768
          %1770 = vrot.lane.b32.xlu0 %v1702, 8
          %v1771 = vpop.permute.xlu0 %1770
          %1772 = vrot.lane.b32.xlu0 %v1704, 8
          %v1773 = vpop.permute.xlu0 %1772
          %1774 = vrot.lane.b32.xlu0 %v1707, 8
          %v1775 = vpop.permute.xlu0 %1774
          %1776 = vrot.lane.b32.xlu0 %v1709, 8
          %v1777 = vpop.permute.xlu0 %1776
          %1778 = vrot.lane.b32.xlu0 %v1712, 8
          %v1779 = vpop.permute.xlu0 %1778
          %1780 = vrot.lane.b32.xlu0 %v1714, 8
          %v1781 = vpop.permute.xlu0 %1780
          %1782 = vrot.lane.b32.xlu0 %v1717, 8
          %v1783 = vpop.permute.xlu0 %1782
          %1784 = vrot.lane.b32.xlu0 %v1719, 8
          %v1785 = vpop.permute.xlu0 %1784
          %1786 = vrot.lane.b32.xlu0 %v1722, 8
          %v1787 = vpop.permute.xlu0 %1786
          %1788 = vrot.lane.b32.xlu0 %v1724, 8
          %v1789 = vpop.permute.xlu0 %1788
          %1790 = vrot.lane.b32.xlu0 %v1727, 8
          %v1791 = vpop.permute.xlu0 %1790
          %1792 = vrot.lane.b32.xlu0 %v1729, 8
          %v1793 = vpop.permute.xlu0 %1792
          %vm1826 = vcmask 97344
          %1827 = vst.msk [vmem:[#allocation2] sm:$0xff] %vm1826, %v1731
          %1828 = vst.msk [vmem:[#allocation2 + $0x8] sm:$0xff] %vm1826, %v1733
          %1829 = vst.msk [vmem:[#allocation2 + $0x10] sm:$0xff] %vm1826, %v1735
          %1830 = vst.msk [vmem:[#allocation2 + $0x18] sm:$0xff] %vm1826, %v1737
          %1831 = vst.msk [vmem:[#allocation2 + $0x20] sm:$0xff] %vm1826, %v1739
          %1832 = vst.msk [vmem:[#allocation2 + $0x28] sm:$0xff] %vm1826, %v1741
          %1833 = vst.msk [vmem:[#allocation2 + $0x30] sm:$0xff] %vm1826, %v1743
          %1834 = vst.msk [vmem:[#allocation2 + $0x38] sm:$0xff] %vm1826, %v1745
          %1835 = vst.msk [vmem:[#allocation2 + $0x40] sm:$0xff] %vm1826, %v1747
          %1836 = vst.msk [vmem:[#allocation2 + $0x48] sm:$0xff] %vm1826, %v1749
          %1837 = vst.msk [vmem:[#allocation2 + $0x50] sm:$0xff] %vm1826, %v1751
          %1838 = vst.msk [vmem:[#allocation2 + $0x58] sm:$0xff] %vm1826, %v1753
          %1839 = vst.msk [vmem:[#allocation2 + $0x60] sm:$0xff] %vm1826, %v1755
          %1840 = vst.msk [vmem:[#allocation2 + $0x68] sm:$0xff] %vm1826, %v1757
          %1841 = vst.msk [vmem:[#allocation2 + $0x70] sm:$0xff] %vm1826, %v1759
          %1842 = vst.msk [vmem:[#allocation2 + $0x78] sm:$0xff] %vm1826, %v1761
          %1843 = vst.msk [vmem:[#allocation2 + $0x80] sm:$0xff] %vm1826, %v1763
          %1844 = vst.msk [vmem:[#allocation2 + $0x88] sm:$0xff] %vm1826, %v1765
          %1845 = vst.msk [vmem:[#allocation2 + $0x90] sm:$0xff] %vm1826, %v1767
          %1846 = vst.msk [vmem:[#allocation2 + $0x98] sm:$0xff] %vm1826, %v1769
          %1847 = vst.msk [vmem:[#allocation2 + $0xa0] sm:$0xff] %vm1826, %v1771
          %1848 = vst.msk [vmem:[#allocation2 + $0xa8] sm:$0xff] %vm1826, %v1773
          %1849 = vst.msk [vmem:[#allocation2 + $0xb0] sm:$0xff] %vm1826, %v1775
          %1850 = vst.msk [vmem:[#allocation2 + $0xb8] sm:$0xff] %vm1826, %v1777
          %1851 = vst.msk [vmem:[#allocation2 + $0xc0] sm:$0xff] %vm1826, %v1779
          %1852 = vst.msk [vmem:[#allocation2 + $0xc8] sm:$0xff] %vm1826, %v1781
          %1853 = vst.msk [vmem:[#allocation2 + $0xd0] sm:$0xff] %vm1826, %v1783
          %1854 = vst.msk [vmem:[#allocation2 + $0xd8] sm:$0xff] %vm1826, %v1785
          %1855 = vst.msk [vmem:[#allocation2 + $0xe0] sm:$0xff] %vm1826, %v1787
          %1856 = vst.msk [vmem:[#allocation2 + $0xe8] sm:$0xff] %vm1826, %v1789
          %1857 = vst.msk [vmem:[#allocation2 + $0xf0] sm:$0xff] %vm1826, %v1791
          %1858 = vst.msk [vmem:[#allocation2 + $0xf8] sm:$0xff] %vm1826, %v1793
          %1861 = vrot.lane.b32.xlu0 %v1307, 12
          %v1862 = vpop.permute.xlu0 %1861
          %1863 = vrot.lane.b32.xlu0 %v1308, 12
          %v1864 = vpop.permute.xlu0 %1863
          %1865 = vrot.lane.b32.xlu0 %v1310, 12
          %v1866 = vpop.permute.xlu0 %1865
          %1867 = vrot.lane.b32.xlu0 %v1311, 12
          %v1868 = vpop.permute.xlu0 %1867
          %1869 = vrot.lane.b32.xlu0 %v1313, 12
          %v1870 = vpop.permute.xlu0 %1869
          %1871 = vrot.lane.b32.xlu0 %v1314, 12
          %v1872 = vpop.permute.xlu0 %1871
          %1873 = vrot.lane.b32.xlu0 %v1316, 12
          %v1874 = vpop.permute.xlu0 %1873
          %1875 = vrot.lane.b32.xlu0 %v1317, 12
          %v1876 = vpop.permute.xlu0 %1875
          %1877 = vrot.lane.b32.xlu0 %v1319, 12
          %v1878 = vpop.permute.xlu0 %1877
          %1879 = vrot.lane.b32.xlu0 %v1320, 12
          %v1880 = vpop.permute.xlu0 %1879
          %1881 = vrot.lane.b32.xlu0 %v1322, 12
          %v1882 = vpop.permute.xlu0 %1881
          %1883 = vrot.lane.b32.xlu0 %v1323, 12
          %v1884 = vpop.permute.xlu0 %1883
          %1885 = vrot.lane.b32.xlu0 %v1325, 12
          %v1886 = vpop.permute.xlu0 %1885
          %1887 = vrot.lane.b32.xlu0 %v1326, 12
          %v1888 = vpop.permute.xlu0 %1887
          %1889 = vrot.lane.b32.xlu0 %v1328, 12
          %v1890 = vpop.permute.xlu0 %1889
          %1891 = vrot.lane.b32.xlu0 %v1329, 12
          %v1892 = vpop.permute.xlu0 %1891
          %1893 = vrot.lane.b32.xlu0 %v1331, 12
          %v1894 = vpop.permute.xlu0 %1893
          %1895 = vrot.lane.b32.xlu0 %v1332, 12
          %v1896 = vpop.permute.xlu0 %1895
          %1897 = vrot.lane.b32.xlu0 %v1334, 12
          %v1898 = vpop.permute.xlu0 %1897
          %1899 = vrot.lane.b32.xlu0 %v1335, 12
          %v1900 = vpop.permute.xlu0 %1899
          %1901 = vrot.lane.b32.xlu0 %v1337, 12
          %v1902 = vpop.permute.xlu0 %1901
          %1903 = vrot.lane.b32.xlu0 %v1338, 12
          %v1904 = vpop.permute.xlu0 %1903
          %1905 = vrot.lane.b32.xlu0 %v1340, 12
          %v1906 = vpop.permute.xlu0 %1905
          %1907 = vrot.lane.b32.xlu0 %v1341, 12
          %v1908 = vpop.permute.xlu0 %1907
          %1909 = vrot.lane.b32.xlu0 %v1343, 12
          %v1910 = vpop.permute.xlu0 %1909
          %1911 = vrot.lane.b32.xlu0 %v1344, 12
          %v1912 = vpop.permute.xlu0 %1911
          %1913 = vrot.lane.b32.xlu0 %v1346, 12
          %v1914 = vpop.permute.xlu0 %1913
          %1915 = vrot.lane.b32.xlu0 %v1347, 12
          %v1916 = vpop.permute.xlu0 %1915
          %1917 = vrot.lane.b32.xlu0 %v1349, 12
          %v1918 = vpop.permute.xlu0 %1917
          %1919 = vrot.lane.b32.xlu0 %v1350, 12
          %v1920 = vpop.permute.xlu0 %1919
          %1921 = vrot.lane.b32.xlu0 %v1352, 12
          %v1922 = vpop.permute.xlu0 %1921
          %1923 = vrot.lane.b32.xlu0 %v1353, 12
          %v1924 = vpop.permute.xlu0 %1923
          %vm1957 = vcmask 130144
          %1958 = vst.msk [vmem:[#allocation2] sm:$0xff] %vm1957, %v1862
          %1959 = vst.msk [vmem:[#allocation2 + $0x8] sm:$0xff] %vm1957, %v1864
          %1960 = vst.msk [vmem:[#allocation2 + $0x10] sm:$0xff] %vm1957, %v1866
          %1961 = vst.msk [vmem:[#allocation2 + $0x18] sm:$0xff] %vm1957, %v1868
          %1962 = vst.msk [vmem:[#allocation2 + $0x20] sm:$0xff] %vm1957, %v1870
          %1963 = vst.msk [vmem:[#allocation2 + $0x28] sm:$0xff] %vm1957, %v1872
          %1964 = vst.msk [vmem:[#allocation2 + $0x30] sm:$0xff] %vm1957, %v1874
          %1965 = vst.msk [vmem:[#allocation2 + $0x38] sm:$0xff] %vm1957, %v1876
          %1966 = vst.msk [vmem:[#allocation2 + $0x40] sm:$0xff] %vm1957, %v1878
          %1967 = vst.msk [vmem:[#allocation2 + $0x48] sm:$0xff] %vm1957, %v1880
          %1968 = vst.msk [vmem:[#allocation2 + $0x50] sm:$0xff] %vm1957, %v1882
          %1969 = vst.msk [vmem:[#allocation2 + $0x58] sm:$0xff] %vm1957, %v1884
          %1970 = vst.msk [vmem:[#allocation2 + $0x60] sm:$0xff] %vm1957, %v1886
          %1971 = vst.msk [vmem:[#allocation2 + $0x68] sm:$0xff] %vm1957, %v1888
          %1972 = vst.msk [vmem:[#allocation2 + $0x70] sm:$0xff] %vm1957, %v1890
          %1973 = vst.msk [vmem:[#allocation2 + $0x78] sm:$0xff] %vm1957, %v1892
          %1974 = vst.msk [vmem:[#allocation2 + $0x80] sm:$0xff] %vm1957, %v1894
          %1975 = vst.msk [vmem:[#allocation2 + $0x88] sm:$0xff] %vm1957, %v1896
          %1976 = vst.msk [vmem:[#allocation2 + $0x90] sm:$0xff] %vm1957, %v1898
          %1977 = vst.msk [vmem:[#allocation2 + $0x98] sm:$0xff] %vm1957, %v1900
          %1978 = vst.msk [vmem:[#allocation2 + $0xa0] sm:$0xff] %vm1957, %v1902
          %1979 = vst.msk [vmem:[#allocation2 + $0xa8] sm:$0xff] %vm1957, %v1904
          %1980 = vst.msk [vmem:[#allocation2 + $0xb0] sm:$0xff] %vm1957, %v1906
          %1981 = vst.msk [vmem:[#allocation2 + $0xb8] sm:$0xff] %vm1957, %v1908
          %1982 = vst.msk [vmem:[#allocation2 + $0xc0] sm:$0xff] %vm1957, %v1910
          %1983 = vst.msk [vmem:[#allocation2 + $0xc8] sm:$0xff] %vm1957, %v1912
          %1984 = vst.msk [vmem:[#allocation2 + $0xd0] sm:$0xff] %vm1957, %v1914
          %1985 = vst.msk [vmem:[#allocation2 + $0xd8] sm:$0xff] %vm1957, %v1916
          %1986 = vst.msk [vmem:[#allocation2 + $0xe0] sm:$0xff] %vm1957, %v1918
          %1987 = vst.msk [vmem:[#allocation2 + $0xe8] sm:$0xff] %vm1957, %v1920
          %1988 = vst.msk [vmem:[#allocation2 + $0xf0] sm:$0xff] %vm1957, %v1922
          %1989 = vst.msk [vmem:[#allocation2 + $0xf8] sm:$0xff] %vm1957, %v1924
          %v1991 = vrot.slane %v1352, 1
          %v1992 = vrot.slane %v1353, 1
          %v1993 = vsel %vm1439, %v1991, %v1992
          %v1994 = vrot.slane %v1354, 1
          %v1995 = vsel %vm1439, %v1992, %v1994
          %1996 = vrot.lane.b32.xlu0 %v1447, 16
          %v1997 = vpop.permute.xlu0 %1996
          %1998 = vrot.lane.b32.xlu0 %v1449, 16
          %v1999 = vpop.permute.xlu0 %1998
          %2000 = vrot.lane.b32.xlu0 %v1452, 16
          %v2001 = vpop.permute.xlu0 %2000
          %2002 = vrot.lane.b32.xlu0 %v1454, 16
          %v2003 = vpop.permute.xlu0 %2002
          %2004 = vrot.lane.b32.xlu0 %v1457, 16
          %v2005 = vpop.permute.xlu0 %2004
          %2006 = vrot.lane.b32.xlu0 %v1459, 16
          %v2007 = vpop.permute.xlu0 %2006
          %2008 = vrot.lane.b32.xlu0 %v1462, 16
          %v2009 = vpop.permute.xlu0 %2008
          %2010 = vrot.lane.b32.xlu0 %v1464, 16
          %v2011 = vpop.permute.xlu0 %2010
          %2012 = vrot.lane.b32.xlu0 %v1467, 16
          %v2013 = vpop.permute.xlu0 %2012
          %2014 = vrot.lane.b32.xlu0 %v1469, 16
          %v2015 = vpop.permute.xlu0 %2014
          %2016 = vrot.lane.b32.xlu0 %v1472, 16
          %v2017 = vpop.permute.xlu0 %2016
          %2018 = vrot.lane.b32.xlu0 %v1474, 16
          %v2019 = vpop.permute.xlu0 %2018
          %2020 = vrot.lane.b32.xlu0 %v1477, 16
          %v2021 = vpop.permute.xlu0 %2020
          %2022 = vrot.lane.b32.xlu0 %v1479, 16
          %v2023 = vpop.permute.xlu0 %2022
          %2024 = vrot.lane.b32.xlu0 %v1482, 16
          %v2025 = vpop.permute.xlu0 %2024
          %2026 = vrot.lane.b32.xlu0 %v1484, 16
          %v2027 = vpop.permute.xlu0 %2026
          %2028 = vrot.lane.b32.xlu0 %v1487, 16
          %v2029 = vpop.permute.xlu0 %2028
          %2030 = vrot.lane.b32.xlu0 %v1489, 16
          %v2031 = vpop.permute.xlu0 %2030
          %2032 = vrot.lane.b32.xlu0 %v1492, 16
          %v2033 = vpop.permute.xlu0 %2032
          %2034 = vrot.lane.b32.xlu0 %v1494, 16
          %v2035 = vpop.permute.xlu0 %2034
          %2036 = vrot.lane.b32.xlu0 %v1497, 16
          %v2037 = vpop.permute.xlu0 %2036
          %2038 = vrot.lane.b32.xlu0 %v1499, 16
          %v2039 = vpop.permute.xlu0 %2038
          %2040 = vrot.lane.b32.xlu0 %v1502, 16
          %v2041 = vpop.permute.xlu0 %2040
          %2042 = vrot.lane.b32.xlu0 %v1504, 16
          %v2043 = vpop.permute.xlu0 %2042
          %2044 = vrot.lane.b32.xlu0 %v1507, 16
          %v2045 = vpop.permute.xlu0 %2044
          %2046 = vrot.lane.b32.xlu0 %v1509, 16
          %v2047 = vpop.permute.xlu0 %2046
          %2048 = vrot.lane.b32.xlu0 %v1512, 16
          %v2049 = vpop.permute.xlu0 %2048
          %2050 = vrot.lane.b32.xlu0 %v1514, 16
          %v2051 = vpop.permute.xlu0 %2050
          %2052 = vrot.lane.b32.xlu0 %v1517, 16
          %v2053 = vpop.permute.xlu0 %2052
          %2054 = vrot.lane.b32.xlu0 %v1519, 16
          %v2055 = vpop.permute.xlu0 %2054
          %2056 = vrot.lane.b32.xlu0 %v1993, 16
          %v2057 = vpop.permute.xlu0 %2056
          %2058 = vrot.lane.b32.xlu0 %v1995, 16
          %v2059 = vpop.permute.xlu0 %2058
          %vm2092 = vcmask 162944
          %2093 = vst.msk [vmem:[#allocation2] sm:$0xff] %vm2092, %v1997
          %2094 = vst.msk [vmem:[#allocation2 + $0x8] sm:$0xff] %vm2092, %v1999
          %2095 = vst.msk [vmem:[#allocation2 + $0x10] sm:$0xff] %vm2092, %v2001
          %2096 = vst.msk [vmem:[#allocation2 + $0x18] sm:$0xff] %vm2092, %v2003
          %2097 = vst.msk [vmem:[#allocation2 + $0x20] sm:$0xff] %vm2092, %v2005
          %2098 = vst.msk [vmem:[#allocation2 + $0x28] sm:$0xff] %vm2092, %v2007
          %2099 = vst.msk [vmem:[#allocation2 + $0x30] sm:$0xff] %vm2092, %v2009
          %2100 = vst.msk [vmem:[#allocation2 + $0x38] sm:$0xff] %vm2092, %v2011
          %2101 = vst.msk [vmem:[#allocation2 + $0x40] sm:$0xff] %vm2092, %v2013
          %2102 = vst.msk [vmem:[#allocation2 + $0x48] sm:$0xff] %vm2092, %v2015
          %2103 = vst.msk [vmem:[#allocation2 + $0x50] sm:$0xff] %vm2092, %v2017
          %2104 = vst.msk [vmem:[#allocation2 + $0x58] sm:$0xff] %vm2092, %v2019
          %2105 = vst.msk [vmem:[#allocation2 + $0x60] sm:$0xff] %vm2092, %v2021
          %2106 = vst.msk [vmem:[#allocation2 + $0x68] sm:$0xff] %vm2092, %v2023
          %2107 = vst.msk [vmem:[#allocation2 + $0x70] sm:$0xff] %vm2092, %v2025
          %2108 = vst.msk [vmem:[#allocation2 + $0x78] sm:$0xff] %vm2092, %v2027
          %2109 = vst.msk [vmem:[#allocation2 + $0x80] sm:$0xff] %vm2092, %v2029
          %2110 = vst.msk [vmem:[#allocation2 + $0x88] sm:$0xff] %vm2092, %v2031
          %2111 = vst.msk [vmem:[#allocation2 + $0x90] sm:$0xff] %vm2092, %v2033
          %2112 = vst.msk [vmem:[#allocation2 + $0x98] sm:$0xff] %vm2092, %v2035
          %2113 = vst.msk [vmem:[#allocation2 + $0xa0] sm:$0xff] %vm2092, %v2037
          %2114 = vst.msk [vmem:[#allocation2 + $0xa8] sm:$0xff] %vm2092, %v2039
          %2115 = vst.msk [vmem:[#allocation2 + $0xb0] sm:$0xff] %vm2092, %v2041
          %2116 = vst.msk [vmem:[#allocation2 + $0xb8] sm:$0xff] %vm2092, %v2043
          %2117 = vst.msk [vmem:[#allocation2 + $0xc0] sm:$0xff] %vm2092, %v2045
          %2118 = vst.msk [vmem:[#allocation2 + $0xc8] sm:$0xff] %vm2092, %v2047
          %2119 = vst.msk [vmem:[#allocation2 + $0xd0] sm:$0xff] %vm2092, %v2049
          %2120 = vst.msk [vmem:[#allocation2 + $0xd8] sm:$0xff] %vm2092, %v2051
          %2121 = vst.msk [vmem:[#allocation2 + $0xe0] sm:$0xff] %vm2092, %v2053
          %2122 = vst.msk [vmem:[#allocation2 + $0xe8] sm:$0xff] %vm2092, %v2055
          %2123 = vst.msk [vmem:[#allocation2 + $0xf0] sm:$0xff] %vm2092, %v2057
          %2124 = vst.msk [vmem:[#allocation2 + $0xf8] sm:$0xff] %vm2092, %v2059
          %v2125 = vrot.slane %v1352, 2
          %v2126 = vrot.slane %v1353, 2
          %v2127 = vsel %vm1649, %v2125, %v2126
          %v2128 = vrot.slane %v1354, 2
          %v2129 = vsel %vm1649, %v2126, %v2128
          %2130 = vrot.lane.b32.xlu0 %v1657, 20
          %v2131 = vpop.permute.xlu0 %2130
          %2132 = vrot.lane.b32.xlu0 %v1659, 20
          %v2133 = vpop.permute.xlu0 %2132
          %2134 = vrot.lane.b32.xlu0 %v1662, 20
          %v2135 = vpop.permute.xlu0 %2134
          %2136 = vrot.lane.b32.xlu0 %v1664, 20
          %v2137 = vpop.permute.xlu0 %2136
          %2138 = vrot.lane.b32.xlu0 %v1667, 20
          %v2139 = vpop.permute.xlu0 %2138
          %2140 = vrot.lane.b32.xlu0 %v1669, 20
          %v2141 = vpop.permute.xlu0 %2140
          %2142 = vrot.lane.b32.xlu0 %v1672, 20
          %v2143 = vpop.permute.xlu0 %2142
          %2144 = vrot.lane.b32.xlu0 %v1674, 20
          %v2145 = vpop.permute.xlu0 %2144
          %2146 = vrot.lane.b32.xlu0 %v1677, 20
          %v2147 = vpop.permute.xlu0 %2146
          %2148 = vrot.lane.b32.xlu0 %v1679, 20
          %v2149 = vpop.permute.xlu0 %2148
          %2150 = vrot.lane.b32.xlu0 %v1682, 20
          %v2151 = vpop.permute.xlu0 %2150
          %2152 = vrot.lane.b32.xlu0 %v1684, 20
          %v2153 = vpop.permute.xlu0 %2152
          %2154 = vrot.lane.b32.xlu0 %v1687, 20
          %v2155 = vpop.permute.xlu0 %2154
          %2156 = vrot.lane.b32.xlu0 %v1689, 20
          %v2157 = vpop.permute.xlu0 %2156
          %2158 = vrot.lane.b32.xlu0 %v1692, 20
          %v2159 = vpop.permute.xlu0 %2158
          %2160 = vrot.lane.b32.xlu0 %v1694, 20
          %v2161 = vpop.permute.xlu0 %2160
          %2162 = vrot.lane.b32.xlu0 %v1697, 20
          %v2163 = vpop.permute.xlu0 %2162
          %2164 = vrot.lane.b32.xlu0 %v1699, 20
          %v2165 = vpop.permute.xlu0 %2164
          %2166 = vrot.lane.b32.xlu0 %v1702, 20
          %v2167 = vpop.permute.xlu0 %2166
          %2168 = vrot.lane.b32.xlu0 %v1704, 20
          %v2169 = vpop.permute.xlu0 %2168
          %2170 = vrot.lane.b32.xlu0 %v1707, 20
          %v2171 = vpop.permute.xlu0 %2170
          %2172 = vrot.lane.b32.xlu0 %v1709, 20
          %v2173 = vpop.permute.xlu0 %2172
          %2174 = vrot.lane.b32.xlu0 %v1712, 20
          %v2175 = vpop.permute.xlu0 %2174
          %2176 = vrot.lane.b32.xlu0 %v1714, 20
          %v2177 = vpop.permute.xlu0 %2176
          %2178 = vrot.lane.b32.xlu0 %v1717, 20
          %v2179 = vpop.permute.xlu0 %2178
          %2180 = vrot.lane.b32.xlu0 %v1719, 20
          %v2181 = vpop.permute.xlu0 %2180
          %2182 = vrot.lane.b32.xlu0 %v1722, 20
          %v2183 = vpop.permute.xlu0 %2182
          %2184 = vrot.lane.b32.xlu0 %v1724, 20
          %v2185 = vpop.permute.xlu0 %2184
          %2186 = vrot.lane.b32.xlu0 %v1727, 20
          %v2187 = vpop.permute.xlu0 %2186
          %2188 = vrot.lane.b32.xlu0 %v1729, 20
          %v2189 = vpop.permute.xlu0 %2188
          %2190 = vrot.lane.b32.xlu0 %v2127, 20
          %v2191 = vpop.permute.xlu0 %2190
          %2192 = vrot.lane.b32.xlu0 %v2129, 20
          %v2193 = vpop.permute.xlu0 %2192
          %vm2226 = vcmask 195744
          %2227 = vst.msk [vmem:[#allocation2] sm:$0xff] %vm2226, %v2131
          %2228 = vst.msk [vmem:[#allocation2 + $0x8] sm:$0xff] %vm2226, %v2133
          %2229 = vst.msk [vmem:[#allocation2 + $0x10] sm:$0xff] %vm2226, %v2135
          %2230 = vst.msk [vmem:[#allocation2 + $0x18] sm:$0xff] %vm2226, %v2137
          %2231 = vst.msk [vmem:[#allocation2 + $0x20] sm:$0xff] %vm2226, %v2139
          %2232 = vst.msk [vmem:[#allocation2 + $0x28] sm:$0xff] %vm2226, %v2141
          %2233 = vst.msk [vmem:[#allocation2 + $0x30] sm:$0xff] %vm2226, %v2143
          %2234 = vst.msk [vmem:[#allocation2 + $0x38] sm:$0xff] %vm2226, %v2145
          %2235 = vst.msk [vmem:[#allocation2 + $0x40] sm:$0xff] %vm2226, %v2147
          %2236 = vst.msk [vmem:[#allocation2 + $0x48] sm:$0xff] %vm2226, %v2149
          %2237 = vst.msk [vmem:[#allocation2 + $0x50] sm:$0xff] %vm2226, %v2151
          %2238 = vst.msk [vmem:[#allocation2 + $0x58] sm:$0xff] %vm2226, %v2153
          %2239 = vst.msk [vmem:[#allocation2 + $0x60] sm:$0xff] %vm2226, %v2155
          %2240 = vst.msk [vmem:[#allocation2 + $0x68] sm:$0xff] %vm2226, %v2157
          %2241 = vst.msk [vmem:[#allocation2 + $0x70] sm:$0xff] %vm2226, %v2159
          %2242 = vst.msk [vmem:[#allocation2 + $0x78] sm:$0xff] %vm2226, %v2161
          %2243 = vst.msk [vmem:[#allocation2 + $0x80] sm:$0xff] %vm2226, %v2163
          %2244 = vst.msk [vmem:[#allocation2 + $0x88] sm:$0xff] %vm2226, %v2165
          %2245 = vst.msk [vmem:[#allocation2 + $0x90] sm:$0xff] %vm2226, %v2167
          %2246 = vst.msk [vmem:[#allocation2 + $0x98] sm:$0xff] %vm2226, %v2169
          %2247 = vst.msk [vmem:[#allocation2 + $0xa0] sm:$0xff] %vm2226, %v2171
          %2248 = vst.msk [vmem:[#allocation2 + $0xa8] sm:$0xff] %vm2226, %v2173
          %2249 = vst.msk [vmem:[#allocation2 + $0xb0] sm:$0xff] %vm2226, %v2175
          %2250 = vst.msk [vmem:[#allocation2 + $0xb8] sm:$0xff] %vm2226, %v2177
          %2251 = vst.msk [vmem:[#allocation2 + $0xc0] sm:$0xff] %vm2226, %v2179
          %2252 = vst.msk [vmem:[#allocation2 + $0xc8] sm:$0xff] %vm2226, %v2181
          %2253 = vst.msk [vmem:[#allocation2 + $0xd0] sm:$0xff] %vm2226, %v2183
          %2254 = vst.msk [vmem:[#allocation2 + $0xd8] sm:$0xff] %vm2226, %v2185
          %2255 = vst.msk [vmem:[#allocation2 + $0xe0] sm:$0xff] %vm2226, %v2187
          %2256 = vst.msk [vmem:[#allocation2 + $0xe8] sm:$0xff] %vm2226, %v2189
          %2257 = vst.msk [vmem:[#allocation2 + $0xf0] sm:$0xff] %vm2226, %v2191
          %2258 = vst.msk [vmem:[#allocation2 + $0xf8] sm:$0xff] %vm2226, %v2193
          %2261 = vrot.lane.b32.xlu0 %v1310, 24
          %v2262 = vpop.permute.xlu0 %2261
          %2263 = vrot.lane.b32.xlu0 %v1311, 24
          %v2264 = vpop.permute.xlu0 %2263
          %2265 = vrot.lane.b32.xlu0 %v1313, 24
          %v2266 = vpop.permute.xlu0 %2265
          %2267 = vrot.lane.b32.xlu0 %v1314, 24
          %v2268 = vpop.permute.xlu0 %2267
          %2269 = vrot.lane.b32.xlu0 %v1316, 24
          %v2270 = vpop.permute.xlu0 %2269
          %2271 = vrot.lane.b32.xlu0 %v1317, 24
          %v2272 = vpop.permute.xlu0 %2271
          %2273 = vrot.lane.b32.xlu0 %v1319, 24
          %v2274 = vpop.permute.xlu0 %2273
          %2275 = vrot.lane.b32.xlu0 %v1320, 24
          %v2276 = vpop.permute.xlu0 %2275
          %2277 = vrot.lane.b32.xlu0 %v1322, 24
          %v2278 = vpop.permute.xlu0 %2277
          %2279 = vrot.lane.b32.xlu0 %v1323, 24
          %v2280 = vpop.permute.xlu0 %2279
          %2281 = vrot.lane.b32.xlu0 %v1325, 24
          %v2282 = vpop.permute.xlu0 %2281
          %2283 = vrot.lane.b32.xlu0 %v1326, 24
          %v2284 = vpop.permute.xlu0 %2283
          %2285 = vrot.lane.b32.xlu0 %v1328, 24
          %v2286 = vpop.permute.xlu0 %2285
          %2287 = vrot.lane.b32.xlu0 %v1329, 24
          %v2288 = vpop.permute.xlu0 %2287
          %2289 = vrot.lane.b32.xlu0 %v1331, 24
          %v2290 = vpop.permute.xlu0 %2289
          %2291 = vrot.lane.b32.xlu0 %v1332, 24
          %v2292 = vpop.permute.xlu0 %2291
          %2293 = vrot.lane.b32.xlu0 %v1334, 24
          %v2294 = vpop.permute.xlu0 %2293
          %2295 = vrot.lane.b32.xlu0 %v1335, 24
          %v2296 = vpop.permute.xlu0 %2295
          %2297 = vrot.lane.b32.xlu0 %v1337, 24
          %v2298 = vpop.permute.xlu0 %2297
          %2299 = vrot.lane.b32.xlu0 %v1338, 24
          %v2300 = vpop.permute.xlu0 %2299
          %2301 = vrot.lane.b32.xlu0 %v1340, 24
          %v2302 = vpop.permute.xlu0 %2301
          %2303 = vrot.lane.b32.xlu0 %v1341, 24
          %v2304 = vpop.permute.xlu0 %2303
          %2305 = vrot.lane.b32.xlu0 %v1343, 24
          %v2306 = vpop.permute.xlu0 %2305
          %2307 = vrot.lane.b32.xlu0 %v1344, 24
          %v2308 = vpop.permute.xlu0 %2307
          %2309 = vrot.lane.b32.xlu0 %v1346, 24
          %v2310 = vpop.permute.xlu0 %2309
          %2311 = vrot.lane.b32.xlu0 %v1347, 24
          %v2312 = vpop.permute.xlu0 %2311
          %2313 = vrot.lane.b32.xlu0 %v1349, 24
          %v2314 = vpop.permute.xlu0 %2313
          %2315 = vrot.lane.b32.xlu0 %v1350, 24
          %v2316 = vpop.permute.xlu0 %2315
          %2317 = vrot.lane.b32.xlu0 %v1352, 24
          %v2318 = vpop.permute.xlu0 %2317
          %2319 = vrot.lane.b32.xlu0 %v1353, 24
          %v2320 = vpop.permute.xlu0 %2319
          %2321 = vrot.lane.b32.xlu0 %v1355, 24
          %v2322 = vpop.permute.xlu0 %2321
          %2323 = vrot.lane.b32.xlu0 %v1356, 24
          %v2324 = vpop.permute.xlu0 %2323
          %vm2357 = vcmask 228544
          %2358 = vst.msk [vmem:[#allocation2] sm:$0xff] %vm2357, %v2262
          %2359 = vst.msk [vmem:[#allocation2 + $0x8] sm:$0xff] %vm2357, %v2264
          %2360 = vst.msk [vmem:[#allocation2 + $0x10] sm:$0xff] %vm2357, %v2266
          %2361 = vst.msk [vmem:[#allocation2 + $0x18] sm:$0xff] %vm2357, %v2268
          %2362 = vst.msk [vmem:[#allocation2 + $0x20] sm:$0xff] %vm2357, %v2270
          %2363 = vst.msk [vmem:[#allocation2 + $0x28] sm:$0xff] %vm2357, %v2272
          %2364 = vst.msk [vmem:[#allocation2 + $0x30] sm:$0xff] %vm2357, %v2274
          %2365 = vst.msk [vmem:[#allocation2 + $0x38] sm:$0xff] %vm2357, %v2276
          %2366 = vst.msk [vmem:[#allocation2 + $0x40] sm:$0xff] %vm2357, %v2278
          %2367 = vst.msk [vmem:[#allocation2 + $0x48] sm:$0xff] %vm2357, %v2280
          %2368 = vst.msk [vmem:[#allocation2 + $0x50] sm:$0xff] %vm2357, %v2282
          %2369 = vst.msk [vmem:[#allocation2 + $0x58] sm:$0xff] %vm2357, %v2284
          %2370 = vst.msk [vmem:[#allocation2 + $0x60] sm:$0xff] %vm2357, %v2286
          %2371 = vst.msk [vmem:[#allocation2 + $0x68] sm:$0xff] %vm2357, %v2288
          %2372 = vst.msk [vmem:[#allocation2 + $0x70] sm:$0xff] %vm2357, %v2290
          %2373 = vst.msk [vmem:[#allocation2 + $0x78] sm:$0xff] %vm2357, %v2292
          %2374 = vst.msk [vmem:[#allocation2 + $0x80] sm:$0xff] %vm2357, %v2294
          %2375 = vst.msk [vmem:[#allocation2 + $0x88] sm:$0xff] %vm2357, %v2296
          %2376 = vst.msk [vmem:[#allocation2 + $0x90] sm:$0xff] %vm2357, %v2298
          %2377 = vst.msk [vmem:[#allocation2 + $0x98] sm:$0xff] %vm2357, %v2300
          %2378 = vst.msk [vmem:[#allocation2 + $0xa0] sm:$0xff] %vm2357, %v2302
          %2379 = vst.msk [vmem:[#allocation2 + $0xa8] sm:$0xff] %vm2357, %v2304
          %2380 = vst.msk [vmem:[#allocation2 + $0xb0] sm:$0xff] %vm2357, %v2306
          %2381 = vst.msk [vmem:[#allocation2 + $0xb8] sm:$0xff] %vm2357, %v2308
          %2382 = vst.msk [vmem:[#allocation2 + $0xc0] sm:$0xff] %vm2357, %v2310
          %2383 = vst.msk [vmem:[#allocation2 + $0xc8] sm:$0xff] %vm2357, %v2312
          %2384 = vst.msk [vmem:[#allocation2 + $0xd0] sm:$0xff] %vm2357, %v2314
          %2385 = vst.msk [vmem:[#allocation2 + $0xd8] sm:$0xff] %vm2357, %v2316
          %2386 = vst.msk [vmem:[#allocation2 + $0xe0] sm:$0xff] %vm2357, %v2318
          %2387 = vst.msk [vmem:[#allocation2 + $0xe8] sm:$0xff] %vm2357, %v2320
          %2388 = vst.msk [vmem:[#allocation2 + $0xf0] sm:$0xff] %vm2357, %v2322
          %2389 = vst.msk [vmem:[#allocation2 + $0xf8] sm:$0xff] %vm2357, %v2324
          %v2391 = vrot.slane %v1355, 1
          %v2392 = vrot.slane %v1356, 1
          %v2393 = vsel %vm1439, %v2391, %v2392
          %v2394 = vrot.slane %v1357, 1
          %v2395 = vsel %vm1439, %v2392, %v2394
          %2396 = vrot.lane.b32.xlu0 %v1452, 28
          %v2397 = vpop.permute.xlu0 %2396
          %2398 = vrot.lane.b32.xlu0 %v1454, 28
          %v2399 = vpop.permute.xlu0 %2398
          %2400 = vrot.lane.b32.xlu0 %v1457, 28
          %v2401 = vpop.permute.xlu0 %2400
          %2402 = vrot.lane.b32.xlu0 %v1459, 28
          %v2403 = vpop.permute.xlu0 %2402
          %2404 = vrot.lane.b32.xlu0 %v1462, 28
          %v2405 = vpop.permute.xlu0 %2404
          %2406 = vrot.lane.b32.xlu0 %v1464, 28
          %v2407 = vpop.permute.xlu0 %2406
          %2408 = vrot.lane.b32.xlu0 %v1467, 28
          %v2409 = vpop.permute.xlu0 %2408
          %2410 = vrot.lane.b32.xlu0 %v1469, 28
          %v2411 = vpop.permute.xlu0 %2410
          %2412 = vrot.lane.b32.xlu0 %v1472, 28
          %v2413 = vpop.permute.xlu0 %2412
          %2414 = vrot.lane.b32.xlu0 %v1474, 28
          %v2415 = vpop.permute.xlu0 %2414
          %2416 = vrot.lane.b32.xlu0 %v1477, 28
          %v2417 = vpop.permute.xlu0 %2416
          %2418 = vrot.lane.b32.xlu0 %v1479, 28
          %v2419 = vpop.permute.xlu0 %2418
          %2420 = vrot.lane.b32.xlu0 %v1482, 28
          %v2421 = vpop.permute.xlu0 %2420
          %2422 = vrot.lane.b32.xlu0 %v1484, 28
          %v2423 = vpop.permute.xlu0 %2422
          %2424 = vrot.lane.b32.xlu0 %v1487, 28
          %v2425 = vpop.permute.xlu0 %2424
          %2426 = vrot.lane.b32.xlu0 %v1489, 28
          %v2427 = vpop.permute.xlu0 %2426
          %2428 = vrot.lane.b32.xlu0 %v1492, 28
          %v2429 = vpop.permute.xlu0 %2428
          %2430 = vrot.lane.b32.xlu0 %v1494, 28
          %v2431 = vpop.permute.xlu0 %2430
          %2432 = vrot.lane.b32.xlu0 %v1497, 28
          %v2433 = vpop.permute.xlu0 %2432
          %2434 = vrot.lane.b32.xlu0 %v1499, 28
          %v2435 = vpop.permute.xlu0 %2434
          %2436 = vrot.lane.b32.xlu0 %v1502, 28
          %v2437 = vpop.permute.xlu0 %2436
          %2438 = vrot.lane.b32.xlu0 %v1504, 28
          %v2439 = vpop.permute.xlu0 %2438
          %2440 = vrot.lane.b32.xlu0 %v1507, 28
          %v2441 = vpop.permute.xlu0 %2440
          %2442 = vrot.lane.b32.xlu0 %v1509, 28
          %v2443 = vpop.permute.xlu0 %2442
          %2444 = vrot.lane.b32.xlu0 %v1512, 28
          %v2445 = vpop.permute.xlu0 %2444
          %2446 = vrot.lane.b32.xlu0 %v1514, 28
          %v2447 = vpop.permute.xlu0 %2446
          %2448 = vrot.lane.b32.xlu0 %v1517, 28
          %v2449 = vpop.permute.xlu0 %2448
          %2450 = vrot.lane.b32.xlu0 %v1519, 28
          %v2451 = vpop.permute.xlu0 %2450
          %2452 = vrot.lane.b32.xlu0 %v1993, 28
          %v2453 = vpop.permute.xlu0 %2452
          %2454 = vrot.lane.b32.xlu0 %v1995, 28
          %v2455 = vpop.permute.xlu0 %2454
          %2456 = vrot.lane.b32.xlu0 %v2393, 28
          %v2457 = vpop.permute.xlu0 %2456
          %2458 = vrot.lane.b32.xlu0 %v2395, 28
          %v2459 = vpop.permute.xlu0 %2458
          %vm2492 = vcmask 261344
          %2493 = vst.msk [vmem:[#allocation2] sm:$0xff] %vm2492, %v2397
          %2494 = vst.msk [vmem:[#allocation2 + $0x8] sm:$0xff] %vm2492, %v2399
          %2495 = vst.msk [vmem:[#allocation2 + $0x10] sm:$0xff] %vm2492, %v2401
          %2496 = vst.msk [vmem:[#allocation2 + $0x18] sm:$0xff] %vm2492, %v2403
          %2497 = vst.msk [vmem:[#allocation2 + $0x20] sm:$0xff] %vm2492, %v2405
          %2498 = vst.msk [vmem:[#allocation2 + $0x28] sm:$0xff] %vm2492, %v2407
          %2499 = vst.msk [vmem:[#allocation2 + $0x30] sm:$0xff] %vm2492, %v2409
          %2500 = vst.msk [vmem:[#allocation2 + $0x38] sm:$0xff] %vm2492, %v2411
          %2501 = vst.msk [vmem:[#allocation2 + $0x40] sm:$0xff] %vm2492, %v2413
          %2502 = vst.msk [vmem:[#allocation2 + $0x48] sm:$0xff] %vm2492, %v2415
          %2503 = vst.msk [vmem:[#allocation2 + $0x50] sm:$0xff] %vm2492, %v2417
          %2504 = vst.msk [vmem:[#allocation2 + $0x58] sm:$0xff] %vm2492, %v2419
          %2505 = vst.msk [vmem:[#allocation2 + $0x60] sm:$0xff] %vm2492, %v2421
          %2506 = vst.msk [vmem:[#allocation2 + $0x68] sm:$0xff] %vm2492, %v2423
          %2507 = vst.msk [vmem:[#allocation2 + $0x70] sm:$0xff] %vm2492, %v2425
          %2508 = vst.msk [vmem:[#allocation2 + $0x78] sm:$0xff] %vm2492, %v2427
          %2509 = vst.msk [vmem:[#allocation2 + $0x80] sm:$0xff] %vm2492, %v2429
          %2510 = vst.msk [vmem:[#allocation2 + $0x88] sm:$0xff] %vm2492, %v2431
          %2511 = vst.msk [vmem:[#allocation2 + $0x90] sm:$0xff] %vm2492, %v2433
          %2512 = vst.msk [vmem:[#allocation2 + $0x98] sm:$0xff] %vm2492, %v2435
          %2513 = vst.msk [vmem:[#allocation2 + $0xa0] sm:$0xff] %vm2492, %v2437
          %2514 = vst.msk [vmem:[#allocation2 + $0xa8] sm:$0xff] %vm2492, %v2439
          %2515 = vst.msk [vmem:[#allocation2 + $0xb0] sm:$0xff] %vm2492, %v2441
          %2516 = vst.msk [vmem:[#allocation2 + $0xb8] sm:$0xff] %vm2492, %v2443
          %2517 = vst.msk [vmem:[#allocation2 + $0xc0] sm:$0xff] %vm2492, %v2445
          %2518 = vst.msk [vmem:[#allocation2 + $0xc8] sm:$0xff] %vm2492, %v2447
          %2519 = vst.msk [vmem:[#allocation2 + $0xd0] sm:$0xff] %vm2492, %v2449
          %2520 = vst.msk [vmem:[#allocation2 + $0xd8] sm:$0xff] %vm2492, %v2451
          %2521 = vst.msk [vmem:[#allocation2 + $0xe0] sm:$0xff] %vm2492, %v2453
          %2522 = vst.msk [vmem:[#allocation2 + $0xe8] sm:$0xff] %vm2492, %v2455
          %2523 = vst.msk [vmem:[#allocation2 + $0xf0] sm:$0xff] %vm2492, %v2457
          %2524 = vst.msk [vmem:[#allocation2 + $0xf8] sm:$0xff] %vm2492, %v2459
          %v2525 = vrot.slane %v1355, 2
          %v2526 = vrot.slane %v1356, 2
          %v2527 = vsel %vm1649, %v2525, %v2526
          %v2528 = vrot.slane %v1357, 2
          %v2529 = vsel %vm1649, %v2526, %v2528
          %2530 = vrot.lane.b32.xlu0 %v1662, 32
          %v2531 = vpop.permute.xlu0 %2530
          %2532 = vrot.lane.b32.xlu0 %v1664, 32
          %v2533 = vpop.permute.xlu0 %2532
          %2534 = vrot.lane.b32.xlu0 %v1667, 32
          %v2535 = vpop.permute.xlu0 %2534
          %2536 = vrot.lane.b32.xlu0 %v1669, 32
          %v2537 = vpop.permute.xlu0 %2536
          %2538 = vrot.lane.b32.xlu0 %v1672, 32
          %v2539 = vpop.permute.xlu0 %2538
          %2540 = vrot.lane.b32.xlu0 %v1674, 32
          %v2541 = vpop.permute.xlu0 %2540
          %2542 = vrot.lane.b32.xlu0 %v1677, 32
          %v2543 = vpop.permute.xlu0 %2542
          %2544 = vrot.lane.b32.xlu0 %v1679, 32
          %v2545 = vpop.permute.xlu0 %2544
          %2546 = vrot.lane.b32.xlu0 %v1682, 32
          %v2547 = vpop.permute.xlu0 %2546
          %2548 = vrot.lane.b32.xlu0 %v1684, 32
          %v2549 = vpop.permute.xlu0 %2548
          %2550 = vrot.lane.b32.xlu0 %v1687, 32
          %v2551 = vpop.permute.xlu0 %2550
          %2552 = vrot.lane.b32.xlu0 %v1689, 32
          %v2553 = vpop.permute.xlu0 %2552
          %2554 = vrot.lane.b32.xlu0 %v1692, 32
          %v2555 = vpop.permute.xlu0 %2554
          %2556 = vrot.lane.b32.xlu0 %v1694, 32
          %v2557 = vpop.permute.xlu0 %2556
          %2558 = vrot.lane.b32.xlu0 %v1697, 32
          %v2559 = vpop.permute.xlu0 %2558
          %2560 = vrot.lane.b32.xlu0 %v1699, 32
          %v2561 = vpop.permute.xlu0 %2560
          %2562 = vrot.lane.b32.xlu0 %v1702, 32
          %v2563 = vpop.permute.xlu0 %2562
          %2564 = vrot.lane.b32.xlu0 %v1704, 32
          %v2565 = vpop.permute.xlu0 %2564
          %2566 = vrot.lane.b32.xlu0 %v1707, 32
          %v2567 = vpop.permute.xlu0 %2566
          %2568 = vrot.lane.b32.xlu0 %v1709, 32
          %v2569 = vpop.permute.xlu0 %2568
          %2570 = vrot.lane.b32.xlu0 %v1712, 32
          %v2571 = vpop.permute.xlu0 %2570
          %2572 = vrot.lane.b32.xlu0 %v1714, 32
          %v2573 = vpop.permute.xlu0 %2572
          %2574 = vrot.lane.b32.xlu0 %v1717, 32
          %v2575 = vpop.permute.xlu0 %2574
          %2576 = vrot.lane.b32.xlu0 %v1719, 32
          %v2577 = vpop.permute.xlu0 %2576
          %2578 = vrot.lane.b32.xlu0 %v1722, 32
          %v2579 = vpop.permute.xlu0 %2578
          %2580 = vrot.lane.b32.xlu0 %v1724, 32
          %v2581 = vpop.permute.xlu0 %2580
          %2582 = vrot.lane.b32.xlu0 %v1727, 32
          %v2583 = vpop.permute.xlu0 %2582
          %2584 = vrot.lane.b32.xlu0 %v1729, 32
          %v2585 = vpop.permute.xlu0 %2584
          %2586 = vrot.lane.b32.xlu0 %v2127, 32
          %v2587 = vpop.permute.xlu0 %2586
          %2588 = vrot.lane.b32.xlu0 %v2129, 32
          %v2589 = vpop.permute.xlu0 %2588
          %2590 = vrot.lane.b32.xlu0 %v2527, 32
          %v2591 = vpop.permute.xlu0 %2590
          %2592 = vrot.lane.b32.xlu0 %v2529, 32
          %v2593 = vpop.permute.xlu0 %2592
          %vm2626 = vcmask 294144
          %2627 = vst.msk [vmem:[#allocation2] sm:$0xff] %vm2626, %v2531
          %2628 = vst.msk [vmem:[#allocation2 + $0x8] sm:$0xff] %vm2626, %v2533
          %2629 = vst.msk [vmem:[#allocation2 + $0x10] sm:$0xff] %vm2626, %v2535
          %2630 = vst.msk [vmem:[#allocation2 + $0x18] sm:$0xff] %vm2626, %v2537
          %2631 = vst.msk [vmem:[#allocation2 + $0x20] sm:$0xff] %vm2626, %v2539
          %2632 = vst.msk [vmem:[#allocation2 + $0x28] sm:$0xff] %vm2626, %v2541
          %2633 = vst.msk [vmem:[#allocation2 + $0x30] sm:$0xff] %vm2626, %v2543
          %2634 = vst.msk [vmem:[#allocation2 + $0x38] sm:$0xff] %vm2626, %v2545
          %2635 = vst.msk [vmem:[#allocation2 + $0x40] sm:$0xff] %vm2626, %v2547
          %2636 = vst.msk [vmem:[#allocation2 + $0x48] sm:$0xff] %vm2626, %v2549
          %2637 = vst.msk [vmem:[#allocation2 + $0x50] sm:$0xff] %vm2626, %v2551
          %2638 = vst.msk [vmem:[#allocation2 + $0x58] sm:$0xff] %vm2626, %v2553
          %2639 = vst.msk [vmem:[#allocation2 + $0x60] sm:$0xff] %vm2626, %v2555
          %2640 = vst.msk [vmem:[#allocation2 + $0x68] sm:$0xff] %vm2626, %v2557
          %2641 = vst.msk [vmem:[#allocation2 + $0x70] sm:$0xff] %vm2626, %v2559
          %2642 = vst.msk [vmem:[#allocation2 + $0x78] sm:$0xff] %vm2626, %v2561
          %2643 = vst.msk [vmem:[#allocation2 + $0x80] sm:$0xff] %vm2626, %v2563
          %2644 = vst.msk [vmem:[#allocation2 + $0x88] sm:$0xff] %vm2626, %v2565
          %2645 = vst.msk [vmem:[#allocation2 + $0x90] sm:$0xff] %vm2626, %v2567
          %2646 = vst.msk [vmem:[#allocation2 + $0x98] sm:$0xff] %vm2626, %v2569
          %2647 = vst.msk [vmem:[#allocation2 + $0xa0] sm:$0xff] %vm2626, %v2571
          %2648 = vst.msk [vmem:[#allocation2 + $0xa8] sm:$0xff] %vm2626, %v2573
          %2649 = vst.msk [vmem:[#allocation2 + $0xb0] sm:$0xff] %vm2626, %v2575
          %2650 = vst.msk [vmem:[#allocation2 + $0xb8] sm:$0xff] %vm2626, %v2577
          %2651 = vst.msk [vmem:[#allocation2 + $0xc0] sm:$0xff] %vm2626, %v2579
          %2652 = vst.msk [vmem:[#allocation2 + $0xc8] sm:$0xff] %vm2626, %v2581
          %2653 = vst.msk [vmem:[#allocation2 + $0xd0] sm:$0xff] %vm2626, %v2583
          %2654 = vst.msk [vmem:[#allocation2 + $0xd8] sm:$0xff] %vm2626, %v2585
          %2655 = vst.msk [vmem:[#allocation2 + $0xe0] sm:$0xff] %vm2626, %v2587
          %2656 = vst.msk [vmem:[#allocation2 + $0xe8] sm:$0xff] %vm2626, %v2589
          %2657 = vst.msk [vmem:[#allocation2 + $0xf0] sm:$0xff] %vm2626, %v2591
          %2658 = vst.msk [vmem:[#allocation2 + $0xf8] sm:$0xff] %vm2626, %v2593
        $region40: #{tpu_custom_call.1} parent=35 // pred_fallthru
          _
        %v2659 = vld [vmem:[#allocation2] sm:$0xff]
        %v2660 = vld [vmem:[#allocation2 + $0x8] sm:$0xff]
        %v2661 = vld [vmem:[#allocation2 + $0x10] sm:$0xff]
        %v2662 = vld [vmem:[#allocation2 + $0x18] sm:$0xff]
        %v2663 = vld [vmem:[#allocation2 + $0x20] sm:$0xff]
        %v2664 = vld [vmem:[#allocation2 + $0x28] sm:$0xff]
        %v2665 = vld [vmem:[#allocation2 + $0x30] sm:$0xff]
        %v2666 = vld [vmem:[#allocation2 + $0x38] sm:$0xff]
        %v2667 = vld [vmem:[#allocation2 + $0x40] sm:$0xff]
        %v2668 = vld [vmem:[#allocation2 + $0x48] sm:$0xff]
        %v2669 = vld [vmem:[#allocation2 + $0x50] sm:$0xff]
        %v2670 = vld [vmem:[#allocation2 + $0x58] sm:$0xff]
        %v2671 = vld [vmem:[#allocation2 + $0x60] sm:$0xff]
        %v2672 = vld [vmem:[#allocation2 + $0x68] sm:$0xff]
        %v2673 = vld [vmem:[#allocation2 + $0x70] sm:$0xff]
        %v2674 = vld [vmem:[#allocation2 + $0x78] sm:$0xff]
        %v2675 = vld [vmem:[#allocation2 + $0x80] sm:$0xff]
        %v2676 = vld [vmem:[#allocation2 + $0x88] sm:$0xff]
        %v2677 = vld [vmem:[#allocation2 + $0x90] sm:$0xff]
        %v2678 = vld [vmem:[#allocation2 + $0x98] sm:$0xff]
        %v2679 = vld [vmem:[#allocation2 + $0xa0] sm:$0xff]
        %v2680 = vld [vmem:[#allocation2 + $0xa8] sm:$0xff]
        %v2681 = vld [vmem:[#allocation2 + $0xb0] sm:$0xff]
        %v2682 = vld [vmem:[#allocation2 + $0xb8] sm:$0xff]
        %v2683 = vld [vmem:[#allocation2 + $0xc0] sm:$0xff]
        %v2684 = vld [vmem:[#allocation2 + $0xc8] sm:$0xff]
        %v2685 = vld [vmem:[#allocation2 + $0xd0] sm:$0xff]
        %v2686 = vld [vmem:[#allocation2 + $0xd8] sm:$0xff]
        %v2687 = vld [vmem:[#allocation2 + $0xe0] sm:$0xff]
        %v2688 = vld [vmem:[#allocation2 + $0xe8] sm:$0xff]
        %v2689 = vld [vmem:[#allocation2 + $0xf0] sm:$0xff]
        %v2690 = vld [vmem:[#allocation2 + $0xf8] sm:$0xff]
        %v2691 = vld [vmem:[%s311] sm:$0xff]
        %v2692 = vld [vmem:[%s311 + $0x8] sm:$0xff]
        %v2693 = vld [vmem:[%s311 + $0x10] sm:$0xff]
        %v2694 = vld [vmem:[%s311 + $0x18] sm:$0xff]
        %v2695 = vld [vmem:[%s311 + $0x20] sm:$0xf]
        %v2696 = vld [vmem:[%s314] sm:$0x1]
        %v2698 = vlaneseq
        %v2699 = vshrl.u32 %v2698, 7
        %v2700 = vsub.s32 0, %v2699
        %v2701 = vrot.slane %v2696, %v2700
        %vm2703 = vcmask 293888
        %v2705 = vsel %vm2703, %v2659, 0
        %v2708 = vsel %vm2703, %v2660, 0
        %v2711 = vsel %vm2703, %v2661, 0
        %v2714 = vsel %vm2703, %v2662, 0
        %v2717 = vsel %vm2703, %v2663, 0
        %v2720 = vsel %vm2703, %v2664, 0
        %v2723 = vsel %vm2703, %v2665, 0
        %v2726 = vsel %vm2703, %v2666, 0
        %v2729 = vsel %vm2703, %v2667, 0
        %v2732 = vsel %vm2703, %v2668, 0
        %v2735 = vsel %vm2703, %v2669, 0
        %v2738 = vsel %vm2703, %v2670, 0
        %v2741 = vsel %vm2703, %v2671, 0
        %v2744 = vsel %vm2703, %v2672, 0
        %v2747 = vsel %vm2703, %v2673, 0
        %v2750 = vsel %vm2703, %v2674, 0
        %v2753 = vsel %vm2703, %v2675, 0
        %v2756 = vsel %vm2703, %v2676, 0
        %v2759 = vsel %vm2703, %v2677, 0
        %v2762 = vsel %vm2703, %v2678, 0
        %v2765 = vsel %vm2703, %v2679, 0
        %v2768 = vsel %vm2703, %v2680, 0
        %v2771 = vsel %vm2703, %v2681, 0
        %v2774 = vsel %vm2703, %v2682, 0
        %v2777 = vsel %vm2703, %v2683, 0
        %v2780 = vsel %vm2703, %v2684, 0
        %v2783 = vsel %vm2703, %v2685, 0
        %v2786 = vsel %vm2703, %v2686, 0
        %v2789 = vsel %vm2703, %v2687, 0
        %v2792 = vsel %vm2703, %v2688, 0
        %v2795 = vsel %vm2703, %v2689, 0
        %v2798 = vsel %vm2703, %v2690, 0
        %vm2800 = vcmask 1043456
        %v2802 = vsel %vm2800, %v2695, 0
        %2804 = vmatprep.subr.mxu0 0.0
        %2805 = vmatpush1.msra.mxu0 0.0
        %2806 = vmatprep.subr.mxu0 0.0
        %2807 = vmatpush1.msra.mxu0 0.0
        %2808 = vmatprep.subr.mxu0 0.0
        %2809 = vmatpush1.msra.mxu0 0.0
        %2810 = vmatprep.subr.mxu0 0.0
        %2811 = vmatpush1.msra.mxu0 0.0
        %2812 = vmatprep.subr.mxu0 0.0
        %2813 = vmatpush1.msra.mxu0 0.0
        %2814 = vmatprep.subr.mxu0 0.0
        %2815 = vmatpush1.msra.mxu0 0.0
        %2816 = vmatprep.subr.mxu0 0.0
        %2817 = vmatpush1.msra.mxu0 0.0
        %2818 = vmatprep.subr.mxu0 0.0
        %2819 = vmatpush1.msra.mxu0 0.0
        %2820 = vmatprep.subr.mxu0 0.0
        %2821 = vmatpush1.msra.mxu0 0.0
        %2822 = vmatprep.subr.mxu0 0.0
        %2823 = vmatpush1.msra.mxu0 0.0
        %2824 = vmatprep.subr.mxu0 0.0
        %2825 = vmatpush1.msra.mxu0 0.0
        %2826 = vmatprep.subr.mxu0 0.0
        %2827 = vmatpush1.msra.mxu0 %v2802
        %2828 = vmatprep.subr.mxu0 0.0
        %2829 = vmatpush1.msra.mxu0 %v2694
        %2830 = vmatprep.subr.mxu0 0.0
        %2831 = vmatpush1.msra.mxu0 %v2693
        %2832 = vmatprep.subr.mxu0 0.0
        %2833 = vmatpush1.msra.mxu0 %v2692
        %2834 = vmatprep.subr.mxu0 0.0
        %2835 = vmatpush1.msra.mxu0 %v2691
        %2836 = vmatprep.subr.mxu0 0.0
        %2837 = vmatpush2.msra.mxu0 0.0
        %2838 = vmatprep.subr.mxu0 0.0
        %2839 = vmatpush2.msra.mxu0 0.0
        %2840 = vmatprep.subr.mxu0 0.0
        %2841 = vmatpush2.msra.mxu0 0.0
        %2842 = vmatprep.subr.mxu0 0.0
        %2843 = vmatpush2.msra.mxu0 0.0
        %2844 = vmatprep.subr.mxu0 0.0
        %2845 = vmatpush2.msra.mxu0 0.0
        %2846 = vmatprep.subr.mxu0 0.0
        %2847 = vmatpush2.msra.mxu0 0.0
        %2848 = vmatprep.subr.mxu0 0.0
        %2849 = vmatpush2.msra.mxu0 0.0
        %2850 = vmatprep.subr.mxu0 0.0
        %2851 = vmatpush2.msra.mxu0 0.0
        %2852 = vmatprep.subr.mxu0 0.0
        %2853 = vmatpush2.msra.mxu0 0.0
        %2854 = vmatprep.subr.mxu0 0.0
        %2855 = vmatpush2.msra.mxu0 0.0
        %2856 = vmatprep.subr.mxu0 0.0
        %2857 = vmatpush2.msra.mxu0 0.0
        %2858 = vmatprep.subr.mxu0 0.0
        %2859 = vmatpush2.msra.mxu0 0.0
        %2860 = vmatprep.subr.mxu0 0.0
        %2861 = vmatpush2.msra.mxu0 0.0
        %2862 = vmatprep.subr.mxu0 0.0
        %2863 = vmatpush2.msra.mxu0 0.0
        %2864 = vmatprep.subr.mxu0 0.0
        %2865 = vmatpush2.msra.mxu0 0.0
        %2866 = vmatprep.subr.mxu0 0.0
        %2867 = vmatpush2.msra.mxu0 0.0
        %2868 = vmatprep.mubr.f32.mxu0 0.0
        %2869 = vmatmul.mubr.f32.gmra.mxu0 %v2705
        %v2870 = vpop.f32.mrf.mxu0
        %v2871 = vadd.f32 %v2701, %v2870
        %v2872 = vpop.f32.mrf.mxu0
        %2873 = vmatprep.mubr.f32.mxu0 0.0
        %2874 = vmatmul.mubr.f32.gmra.mxu0 %v2708
        %v2875 = vpop.f32.mrf.mxu0
        %v2876 = vadd.f32 %v2701, %v2875
        %v2877 = vpop.f32.mrf.mxu0
        %2878 = vmatprep.mubr.f32.mxu0 0.0
        %2879 = vmatmul.mubr.f32.gmra.mxu0 %v2711
        %v2880 = vpop.f32.mrf.mxu0
        %v2881 = vadd.f32 %v2701, %v2880
        %v2882 = vpop.f32.mrf.mxu0
        %2883 = vmatprep.mubr.f32.mxu0 0.0
        %2884 = vmatmul.mubr.f32.gmra.mxu0 %v2714
        %v2885 = vpop.f32.mrf.mxu0
        %v2886 = vadd.f32 %v2701, %v2885
        %v2887 = vpop.f32.mrf.mxu0
        %2888 = vmatprep.mubr.f32.mxu0 0.0
        %2889 = vmatmul.mubr.f32.gmra.mxu0 %v2717
        %v2890 = vpop.f32.mrf.mxu0
        %v2891 = vadd.f32 %v2701, %v2890
        %v2892 = vpop.f32.mrf.mxu0
        %2893 = vmatprep.mubr.f32.mxu0 0.0
        %2894 = vmatmul.mubr.f32.gmra.mxu0 %v2720
        %v2895 = vpop.f32.mrf.mxu0
        %v2896 = vadd.f32 %v2701, %v2895
        %v2897 = vpop.f32.mrf.mxu0
        %2898 = vmatprep.mubr.f32.mxu0 0.0
        %2899 = vmatmul.mubr.f32.gmra.mxu0 %v2723
        %v2900 = vpop.f32.mrf.mxu0
        %v2901 = vadd.f32 %v2701, %v2900
        %v2902 = vpop.f32.mrf.mxu0
        %2903 = vmatprep.mubr.f32.mxu0 0.0
        %2904 = vmatmul.mubr.f32.gmra.mxu0 %v2726
        %v2905 = vpop.f32.mrf.mxu0
        %v2906 = vadd.f32 %v2701, %v2905
        %v2907 = vpop.f32.mrf.mxu0
        %2908 = vmatprep.mubr.f32.mxu0 0.0
        %2909 = vmatmul.mubr.f32.gmra.mxu0 %v2729
        %v2910 = vpop.f32.mrf.mxu0
        %v2911 = vadd.f32 %v2701, %v2910
        %v2912 = vpop.f32.mrf.mxu0
        %2913 = vmatprep.mubr.f32.mxu0 0.0
        %2914 = vmatmul.mubr.f32.gmra.mxu0 %v2732
        %v2915 = vpop.f32.mrf.mxu0
        %v2916 = vadd.f32 %v2701, %v2915
        %v2917 = vpop.f32.mrf.mxu0
        %2918 = vmatprep.mubr.f32.mxu0 0.0
        %2919 = vmatmul.mubr.f32.gmra.mxu0 %v2735
        %v2920 = vpop.f32.mrf.mxu0
        %v2921 = vadd.f32 %v2701, %v2920
        %v2922 = vpop.f32.mrf.mxu0
        %2923 = vmatprep.mubr.f32.mxu0 0.0
        %2924 = vmatmul.mubr.f32.gmra.mxu0 %v2738
        %v2925 = vpop.f32.mrf.mxu0
        %v2926 = vadd.f32 %v2701, %v2925
        %v2927 = vpop.f32.mrf.mxu0
        %2928 = vmatprep.mubr.f32.mxu0 0.0
        %2929 = vmatmul.mubr.f32.gmra.mxu0 %v2741
        %v2930 = vpop.f32.mrf.mxu0
        %v2931 = vadd.f32 %v2701, %v2930
        %v2932 = vpop.f32.mrf.mxu0
        %2933 = vmatprep.mubr.f32.mxu0 0.0
        %2934 = vmatmul.mubr.f32.gmra.mxu0 %v2744
        %v2935 = vpop.f32.mrf.mxu0
        %v2936 = vadd.f32 %v2701, %v2935
        %v2937 = vpop.f32.mrf.mxu0
        %2938 = vmatprep.mubr.f32.mxu0 0.0
        %2939 = vmatmul.mubr.f32.gmra.mxu0 %v2747
        %v2940 = vpop.f32.mrf.mxu0
        %v2941 = vadd.f32 %v2701, %v2940
        %v2942 = vpop.f32.mrf.mxu0
        %2943 = vmatprep.mubr.f32.mxu0 0.0
        %2944 = vmatmul.mubr.f32.gmra.mxu0 %v2750
        %v2945 = vpop.f32.mrf.mxu0
        %v2946 = vadd.f32 %v2701, %v2945
        %v2947 = vpop.f32.mrf.mxu0
        %2948 = vmatprep.mubr.f32.mxu0 0.0
        %2949 = vmatmul.mubr.f32.gmra.mxu0 %v2753
        %v2950 = vpop.f32.mrf.mxu0
        %v2951 = vadd.f32 %v2701, %v2950
        %v2952 = vpop.f32.mrf.mxu0
        %2953 = vmatprep.mubr.f32.mxu0 0.0
        %2954 = vmatmul.mubr.f32.gmra.mxu0 %v2756
        %v2955 = vpop.f32.mrf.mxu0
        %v2956 = vadd.f32 %v2701, %v2955
        %v2957 = vpop.f32.mrf.mxu0
        %2958 = vmatprep.mubr.f32.mxu0 0.0
        %2959 = vmatmul.mubr.f32.gmra.mxu0 %v2759
        %v2960 = vpop.f32.mrf.mxu0
        %v2961 = vadd.f32 %v2701, %v2960
        %v2962 = vpop.f32.mrf.mxu0
        %2963 = vmatprep.mubr.f32.mxu0 0.0
        %2964 = vmatmul.mubr.f32.gmra.mxu0 %v2762
        %v2965 = vpop.f32.mrf.mxu0
        %v2966 = vadd.f32 %v2701, %v2965
        %v2967 = vpop.f32.mrf.mxu0
        %2968 = vmatprep.mubr.f32.mxu0 0.0
        %2969 = vmatmul.mubr.f32.gmra.mxu0 %v2765
        %v2970 = vpop.f32.mrf.mxu0
        %v2971 = vadd.f32 %v2701, %v2970
        %v2972 = vpop.f32.mrf.mxu0
        %2973 = vmatprep.mubr.f32.mxu0 0.0
        %2974 = vmatmul.mubr.f32.gmra.mxu0 %v2768
        %v2975 = vpop.f32.mrf.mxu0
        %v2976 = vadd.f32 %v2701, %v2975
        %v2977 = vpop.f32.mrf.mxu0
        %2978 = vmatprep.mubr.f32.mxu0 0.0
        %2979 = vmatmul.mubr.f32.gmra.mxu0 %v2771
        %v2980 = vpop.f32.mrf.mxu0
        %v2981 = vadd.f32 %v2701, %v2980
        %v2982 = vpop.f32.mrf.mxu0
        %2983 = vmatprep.mubr.f32.mxu0 0.0
        %2984 = vmatmul.mubr.f32.gmra.mxu0 %v2774
        %v2985 = vpop.f32.mrf.mxu0
        %v2986 = vadd.f32 %v2701, %v2985
        %v2987 = vpop.f32.mrf.mxu0
        %2988 = vmatprep.mubr.f32.mxu0 0.0
        %2989 = vmatmul.mubr.f32.gmra.mxu0 %v2777
        %v2990 = vpop.f32.mrf.mxu0
        %v2991 = vadd.f32 %v2701, %v2990
        %v2992 = vpop.f32.mrf.mxu0
        %2993 = vmatprep.mubr.f32.mxu0 0.0
        %2994 = vmatmul.mubr.f32.gmra.mxu0 %v2780
        %v2995 = vpop.f32.mrf.mxu0
        %v2996 = vadd.f32 %v2701, %v2995
        %v2997 = vpop.f32.mrf.mxu0
        %2998 = vmatprep.mubr.f32.mxu0 0.0
        %2999 = vmatmul.mubr.f32.gmra.mxu0 %v2783
        %v3000 = vpop.f32.mrf.mxu0
        %v3001 = vadd.f32 %v2701, %v3000
        %v3002 = vpop.f32.mrf.mxu0
        %3003 = vmatprep.mubr.f32.mxu0 0.0
        %3004 = vmatmul.mubr.f32.gmra.mxu0 %v2786
        %v3005 = vpop.f32.mrf.mxu0
        %v3006 = vadd.f32 %v2701, %v3005
        %v3007 = vpop.f32.mrf.mxu0
        %3008 = vmatprep.mubr.f32.mxu0 0.0
        %3009 = vmatmul.mubr.f32.gmra.mxu0 %v2789
        %v3010 = vpop.f32.mrf.mxu0
        %v3011 = vadd.f32 %v2701, %v3010
        %v3012 = vpop.f32.mrf.mxu0
        %3013 = vmatprep.mubr.f32.mxu0 0.0
        %3014 = vmatmul.mubr.f32.gmra.mxu0 %v2792
        %v3015 = vpop.f32.mrf.mxu0
        %v3016 = vadd.f32 %v2701, %v3015
        %v3017 = vpop.f32.mrf.mxu0
        %3018 = vmatprep.mubr.f32.mxu0 0.0
        %3019 = vmatmul.mubr.f32.gmra.mxu0 %v2795
        %v3020 = vpop.f32.mrf.mxu0
        %v3021 = vadd.f32 %v2701, %v3020
        %v3022 = vpop.f32.mrf.mxu0
        %3023 = vmatprep.mubr.f32.mxu0 0.0
        %3024 = vmatmul.mubr.f32.gmra.mxu0 %v2798
        %v3025 = vpop.f32.mrf.mxu0
        %v3026 = vadd.f32 %v2701, %v3025
        %v3027 = vpop.f32.mrf.mxu0
        %3028 = vdwg.mxu0
        %3029 = vst [vmem:[%s285] sm:$0xff] %v2871
        %3030 = vst [vmem:[%s285 + $0x8] sm:$0xff] %v2876
        %3031 = vst [vmem:[%s285 + $0x10] sm:$0xff] %v2881
        %3032 = vst [vmem:[%s285 + $0x18] sm:$0xff] %v2886
        %3033 = vst [vmem:[%s285 + $0x20] sm:$0xff] %v2891
        %3034 = vst [vmem:[%s285 + $0x28] sm:$0xff] %v2896
        %3035 = vst [vmem:[%s285 + $0x30] sm:$0xff] %v2901
        %3036 = vst [vmem:[%s285 + $0x38] sm:$0xff] %v2906
        %3037 = vst [vmem:[%s285 + $0x40] sm:$0xff] %v2911
        %3038 = vst [vmem:[%s285 + $0x48] sm:$0xff] %v2916
        %3039 = vst [vmem:[%s285 + $0x50] sm:$0xff] %v2921
        %3040 = vst [vmem:[%s285 + $0x58] sm:$0xff] %v2926
        %3041 = vst [vmem:[%s285 + $0x60] sm:$0xff] %v2931
        %3042 = vst [vmem:[%s285 + $0x68] sm:$0xff] %v2936
        %3043 = vst [vmem:[%s285 + $0x70] sm:$0xff] %v2941
        %3044 = vst [vmem:[%s285 + $0x78] sm:$0xff] %v2946
        %3045 = vst [vmem:[%s285 + $0x80] sm:$0xff] %v2951
        %3046 = vst [vmem:[%s285 + $0x88] sm:$0xff] %v2956
        %3047 = vst [vmem:[%s285 + $0x90] sm:$0xff] %v2961
        %3048 = vst [vmem:[%s285 + $0x98] sm:$0xff] %v2966
        %3049 = vst [vmem:[%s285 + $0xa0] sm:$0xff] %v2971
        %3050 = vst [vmem:[%s285 + $0xa8] sm:$0xff] %v2976
        %3051 = vst [vmem:[%s285 + $0xb0] sm:$0xff] %v2981
        %3052 = vst [vmem:[%s285 + $0xb8] sm:$0xff] %v2986
        %3053 = vst [vmem:[%s285 + $0xc0] sm:$0xff] %v2991
        %3054 = vst [vmem:[%s285 + $0xc8] sm:$0xff] %v2996
        %3055 = vst [vmem:[%s285 + $0xd0] sm:$0xff] %v3001
        %3056 = vst [vmem:[%s285 + $0xd8] sm:$0xff] %v3006
        %3057 = vst [vmem:[%s285 + $0xe0] sm:$0xff] %v3011
        %3058 = vst [vmem:[%s285 + $0xe8] sm:$0xff] %v3016
        %3059 = vst [vmem:[%s285 + $0xf0] sm:$0xff] %v3021
        %3060 = vst [vmem:[%s285 + $0xf8] sm:$0xff] %v3026
        %s3061 = sand.u32 %s164, 1
        %s3062 = scalar_lea.sflag [#allocation6], %s3061
        %s3063 = sand.u32 %s164, 1
        %s3064 = smul.addr %s3063, 256
        %s3065 = scalar_lea.vmem [#allocation5], %s3064
        // Predicated region
        $region41: #{tpu_custom_call.1} parent=35 // pred_check
          %p3066 = pneg %p174
        $region42: #{tpu_custom_call.1} parent=35 // pred_check_branch
          %3068 = sbr.rel (%p3066) target = $region44
        $region43: #{tpu_custom_call.1} parent=35 // pred_region
          %s3069 = smul.u32 32, %s31
          %s3071 = ssub.s32 4096, 4096
          %3072 = vsyncadd %s3062, %s3071
          %s3073 = sadd.s32 %s32, %s3069
          %s3074 = smul.addr %s30, 32
          %s3075 = sadd.s32 %s3073, %s3074
          %s3076 = smul.addr %s3075, 128
          %s3077 = scalar_lea.hbm %s5, %s3076
          %s3078 = sshll.u32 %s3065, 4
          %s3079 = int_to_ptr.vmem [resolvable:$true] %s3078
          %3084 = dma.vmem_to_hbm [thread:$0]  %s3079, 4096, %s3077, %s3062, 128, 128, 8
        $region44: #{tpu_custom_call.1} parent=35 // pred_fallthru
          _
      $region36: #{tpu_custom_call.1} parent=5 // pred_fallthru
        _
      %p3085 = scmp.le.s32.totalorder 2, %s20
      // Predicated region
      $region45: #{tpu_custom_call.1} parent=5 // pred_check
        %p3086 = pneg %p3085
      $region46: #{tpu_custom_call.1} parent=5 // pred_check_branch
        %3088 = sbr.rel (%p3086) target = $region48
      $region47: #{tpu_custom_call.1} parent=5 // pred_region
        %s3089 = ssub.s32 %s20, 2
        // Predicated region
        $region49: #{tpu_custom_call.1} parent=47 // pred_check
          %p3090 = pneg %p180
        $region50: #{tpu_custom_call.1} parent=47 // pred_check_branch
          %3092 = sbr.rel (%p3090) target = $region52
        $region51: #{tpu_custom_call.1} parent=47 // pred_region
          %s3093 = sand.u32 %s165, 1
          %s3094 = scalar_lea.sflag [#allocation6], %s3093
          %s3095 = sand.u32 %s165, 1
          %s3096 = smul.addr %s3095, 256
          %s3097 = scalar_lea.vmem [#allocation5], %s3096
          %3098 = dma.done %s3094, 4096
        $region52: #{tpu_custom_call.1} parent=47 // pred_fallthru
          _
      $region48: #{tpu_custom_call.1} parent=5 // pred_fallthru
        _
    $region6: #{tpu_custom_call.1} parent=1 // loop_footer
      %s24 = sadd.s32 1, %s20
    $region7: #{tpu_custom_call.1} parent=1 // loop_footer_branch
      %19 = sbr.rel target = $region3
    $region8: #{tpu_custom_call.1} parent=1 // loop_exit
      _
    %3099 = vsyncpa [#allocation6], 1
    %s3100 = scalar_lea.sflag [#allocation6], 1
    %3101 = vsyncpa %s3100, 1

</llo_original>
